<compile_context>
chip_gen: v7x
topology: tpu7x:2x2x1
jax: 0.10.0
libtpu: 0.0.40
codegen_flags: <defaults>
</compile_context>

<pallas_src>
import functools

import jax
import jax.numpy as jnp
from jax.experimental import pallas as pl
from jax.experimental.pallas import tpu as pltpu

LANE = 128


def _round_up(n, m):
    return ((n + m - 1) // m) * m


# --------------------------- fused forward kernel ---------------------------

def _fused_gat_kernel(*refs, layer_cfg, skip_coefficient):
    """Whole forward pass in one Pallas invocation.

    refs layout (all full-array VMEM, feature axes pre-padded to 128 lanes):
      [0] x        [N, Fpad]
      [1] neg_bias [N, N]      additive mask (0 for edge / -1e30 for non-edge)
      per GAT layer l:
          w_l          [Fpad, Ppad]
          att_dst_bd_l [Ppad, H]     block-diagonal att_dst
          att_src_bd_l [H, Ppad]     block-diagonal att_src
          head_mask_l  [H, Ppad]     (only if H > 1)
          bias_l       [1, Ppad]     (only if not folded into the next BN)
      per used BatchNorm: scale [1, Ppad], shift [1, Ppad]
      [-1] o_ref [N, Ppad_last]
    """
    num_layers = len(layer_cfg)
    x_ref, negb_ref = refs[0], refs[1]
    idx = 2
    gat_refs = []
    for (heads, c, has_mask, has_bias) in layer_cfg:
        n = 3 + int(has_mask) + int(has_bias)
        gat_refs.append(refs[idx:idx + n])
        idx += n
    n_bn = num_layers - 2
    bn_refs = refs[idx: idx + 2 * n_bn]
    o_ref = refs[-1]

    neg_bias = negb_ref[...]                                   # [N, N], reused by all layers

    def gat_layer(x, li, *, last):
        heads, c, has_mask, has_bias = layer_cfg[li]
        lrefs = gat_refs[li]
        w_ref, adst_ref, asrc_ref = lrefs[0], lrefs[1], lrefs[2]
        pos = 3
        mask_ref = None
        if has_mask:
            mask_ref = lrefs[pos]
            pos += 1
        bias_ref = lrefs[pos] if has_bias else None

        xw = jnp.dot(x, w_ref[...], preferred_element_type=jnp.float32)          # [N, Ppad]
        # all-head attention projections in two MXU calls
        a_dst = jnp.dot(xw, adst_ref[...], preferred_element_type=jnp.float32)    # [N, H]
        a_src = jax.lax.dot_general(
            asrc_ref[...], xw,
            dimension_numbers=(((1,), (1,)), ((), ())),
            preferred_element_type=jnp.float32)                                   # [H, N]

        alphas = []
        for h in range(heads):                                  # small static loop over heads
            e = a_dst[:, h:h + 1] + a_src[h:h + 1, :]           # e[i,j] = a_dst[i] + a_src[j]
            e = jnp.maximum(e, 0.2 * e)                         # LeakyReLU(0.2), mul+max
            e = e + neg_bias                                    # mask non-edges
            m = jnp.max(e, axis=1, keepdims=True)
            p = jnp.exp(e - m)                                  # non-edges underflow to 0
            s = jnp.sum(p, axis=1, keepdims=True)
            if last:
                alphas.append(p / s)                            # exact on the final layer
            else:
                alphas.append(p * pl.reciprocal(s, approx=True))

        if heads == 1:
            out = jnp.dot(alphas[0], xw, preferred_element_type=jnp.float32)
        else:
            # batched per-head aggregation: ONE lane-dense MXU matmul
            mask = mask_ref[...]                                                  # [H, Ppad]
            alpha_all = jnp.concatenate(alphas, axis=1)                           # [N, H*N]
            v_bd = jnp.concatenate(
                [xw * mask[h:h + 1, :] for h in range(heads)], axis=0)            # [H*N, Ppad]
            out = jnp.dot(alpha_all, v_bd, preferred_element_type=jnp.float32)    # [N, Ppad]

        if has_bias:
            out = out + bias_ref[...]
        return out

    x = x_ref[...]
    # F.dropout(x): identity at inference
    x = gat_layer(x, 0, last=False)                             # convs[0]
    x_skip = x
    for i in range(1, num_layers - 1):
        scale_ref, shift_ref = bn_refs[2 * (i - 1)], bn_refs[2 * (i - 1) + 1]
        x = jnp.maximum(x * scale_ref[...] + shift_ref[...], 0.0)   # BN (running stats) + ReLU
        x = gat_layer(x, i, last=False)                         # convs[i]
        if i % 2 == 0:
            x = x + skip_coefficient * x_skip
            x_skip = x
    x = gat_layer(x, num_layers - 1, last=True)                 # convs[-1]
    o_ref[...] = x                                              # single lane-dense store


# ------------------------------ glue / wrapper ------------------------------

def _pad2(a, rows, cols):
    r, c = a.shape
    return jnp.pad(a, ((0, rows - r), (0, cols - c)))


def _att_cols(att, pad_rows):
    """[H, C] -> block-diagonal [pad_rows, H] so that (xw @ out)[:, h] = <xw_h, att[h]>."""
    heads, c = att.shape
    out = jnp.zeros((pad_rows, heads), jnp.float32)
    for h in range(heads):
        out = out.at[h * c:(h + 1) * c, h].set(att[h])
    return out


def _att_rows(att, pad_cols):
    """[H, C] -> block-diagonal [H, pad_cols] so dot_general(out, xw)[h, :] = <att[h], xw_h>."""
    heads, c = att.shape
    out = jnp.zeros((heads, pad_cols), jnp.float32)
    for h in range(heads):
        out = out.at[h, h * c:(h + 1) * c].set(att[h])
    return out


def _head_mask(heads, c, pad_cols):
    m = jnp.zeros((heads, pad_cols), jnp.float32)
    for h in range(heads):
        m = m.at[h, h * c:(h + 1) * c].set(1.0)
    return m


def forward(x, adj, params, *, skip_coefficient):
    """Single fused pallas_call implementing the full module forward (inference)."""
    num_layers = len(params["gat"])
    eps = 1e-5
    N = x.shape[0]

    # conv l's bias folds into bn[l]'s shift iff its output feeds ONLY that BN
    # (i.e. it is not captured by the skip path and a BN actually follows it).
    def foldable(l):
        return (1 <= l <= num_layers - 3) and (l % 2 == 1)

    layer_cfg = []
    inputs = []

    fin0_p = _round_up(x.shape[1], LANE)
    x_p = _pad2(x, N, fin0_p)
    neg_bias = jnp.where(adj > 0, 0.0, -1e30).astype(jnp.float32)   # precomputed once
    inputs += [x_p, neg_bias]

    fin_pad = fin0_p
    for l, g in enumerate(params["gat"]):
        heads, c = g["att_src"].shape
        hc_pad = _round_up(heads * c, LANE)
        has_mask = heads > 1
        has_bias = not foldable(l)
        layer_cfg.append((heads, c, has_mask, has_bias))
        inputs.append(_pad2(g["w"], fin_pad, hc_pad))
        inputs.append(_att_cols(g["att_dst"], hc_pad))
        inputs.append(_att_rows(g["att_src"], hc_pad))
        if has_mask:
            inputs.append(_head_mask(heads, c, hc_pad))
        if has_bias:
            inputs.append(_pad2(g["bias"][None, :], 1, hc_pad))
        fin_pad = hc_pad

    # BatchNorm (running stats) folded into scale/shift; fold the preceding conv's bias
    # into the shift where legal.
    for i in range(1, num_layers - 1):
        bn = params["bn"][i - 1]
        scale = bn["g"] * jax.lax.rsqrt(bn["v"] + eps)
        shift = bn["b"] - bn["m"] * scale
        if foldable(i - 1):
            shift = shift + params["gat"][i - 1]["bias"] * scale
        hc_pad = _round_up(scale.shape[0], LANE)
        inputs.append(_pad2(scale[None, :], 1, hc_pad))
        inputs.append(_pad2(shift[None, :], 1, hc_pad))

    g_last = params["gat"][-1]
    fout = g_last["att_src"].shape[0] * g_last["att_src"].shape[1]
    fout_pad = _round_up(fout, LANE)

    # Residency guard: the fully fused plan keeps the [N,N] mask, per-head [N,N]
    # attention temporaries and all activations resident in VMEM at once.
    # TODO(synk): beyond this, switch to one pallas_call per GAT layer with row-tiled
    # BlockSpecs (TILE_N x N attention slab) so BlockSpec pipelining takes over.
    vmem_limit = 96 * 1024 * 1024
    max_heads = max(cfg[0] for cfg in layer_cfg)
    est_bytes = 4 * (sum(int(a.size) for a in inputs) + N * fout_pad
                     + (2 * max_heads + 2) * N * N + 6 * N * LANE)
    assert est_bytes < vmem_limit // 2, "graph too large for the fully fused plan"

    kernel = functools.partial(
        _fused_gat_kernel,
        layer_cfg=tuple(layer_cfg),
        skip_coefficient=float(skip_coefficient),
    )
    out_p = pl.pallas_call(
        kernel,
        out_shape=jax.ShapeDtypeStruct((N, fout_pad), jnp.float32),
        compiler_params=pltpu.CompilerParams(vmem_limit_bytes=vmem_limit),
    )(*inputs)
    return out_p[:, :fout]


# ------------------------------ parameters ----------------------------------

def init_params(key, in_channels, hidden, out_channels, num_layers, in_head, out_head):
    HC = hidden * in_head
    keys = iter(jax.random.split(key, 4 * num_layers + 4 * (num_layers - 1)))
    nxt = lambda: next(keys)

    def gat_params(fin, heads, out_ch):
        return {
            "w": 0.1 * jax.random.normal(nxt(), (fin, heads * out_ch), jnp.float32),
            "att_src": 0.1 * jax.random.normal(nxt(), (heads, out_ch), jnp.float32),
            "att_dst": 0.1 * jax.random.normal(nxt(), (heads, out_ch), jnp.float32),
            "bias": 0.1 * jax.random.normal(nxt(), (heads * out_ch,), jnp.float32),
        }

    def bn_params():
        return {
            "g": 1.0 + 0.1 * jax.random.normal(nxt(), (HC,), jnp.float32),
            "b": 0.1 * jax.random.normal(nxt(), (HC,), jnp.float32),
            "m": 0.1 * jax.random.normal(nxt(), (HC,), jnp.float32),
            "v": jax.random.uniform(nxt(), (HC,), jnp.float32, 0.5, 1.5),
        }

    gat = [gat_params(in_channels, in_head, hidden)]
    bn = [bn_params()]
    for _ in range(num_layers - 2):
        gat.append(gat_params(HC, in_head, hidden))
        bn.append(bn_params())
    gat.append(gat_params(HC, out_head, out_channels))
    return {"gat": gat, "bn": bn}


# ---------------------- pure-JAX reference (same semantics) -----------------

def forward_ref(x, adj, params, *, skip_coefficient):
    hp = jax.lax.Precision.HIGHEST
    eps = 1e-5
    num_layers = len(params["gat"])

    def gat(x, g):
        heads, c = g["att_src"].shape
        xw = jnp.dot(x, g["w"], precision=hp)
        outs = []
        for h in range(heads):
            xh = xw[:, h * c:(h + 1) * c]
            a_dst = jnp.sum(xh * g["att_dst"][h], axis=1, keepdims=True)
            a_src = jnp.sum(xh * g["att_src"][h], axis=1)[None, :]
            e = a_dst + a_src
            e = jnp.where(e > 0, e, 0.2 * e)
            e = jnp.where(adj > 0, e, -1e30)
            p = jnp.where(adj > 0, jnp.exp(e - e.max(1, keepdims=True)), 0.0)
            alpha = p / p.sum(1, keepdims=True)
            outs.append(jnp.dot(alpha, xh, precision=hp))
        return jnp.concatenate(outs, axis=1) + g["bias"]

    def bn(x, d):
        return (x - d["m"]) * jax.lax.rsqrt(d["v"] + eps) * d["g"] + d["b"]

    x = gat(x, params["gat"][0])
    x_skip = x
    for i in range(1, num_layers - 1):
        x = jnp.maximum(bn(x, params["bn"][i - 1]), 0.0)
        x = gat(x, params["gat"][i])
        if i % 2 == 0:
            x = x + skip_coefficient * x_skip
            x_skip = x
    return gat(x, params["gat"][-1])


# ----------------------------------- main ------------------------------------

if __name__ == "__main__":
    N, E = 64, 160
    in_channels = 32
    hidden, in_head = 16, 2          # HC = 32
    out_channels, out_head = 8, 1
    num_layers = 4                   # convs: [0] + 2 hidden + [-1]
    skip_coefficient = 0.5
    dropout = 0.5                    # inference mode -> identity

    key = jax.random.PRNGKey(0)
    k_src, k_dst, k_x, k_p = jax.random.split(key, 4)

    src = jax.random.randint(k_src, (E,), 0, N)
    dst = jax.random.randint(k_dst, (E,), 0, N)
    # dense adjacency mask: adj[i, j] = 1 iff edge j -> i; add self loops (PyG default)
    adj = jnp.zeros((N, N), jnp.float32).at[dst, src].set(1.0)
    adj = adj.at[jnp.arange(N), jnp.arange(N)].set(1.0)

    x = jax.random.normal(k_x, (N, in_channels), jnp.float32)
    params = init_params(k_p, in_channels, hidden, out_channels, num_layers,
                         in_head, out_head)

    y = forward(x, adj, params, skip_coefficient=skip_coefficient)
    y = jax.block_until_ready(y)
    assert y.shape == (N, out_channels * out_head)

    y_ref = forward_ref(x, adj, params, skip_coefficient=skip_coefficient)
    assert jnp.allclose(y, y_ref, atol=1e-2, rtol=1e-2), float(jnp.abs(y - y_ref).max())

    print("KERNEL_OK")
</pallas_src>

<mosaic_0001>
module attributes {stable_mosaic.version = 11 : i64} {
  func.func @_fused_gat_kernel(%arg0: memref<64x128xf32, #tpu.memory_space<vmem>>, %arg1: memref<64x64xf32, #tpu.memory_space<vmem>>, %arg2: memref<128x128xf32, #tpu.memory_space<vmem>>, %arg3: memref<128x2xf32, #tpu.memory_space<vmem>>, %arg4: memref<2x128xf32, #tpu.memory_space<vmem>>, %arg5: memref<2x128xf32, #tpu.memory_space<vmem>>, %arg6: memref<1x128xf32, #tpu.memory_space<vmem>>, %arg7: memref<128x128xf32, #tpu.memory_space<vmem>>, %arg8: memref<128x2xf32, #tpu.memory_space<vmem>>, %arg9: memref<2x128xf32, #tpu.memory_space<vmem>>, %arg10: memref<2x128xf32, #tpu.memory_space<vmem>>, %arg11: memref<128x128xf32, #tpu.memory_space<vmem>>, %arg12: memref<128x2xf32, #tpu.memory_space<vmem>>, %arg13: memref<2x128xf32, #tpu.memory_space<vmem>>, %arg14: memref<2x128xf32, #tpu.memory_space<vmem>>, %arg15: memref<1x128xf32, #tpu.memory_space<vmem>>, %arg16: memref<128x128xf32, #tpu.memory_space<vmem>>, %arg17: memref<128x1xf32, #tpu.memory_space<vmem>>, %arg18: memref<1x128xf32, #tpu.memory_space<vmem>>, %arg19: memref<1x128xf32, #tpu.memory_space<vmem>>, %arg20: memref<1x128xf32, #tpu.memory_space<vmem>>, %arg21: memref<1x128xf32, #tpu.memory_space<vmem>>, %arg22: memref<1x128xf32, #tpu.memory_space<vmem>>, %arg23: memref<1x128xf32, #tpu.memory_space<vmem>>, %arg24: memref<64x128xf32, #tpu.memory_space<vmem>>) attributes {dimension_semantics = [], scalar_prefetch = 0 : i64, scratch_operands = 0 : i64, tpu.core_type = #tpu.core_type<tc>} {
    %c0 = arith.constant 0 : index
    %c0_0 = arith.constant 0 : index
    %0 = vector.load %arg1[%c0, %c0_0] : memref<64x64xf32, #tpu.memory_space<vmem>>, vector<64x64xf32>
    %c0_1 = arith.constant 0 : index
    %c0_2 = arith.constant 0 : index
    %1 = vector.load %arg0[%c0_1, %c0_2] : memref<64x128xf32, #tpu.memory_space<vmem>>, vector<64x128xf32>
    %c0_3 = arith.constant 0 : index
    %c0_4 = arith.constant 0 : index
    %2 = vector.load %arg2[%c0_3, %c0_4] : memref<128x128xf32, #tpu.memory_space<vmem>>, vector<128x128xf32>
    %cst = arith.constant dense<0.000000e+00> : vector<64x128xf32>
    %3 = tpu.matmul %1, %2, %cst {dimension_numbers = #tpu.dot_dimension_numbers<[1], [0], [0], [1], [0, 0, 1, 1], [], []>} : vector<64x128xf32>, vector<128x128xf32>, vector<64x128xf32> -> vector<64x128xf32>
    %c0_5 = arith.constant 0 : index
    %c0_6 = arith.constant 0 : index
    %4 = vector.load %arg3[%c0_5, %c0_6] : memref<128x2xf32, #tpu.memory_space<vmem>>, vector<128x2xf32>
    %cst_7 = arith.constant dense<0.000000e+00> : vector<64x2xf32>
    %5 = tpu.matmul %3, %4, %cst_7 {dimension_numbers = #tpu.dot_dimension_numbers<[1], [0], [0], [1], [0, 0, 1, 1], [], []>} : vector<64x128xf32>, vector<128x2xf32>, vector<64x2xf32> -> vector<64x2xf32>
    %c0_8 = arith.constant 0 : index
    %c0_9 = arith.constant 0 : index
    %6 = vector.load %arg4[%c0_8, %c0_9] : memref<2x128xf32, #tpu.memory_space<vmem>>, vector<2x128xf32>
    %cst_10 = arith.constant dense<0.000000e+00> : vector<2x64xf32>
    %7 = tpu.matmul %6, %3, %cst_10 {dimension_numbers = #tpu.dot_dimension_numbers<[1], [1], [0], [0], [0, 0, 1, 0], [], []>} : vector<2x128xf32>, vector<64x128xf32>, vector<2x64xf32> -> vector<2x64xf32>
    %8 = vector.extract_strided_slice %5 {offsets = [0, 0], sizes = [64, 1], strides = [1, 1]} : vector<64x2xf32> to vector<64x1xf32>
    %9 = vector.extract_strided_slice %7 {offsets = [0, 0], sizes = [1, 64], strides = [1, 1]} : vector<2x64xf32> to vector<1x64xf32>
    %10 = vector.broadcast %8 : vector<64x1xf32> to vector<64x64xf32>
    %11 = vector.broadcast %9 : vector<1x64xf32> to vector<64x64xf32>
    %12 = arith.addf %10, %11 : vector<64x64xf32>
    %cst_11 = arith.constant 2.000000e-01 : f32
    %13 = vector.broadcast %cst_11 : f32 to vector<64x64xf32>
    %14 = arith.mulf %13, %12 : vector<64x64xf32>
    %15 = arith.maximumf %12, %14 : vector<64x64xf32>
    %16 = arith.addf %15, %0 : vector<64x64xf32>
    %cst_12 = arith.constant dense<0xFF800000> : vector<64xf32>
    %17 = vector.multi_reduction <maximumf>, %16, %cst_12 [1] : vector<64x64xf32> to vector<64xf32>
    %18 = vector.shape_cast %17 : vector<64xf32> to vector<64x1xf32>
    %19 = vector.broadcast %18 : vector<64x1xf32> to vector<64x64xf32>
    %20 = arith.subf %16, %19 : vector<64x64xf32>
    %21 = math.exp %20 : vector<64x64xf32>
    %cst_13 = arith.constant dense<0.000000e+00> : vector<64xf32>
    %22 = vector.multi_reduction <add>, %21, %cst_13 [1] : vector<64x64xf32> to vector<64xf32>
    %23 = vector.shape_cast %22 : vector<64xf32> to vector<64x1xf32>
    %24 = tpu.reciprocal %23 {approx = true} : vector<64x1xf32> -> vector<64x1xf32>
    %25 = vector.broadcast %24 : vector<64x1xf32> to vector<64x64xf32>
    %26 = arith.mulf %21, %25 : vector<64x64xf32>
    %27 = vector.extract_strided_slice %5 {offsets = [0, 1], sizes = [64, 1], strides = [1, 1]} : vector<64x2xf32> to vector<64x1xf32>
    %28 = vector.extract_strided_slice %7 {offsets = [1, 0], sizes = [1, 64], strides = [1, 1]} : vector<2x64xf32> to vector<1x64xf32>
    %29 = vector.broadcast %27 : vector<64x1xf32> to vector<64x64xf32>
    %30 = vector.broadcast %28 : vector<1x64xf32> to vector<64x64xf32>
    %31 = arith.addf %29, %30 : vector<64x64xf32>
    %cst_14 = arith.constant 2.000000e-01 : f32
    %32 = vector.broadcast %cst_14 : f32 to vector<64x64xf32>
    %33 = arith.mulf %32, %31 : vector<64x64xf32>
    %34 = arith.maximumf %31, %33 : vector<64x64xf32>
    %35 = arith.addf %34, %0 : vector<64x64xf32>
    %cst_15 = arith.constant dense<0xFF800000> : vector<64xf32>
    %36 = vector.multi_reduction <maximumf>, %35, %cst_15 [1] : vector<64x64xf32> to vector<64xf32>
    %37 = vector.shape_cast %36 : vector<64xf32> to vector<64x1xf32>
    %38 = vector.broadcast %37 : vector<64x1xf32> to vector<64x64xf32>
    %39 = arith.subf %35, %38 : vector<64x64xf32>
    %40 = math.exp %39 : vector<64x64xf32>
    %cst_16 = arith.constant dense<0.000000e+00> : vector<64xf32>
    %41 = vector.multi_reduction <add>, %40, %cst_16 [1] : vector<64x64xf32> to vector<64xf32>
    %42 = vector.shape_cast %41 : vector<64xf32> to vector<64x1xf32>
    %43 = tpu.reciprocal %42 {approx = true} : vector<64x1xf32> -> vector<64x1xf32>
    %44 = vector.broadcast %43 : vector<64x1xf32> to vector<64x64xf32>
    %45 = arith.mulf %40, %44 : vector<64x64xf32>
    %c0_17 = arith.constant 0 : index
    %c0_18 = arith.constant 0 : index
    %46 = vector.load %arg5[%c0_17, %c0_18] : memref<2x128xf32, #tpu.memory_space<vmem>>, vector<2x128xf32>
    %47 = tpu.concatenate %26, %45 in 1 : vector<64x64xf32>, vector<64x64xf32> -> vector<64x128xf32>
    %48 = vector.extract_strided_slice %46 {offsets = [0, 0], sizes = [1, 128], strides = [1, 1]} : vector<2x128xf32> to vector<1x128xf32>
    %49 = vector.broadcast %48 : vector<1x128xf32> to vector<64x128xf32>
    %50 = arith.mulf %3, %49 : vector<64x128xf32>
    %51 = vector.extract_strided_slice %46 {offsets = [1, 0], sizes = [1, 128], strides = [1, 1]} : vector<2x128xf32> to vector<1x128xf32>
    %52 = vector.broadcast %51 : vector<1x128xf32> to vector<64x128xf32>
    %53 = arith.mulf %3, %52 : vector<64x128xf32>
    %54 = tpu.concatenate %50, %53 in 0 : vector<64x128xf32>, vector<64x128xf32> -> vector<128x128xf32>
    %cst_19 = arith.constant dense<0.000000e+00> : vector<64x128xf32>
    %55 = tpu.matmul %47, %54, %cst_19 {dimension_numbers = #tpu.dot_dimension_numbers<[1], [0], [0], [1], [0, 0, 1, 1], [], []>} : vector<64x128xf32>, vector<128x128xf32>, vector<64x128xf32> -> vector<64x128xf32>
    %c0_20 = arith.constant 0 : index
    %c0_21 = arith.constant 0 : index
    %56 = vector.load %arg6[%c0_20, %c0_21] : memref<1x128xf32, #tpu.memory_space<vmem>>, vector<1x128xf32>
    %57 = vector.broadcast %56 : vector<1x128xf32> to vector<64x128xf32>
    %58 = arith.addf %55, %57 : vector<64x128xf32>
    %c0_22 = arith.constant 0 : index
    %c0_23 = arith.constant 0 : index
    %59 = vector.load %arg20[%c0_22, %c0_23] : memref<1x128xf32, #tpu.memory_space<vmem>>, vector<1x128xf32>
    %60 = vector.broadcast %59 : vector<1x128xf32> to vector<64x128xf32>
    %61 = arith.mulf %58, %60 : vector<64x128xf32>
    %c0_24 = arith.constant 0 : index
    %c0_25 = arith.constant 0 : index
    %62 = vector.load %arg21[%c0_24, %c0_25] : memref<1x128xf32, #tpu.memory_space<vmem>>, vector<1x128xf32>
    %63 = vector.broadcast %62 : vector<1x128xf32> to vector<64x128xf32>
    %64 = arith.addf %61, %63 : vector<64x128xf32>
    %cst_26 = arith.constant 0.000000e+00 : f32
    %65 = vector.broadcast %cst_26 : f32 to vector<64x128xf32>
    %66 = arith.maximumf %64, %65 : vector<64x128xf32>
    %c0_27 = arith.constant 0 : index
    %c0_28 = arith.constant 0 : index
    %67 = vector.load %arg7[%c0_27, %c0_28] : memref<128x128xf32, #tpu.memory_space<vmem>>, vector<128x128xf32>
    %cst_29 = arith.constant dense<0.000000e+00> : vector<64x128xf32>
    %68 = tpu.matmul %66, %67, %cst_29 {dimension_numbers = #tpu.dot_dimension_numbers<[1], [0], [0], [1], [0, 0, 1, 1], [], []>} : vector<64x128xf32>, vector<128x128xf32>, vector<64x128xf32> -> vector<64x128xf32>
    %c0_30 = arith.constant 0 : index
    %c0_31 = arith.constant 0 : index
    %69 = vector.load %arg8[%c0_30, %c0_31] : memref<128x2xf32, #tpu.memory_space<vmem>>, vector<128x2xf32>
    %cst_32 = arith.constant dense<0.000000e+00> : vector<64x2xf32>
    %70 = tpu.matmul %68, %69, %cst_32 {dimension_numbers = #tpu.dot_dimension_numbers<[1], [0], [0], [1], [0, 0, 1, 1], [], []>} : vector<64x128xf32>, vector<128x2xf32>, vector<64x2xf32> -> vector<64x2xf32>
    %c0_33 = arith.constant 0 : index
    %c0_34 = arith.constant 0 : index
    %71 = vector.load %arg9[%c0_33, %c0_34] : memref<2x128xf32, #tpu.memory_space<vmem>>, vector<2x128xf32>
    %cst_35 = arith.constant dense<0.000000e+00> : vector<2x64xf32>
    %72 = tpu.matmul %71, %68, %cst_35 {dimension_numbers = #tpu.dot_dimension_numbers<[1], [1], [0], [0], [0, 0, 1, 0], [], []>} : vector<2x128xf32>, vector<64x128xf32>, vector<2x64xf32> -> vector<2x64xf32>
    %73 = vector.extract_strided_slice %70 {offsets = [0, 0], sizes = [64, 1], strides = [1, 1]} : vector<64x2xf32> to vector<64x1xf32>
    %74 = vector.extract_strided_slice %72 {offsets = [0, 0], sizes = [1, 64], strides = [1, 1]} : vector<2x64xf32> to vector<1x64xf32>
    %75 = vector.broadcast %73 : vector<64x1xf32> to vector<64x64xf32>
    %76 = vector.broadcast %74 : vector<1x64xf32> to vector<64x64xf32>
    %77 = arith.addf %75, %76 : vector<64x64xf32>
    %cst_36 = arith.constant 2.000000e-01 : f32
    %78 = vector.broadcast %cst_36 : f32 to vector<64x64xf32>
    %79 = arith.mulf %78, %77 : vector<64x64xf32>
    %80 = arith.maximumf %77, %79 : vector<64x64xf32>
    %81 = arith.addf %80, %0 : vector<64x64xf32>
    %cst_37 = arith.constant dense<0xFF800000> : vector<64xf32>
    %82 = vector.multi_reduction <maximumf>, %81, %cst_37 [1] : vector<64x64xf32> to vector<64xf32>
    %83 = vector.shape_cast %82 : vector<64xf32> to vector<64x1xf32>
    %84 = vector.broadcast %83 : vector<64x1xf32> to vector<64x64xf32>
    %85 = arith.subf %81, %84 : vector<64x64xf32>
    %86 = math.exp %85 : vector<64x64xf32>
    %cst_38 = arith.constant dense<0.000000e+00> : vector<64xf32>
    %87 = vector.multi_reduction <add>, %86, %cst_38 [1] : vector<64x64xf32> to vector<64xf32>
    %88 = vector.shape_cast %87 : vector<64xf32> to vector<64x1xf32>
    %89 = tpu.reciprocal %88 {approx = true} : vector<64x1xf32> -> vector<64x1xf32>
    %90 = vector.broadcast %89 : vector<64x1xf32> to vector<64x64xf32>
    %91 = arith.mulf %86, %90 : vector<64x64xf32>
    %92 = vector.extract_strided_slice %70 {offsets = [0, 1], sizes = [64, 1], strides = [1, 1]} : vector<64x2xf32> to vector<64x1xf32>
    %93 = vector.extract_strided_slice %72 {offsets = [1, 0], sizes = [1, 64], strides = [1, 1]} : vector<2x64xf32> to vector<1x64xf32>
    %94 = vector.broadcast %92 : vector<64x1xf32> to vector<64x64xf32>
    %95 = vector.broadcast %93 : vector<1x64xf32> to vector<64x64xf32>
    %96 = arith.addf %94, %95 : vector<64x64xf32>
    %cst_39 = arith.constant 2.000000e-01 : f32
    %97 = vector.broadcast %cst_39 : f32 to vector<64x64xf32>
    %98 = arith.mulf %97, %96 : vector<64x64xf32>
    %99 = arith.maximumf %96, %98 : vector<64x64xf32>
    %100 = arith.addf %99, %0 : vector<64x64xf32>
    %cst_40 = arith.constant dense<0xFF800000> : vector<64xf32>
    %101 = vector.multi_reduction <maximumf>, %100, %cst_40 [1] : vector<64x64xf32> to vector<64xf32>
    %102 = vector.shape_cast %101 : vector<64xf32> to vector<64x1xf32>
    %103 = vector.broadcast %102 : vector<64x1xf32> to vector<64x64xf32>
    %104 = arith.subf %100, %103 : vector<64x64xf32>
    %105 = math.exp %104 : vector<64x64xf32>
    %cst_41 = arith.constant dense<0.000000e+00> : vector<64xf32>
    %106 = vector.multi_reduction <add>, %105, %cst_41 [1] : vector<64x64xf32> to vector<64xf32>
    %107 = vector.shape_cast %106 : vector<64xf32> to vector<64x1xf32>
    %108 = tpu.reciprocal %107 {approx = true} : vector<64x1xf32> -> vector<64x1xf32>
    %109 = vector.broadcast %108 : vector<64x1xf32> to vector<64x64xf32>
    %110 = arith.mulf %105, %109 : vector<64x64xf32>
    %c0_42 = arith.constant 0 : index
    %c0_43 = arith.constant 0 : index
    %111 = vector.load %arg10[%c0_42, %c0_43] : memref<2x128xf32, #tpu.memory_space<vmem>>, vector<2x128xf32>
    %112 = tpu.concatenate %91, %110 in 1 : vector<64x64xf32>, vector<64x64xf32> -> vector<64x128xf32>
    %113 = vector.extract_strided_slice %111 {offsets = [0, 0], sizes = [1, 128], strides = [1, 1]} : vector<2x128xf32> to vector<1x128xf32>
    %114 = vector.broadcast %113 : vector<1x128xf32> to vector<64x128xf32>
    %115 = arith.mulf %68, %114 : vector<64x128xf32>
    %116 = vector.extract_strided_slice %111 {offsets = [1, 0], sizes = [1, 128], strides = [1, 1]} : vector<2x128xf32> to vector<1x128xf32>
    %117 = vector.broadcast %116 : vector<1x128xf32> to vector<64x128xf32>
    %118 = arith.mulf %68, %117 : vector<64x128xf32>
    %119 = tpu.concatenate %115, %118 in 0 : vector<64x128xf32>, vector<64x128xf32> -> vector<128x128xf32>
    %cst_44 = arith.constant dense<0.000000e+00> : vector<64x128xf32>
    %120 = tpu.matmul %112, %119, %cst_44 {dimension_numbers = #tpu.dot_dimension_numbers<[1], [0], [0], [1], [0, 0, 1, 1], [], []>} : vector<64x128xf32>, vector<128x128xf32>, vector<64x128xf32> -> vector<64x128xf32>
    %c0_45 = arith.constant 0 : index
    %c0_46 = arith.constant 0 : index
    %121 = vector.load %arg22[%c0_45, %c0_46] : memref<1x128xf32, #tpu.memory_space<vmem>>, vector<1x128xf32>
    %122 = vector.broadcast %121 : vector<1x128xf32> to vector<64x128xf32>
    %123 = arith.mulf %120, %122 : vector<64x128xf32>
    %c0_47 = arith.constant 0 : index
    %c0_48 = arith.constant 0 : index
    %124 = vector.load %arg23[%c0_47, %c0_48] : memref<1x128xf32, #tpu.memory_space<vmem>>, vector<1x128xf32>
    %125 = vector.broadcast %124 : vector<1x128xf32> to vector<64x128xf32>
    %126 = arith.addf %123, %125 : vector<64x128xf32>
    %cst_49 = arith.constant 0.000000e+00 : f32
    %127 = vector.broadcast %cst_49 : f32 to vector<64x128xf32>
    %128 = arith.maximumf %126, %127 : vector<64x128xf32>
    %c0_50 = arith.constant 0 : index
    %c0_51 = arith.constant 0 : index
    %129 = vector.load %arg11[%c0_50, %c0_51] : memref<128x128xf32, #tpu.memory_space<vmem>>, vector<128x128xf32>
    %cst_52 = arith.constant dense<0.000000e+00> : vector<64x128xf32>
    %130 = tpu.matmul %128, %129, %cst_52 {dimension_numbers = #tpu.dot_dimension_numbers<[1], [0], [0], [1], [0, 0, 1, 1], [], []>} : vector<64x128xf32>, vector<128x128xf32>, vector<64x128xf32> -> vector<64x128xf32>
    %c0_53 = arith.constant 0 : index
    %c0_54 = arith.constant 0 : index
    %131 = vector.load %arg12[%c0_53, %c0_54] : memref<128x2xf32, #tpu.memory_space<vmem>>, vector<128x2xf32>
    %cst_55 = arith.constant dense<0.000000e+00> : vector<64x2xf32>
    %132 = tpu.matmul %130, %131, %cst_55 {dimension_numbers = #tpu.dot_dimension_numbers<[1], [0], [0], [1], [0, 0, 1, 1], [], []>} : vector<64x128xf32>, vector<128x2xf32>, vector<64x2xf32> -> vector<64x2xf32>
    %c0_56 = arith.constant 0 : index
    %c0_57 = arith.constant 0 : index
    %133 = vector.load %arg13[%c0_56, %c0_57] : memref<2x128xf32, #tpu.memory_space<vmem>>, vector<2x128xf32>
    %cst_58 = arith.constant dense<0.000000e+00> : vector<2x64xf32>
    %134 = tpu.matmul %133, %130, %cst_58 {dimension_numbers = #tpu.dot_dimension_numbers<[1], [1], [0], [0], [0, 0, 1, 0], [], []>} : vector<2x128xf32>, vector<64x128xf32>, vector<2x64xf32> -> vector<2x64xf32>
    %135 = vector.extract_strided_slice %132 {offsets = [0, 0], sizes = [64, 1], strides = [1, 1]} : vector<64x2xf32> to vector<64x1xf32>
    %136 = vector.extract_strided_slice %134 {offsets = [0, 0], sizes = [1, 64], strides = [1, 1]} : vector<2x64xf32> to vector<1x64xf32>
    %137 = vector.broadcast %135 : vector<64x1xf32> to vector<64x64xf32>
    %138 = vector.broadcast %136 : vector<1x64xf32> to vector<64x64xf32>
    %139 = arith.addf %137, %138 : vector<64x64xf32>
    %cst_59 = arith.constant 2.000000e-01 : f32
    %140 = vector.broadcast %cst_59 : f32 to vector<64x64xf32>
    %141 = arith.mulf %140, %139 : vector<64x64xf32>
    %142 = arith.maximumf %139, %141 : vector<64x64xf32>
    %143 = arith.addf %142, %0 : vector<64x64xf32>
    %cst_60 = arith.constant dense<0xFF800000> : vector<64xf32>
    %144 = vector.multi_reduction <maximumf>, %143, %cst_60 [1] : vector<64x64xf32> to vector<64xf32>
    %145 = vector.shape_cast %144 : vector<64xf32> to vector<64x1xf32>
    %146 = vector.broadcast %145 : vector<64x1xf32> to vector<64x64xf32>
    %147 = arith.subf %143, %146 : vector<64x64xf32>
    %148 = math.exp %147 : vector<64x64xf32>
    %cst_61 = arith.constant dense<0.000000e+00> : vector<64xf32>
    %149 = vector.multi_reduction <add>, %148, %cst_61 [1] : vector<64x64xf32> to vector<64xf32>
    %150 = vector.shape_cast %149 : vector<64xf32> to vector<64x1xf32>
    %151 = tpu.reciprocal %150 {approx = true} : vector<64x1xf32> -> vector<64x1xf32>
    %152 = vector.broadcast %151 : vector<64x1xf32> to vector<64x64xf32>
    %153 = arith.mulf %148, %152 : vector<64x64xf32>
    %154 = vector.extract_strided_slice %132 {offsets = [0, 1], sizes = [64, 1], strides = [1, 1]} : vector<64x2xf32> to vector<64x1xf32>
    %155 = vector.extract_strided_slice %134 {offsets = [1, 0], sizes = [1, 64], strides = [1, 1]} : vector<2x64xf32> to vector<1x64xf32>
    %156 = vector.broadcast %154 : vector<64x1xf32> to vector<64x64xf32>
    %157 = vector.broadcast %155 : vector<1x64xf32> to vector<64x64xf32>
    %158 = arith.addf %156, %157 : vector<64x64xf32>
    %cst_62 = arith.constant 2.000000e-01 : f32
    %159 = vector.broadcast %cst_62 : f32 to vector<64x64xf32>
    %160 = arith.mulf %159, %158 : vector<64x64xf32>
    %161 = arith.maximumf %158, %160 : vector<64x64xf32>
    %162 = arith.addf %161, %0 : vector<64x64xf32>
    %cst_63 = arith.constant dense<0xFF800000> : vector<64xf32>
    %163 = vector.multi_reduction <maximumf>, %162, %cst_63 [1] : vector<64x64xf32> to vector<64xf32>
    %164 = vector.shape_cast %163 : vector<64xf32> to vector<64x1xf32>
    %165 = vector.broadcast %164 : vector<64x1xf32> to vector<64x64xf32>
    %166 = arith.subf %162, %165 : vector<64x64xf32>
    %167 = math.exp %166 : vector<64x64xf32>
    %cst_64 = arith.constant dense<0.000000e+00> : vector<64xf32>
    %168 = vector.multi_reduction <add>, %167, %cst_64 [1] : vector<64x64xf32> to vector<64xf32>
    %169 = vector.shape_cast %168 : vector<64xf32> to vector<64x1xf32>
    %170 = tpu.reciprocal %169 {approx = true} : vector<64x1xf32> -> vector<64x1xf32>
    %171 = vector.broadcast %170 : vector<64x1xf32> to vector<64x64xf32>
    %172 = arith.mulf %167, %171 : vector<64x64xf32>
    %c0_65 = arith.constant 0 : index
    %c0_66 = arith.constant 0 : index
    %173 = vector.load %arg14[%c0_65, %c0_66] : memref<2x128xf32, #tpu.memory_space<vmem>>, vector<2x128xf32>
    %174 = tpu.concatenate %153, %172 in 1 : vector<64x64xf32>, vector<64x64xf32> -> vector<64x128xf32>
    %175 = vector.extract_strided_slice %173 {offsets = [0, 0], sizes = [1, 128], strides = [1, 1]} : vector<2x128xf32> to vector<1x128xf32>
    %176 = vector.broadcast %175 : vector<1x128xf32> to vector<64x128xf32>
    %177 = arith.mulf %130, %176 : vector<64x128xf32>
    %178 = vector.extract_strided_slice %173 {offsets = [1, 0], sizes = [1, 128], strides = [1, 1]} : vector<2x128xf32> to vector<1x128xf32>
    %179 = vector.broadcast %178 : vector<1x128xf32> to vector<64x128xf32>
    %180 = arith.mulf %130, %179 : vector<64x128xf32>
    %181 = tpu.concatenate %177, %180 in 0 : vector<64x128xf32>, vector<64x128xf32> -> vector<128x128xf32>
    %cst_67 = arith.constant dense<0.000000e+00> : vector<64x128xf32>
    %182 = tpu.matmul %174, %181, %cst_67 {dimension_numbers = #tpu.dot_dimension_numbers<[1], [0], [0], [1], [0, 0, 1, 1], [], []>} : vector<64x128xf32>, vector<128x128xf32>, vector<64x128xf32> -> vector<64x128xf32>
    %c0_68 = arith.constant 0 : index
    %c0_69 = arith.constant 0 : index
    %183 = vector.load %arg15[%c0_68, %c0_69] : memref<1x128xf32, #tpu.memory_space<vmem>>, vector<1x128xf32>
    %184 = vector.broadcast %183 : vector<1x128xf32> to vector<64x128xf32>
    %185 = arith.addf %182, %184 : vector<64x128xf32>
    %cst_70 = arith.constant 5.000000e-01 : f32
    %186 = vector.broadcast %cst_70 : f32 to vector<64x128xf32>
    %187 = arith.mulf %186, %58 : vector<64x128xf32>
    %188 = arith.addf %185, %187 : vector<64x128xf32>
    %c0_71 = arith.constant 0 : index
    %c0_72 = arith.constant 0 : index
    %189 = vector.load %arg16[%c0_71, %c0_72] : memref<128x128xf32, #tpu.memory_space<vmem>>, vector<128x128xf32>
    %cst_73 = arith.constant dense<0.000000e+00> : vector<64x128xf32>
    %190 = tpu.matmul %188, %189, %cst_73 {dimension_numbers = #tpu.dot_dimension_numbers<[1], [0], [0], [1], [0, 0, 1, 1], [], []>} : vector<64x128xf32>, vector<128x128xf32>, vector<64x128xf32> -> vector<64x128xf32>
    %c0_74 = arith.constant 0 : index
    %c0_75 = arith.constant 0 : index
    %191 = vector.load %arg17[%c0_74, %c0_75] : memref<128x1xf32, #tpu.memory_space<vmem>>, vector<128x1xf32>
    %cst_76 = arith.constant dense<0.000000e+00> : vector<64x1xf32>
    %192 = tpu.matmul %190, %191, %cst_76 {dimension_numbers = #tpu.dot_dimension_numbers<[1], [0], [0], [1], [0, 0, 1, 1], [], []>} : vector<64x128xf32>, vector<128x1xf32>, vector<64x1xf32> -> vector<64x1xf32>
    %c0_77 = arith.constant 0 : index
    %c0_78 = arith.constant 0 : index
    %193 = vector.load %arg18[%c0_77, %c0_78] : memref<1x128xf32, #tpu.memory_space<vmem>>, vector<1x128xf32>
    %cst_79 = arith.constant dense<0.000000e+00> : vector<1x64xf32>
    %194 = tpu.matmul %193, %190, %cst_79 {dimension_numbers = #tpu.dot_dimension_numbers<[1], [1], [0], [0], [0, 0, 1, 0], [], []>} : vector<1x128xf32>, vector<64x128xf32>, vector<1x64xf32> -> vector<1x64xf32>
    %195 = vector.broadcast %192 : vector<64x1xf32> to vector<64x64xf32>
    %196 = vector.broadcast %194 : vector<1x64xf32> to vector<64x64xf32>
    %197 = arith.addf %195, %196 : vector<64x64xf32>
    %cst_80 = arith.constant 2.000000e-01 : f32
    %198 = vector.broadcast %cst_80 : f32 to vector<64x64xf32>
    %199 = arith.mulf %198, %197 : vector<64x64xf32>
    %200 = arith.maximumf %197, %199 : vector<64x64xf32>
    %201 = arith.addf %200, %0 : vector<64x64xf32>
    %cst_81 = arith.constant dense<0xFF800000> : vector<64xf32>
    %202 = vector.multi_reduction <maximumf>, %201, %cst_81 [1] : vector<64x64xf32> to vector<64xf32>
    %203 = vector.shape_cast %202 : vector<64xf32> to vector<64x1xf32>
    %204 = vector.broadcast %203 : vector<64x1xf32> to vector<64x64xf32>
    %205 = arith.subf %201, %204 : vector<64x64xf32>
    %206 = math.exp %205 : vector<64x64xf32>
    %cst_82 = arith.constant dense<0.000000e+00> : vector<64xf32>
    %207 = vector.multi_reduction <add>, %206, %cst_82 [1] : vector<64x64xf32> to vector<64xf32>
    %208 = vector.shape_cast %207 : vector<64xf32> to vector<64x1xf32>
    %209 = vector.broadcast %208 : vector<64x1xf32> to vector<64x64xf32>
    %210 = arith.divf %206, %209 : vector<64x64xf32>
    %cst_83 = arith.constant dense<0.000000e+00> : vector<64x128xf32>
    %211 = tpu.matmul %210, %190, %cst_83 {dimension_numbers = #tpu.dot_dimension_numbers<[1], [0], [0], [1], [0, 0, 1, 1], [], []>} : vector<64x64xf32>, vector<64x128xf32>, vector<64x128xf32> -> vector<64x128xf32>
    %c0_84 = arith.constant 0 : index
    %c0_85 = arith.constant 0 : index
    %212 = vector.load %arg19[%c0_84, %c0_85] : memref<1x128xf32, #tpu.memory_space<vmem>>, vector<1x128xf32>
    %213 = vector.broadcast %212 : vector<1x128xf32> to vector<64x128xf32>
    %214 = arith.addf %211, %213 : vector<64x128xf32>
    %c0_86 = arith.constant 0 : index
    %c0_87 = arith.constant 0 : index
    %215 = vector.load %arg24[%c0_86, %c0_87] : memref<64x128xf32, #tpu.memory_space<vmem>>, vector<64x128xf32>
    tpu.vector_store %arg24[%c0_86, %c0_87], %214 {strides = array<i32>} : memref<64x128xf32, #tpu.memory_space<vmem>>, vector<64x128xf32>,
    return
  }
}

</mosaic_0001>

<llo_original>
// kernel: tpu_custom_call.1
$region0: #{tpu_custom_call.1}
  #allocation0 [shape = 'u32[]', space=smem, size = 0x4, offset = 0x4, fixed_abs, tag = 'smem constant byte address 0x4 - core index']
  #allocation1 [shape = 'u32[144,128]{1,0:T(1,128)}', space=vmem, size = 0x12000, scoped, tag = 'internal scratch']
  %s0 = inlined_call_operand.hbm [shape: f32[64,128], index: 0, kind: input, shape index: {}]
  %s1 = inlined_call_operand.hbm [shape: f32[64,64], index: 1, kind: input, shape index: {}]
  %s2 = inlined_call_operand.hbm [shape: f32[128,128], index: 2, kind: input, shape index: {}]
  %s3 = inlined_call_operand.hbm [shape: f32[128,2], index: 3, kind: input, shape index: {}]
  %s4 = inlined_call_operand.hbm [shape: f32[2,128], index: 4, kind: input, shape index: {}]
  %s5 = inlined_call_operand.hbm [shape: f32[2,128], index: 5, kind: input, shape index: {}]
  %s6 = inlined_call_operand.hbm [shape: f32[1,128], index: 6, kind: input, shape index: {}]
  %s7 = inlined_call_operand.hbm [shape: f32[128,128], index: 7, kind: input, shape index: {}]
  %s8 = inlined_call_operand.hbm [shape: f32[128,2], index: 8, kind: input, shape index: {}]
  %s9 = inlined_call_operand.hbm [shape: f32[2,128], index: 9, kind: input, shape index: {}]
  %s10 = inlined_call_operand.hbm [shape: f32[2,128], index: 10, kind: input, shape index: {}]
  %s11 = inlined_call_operand.hbm [shape: f32[128,128], index: 11, kind: input, shape index: {}]
  %s12 = inlined_call_operand.hbm [shape: f32[128,2], index: 12, kind: input, shape index: {}]
  %s13 = inlined_call_operand.hbm [shape: f32[2,128], index: 13, kind: input, shape index: {}]
  %s14 = inlined_call_operand.hbm [shape: f32[2,128], index: 14, kind: input, shape index: {}]
  %s15 = inlined_call_operand.hbm [shape: f32[1,128], index: 15, kind: input, shape index: {}]
  %s16 = inlined_call_operand.hbm [shape: f32[128,128], index: 16, kind: input, shape index: {}]
  %s17 = inlined_call_operand.hbm [shape: f32[128,1], index: 17, kind: input, shape index: {}]
  %s18 = inlined_call_operand.hbm [shape: f32[1,128], index: 18, kind: input, shape index: {}]
  %s19 = inlined_call_operand.hbm [shape: f32[1,128], index: 19, kind: input, shape index: {}]
  %s20 = inlined_call_operand.hbm [shape: f32[1,128], index: 20, kind: input, shape index: {}]
  %s21 = inlined_call_operand.hbm [shape: f32[1,128], index: 21, kind: input, shape index: {}]
  %s22 = inlined_call_operand.hbm [shape: f32[1,128], index: 22, kind: input, shape index: {}]
  %s23 = inlined_call_operand.hbm [shape: f32[1,128], index: 23, kind: input, shape index: {}]
  %s24 = inlined_call_operand.hbm [shape: f32[64,128], index: 24, kind: output, shape index: {}]
  %s25 = sld [smem:[#allocation0]]
  $region202: #{tpu_custom_call.1} parent=0
    _
  %s27 = ssub.s32 1, %s25
  %s28 = scalar_select 0, %s27, %s25
  $region1: #{tpu_custom_call.1} parent=0
    #allocation2 [shape = 'u8[32768]{0}', space=vmem, size = 0x8000, scoped, tag = 'input window, operand 0, single buffered']
    #allocation3 [shape = 's32[1]{0}', space=sflag, size = 0x4, scoped, tag = 'scoped memory for tpu_custom_call.1']
    #allocation4 [shape = 's32[1]{0}', space=sflag, size = 0x4, scoped, tag = 'scoped memory for tpu_custom_call.1']
    #allocation5 [shape = 'u8[32768]{0}', space=vmem, size = 0x8000, scoped, tag = 'input window, operand 1, single buffered']
    #allocation6 [shape = 's32[1]{0}', space=sflag, size = 0x4, scoped, tag = 'scoped memory for tpu_custom_call.1']
    #allocation7 [shape = 'u8[65536]{0}', space=vmem, size = 0x10000, scoped, tag = 'input window, operand 2, single buffered']
    #allocation8 [shape = 'u8[65536]{0}', space=vmem, size = 0x10000, scoped, tag = 'input window, operand 3, single buffered']
    #allocation9 [shape = 's32[1]{0}', space=sflag, size = 0x4, scoped, tag = 'scoped memory for tpu_custom_call.1']
    #allocation10 [shape = 'u8[1024]{0}', space=vmem, size = 0x400, scoped, tag = 'input window, operand 4, single buffered']
    #allocation11 [shape = 'u8[1024]{0}', space=vmem, size = 0x400, scoped, tag = 'input window, operand 5, single buffered']
    #allocation12 [shape = 's32[1]{0}', space=sflag, size = 0x4, scoped, tag = 'scoped memory for tpu_custom_call.1']
    #allocation13 [shape = 'u8[512]{0}', space=vmem, size = 0x400, scoped, tag = 'input window, operand 6, single buffered']
    #allocation14 [shape = 'u8[65536]{0}', space=vmem, size = 0x10000, scoped, tag = 'input window, operand 7, single buffered']
    #allocation15 [shape = 's32[1]{0}', space=sflag, size = 0x4, scoped, tag = 'scoped memory for tpu_custom_call.1']
    #allocation16 [shape = 'u8[65536]{0}', space=vmem, size = 0x10000, scoped, tag = 'input window, operand 8, single buffered']
    #allocation17 [shape = 'u8[1024]{0}', space=vmem, size = 0x400, scoped, tag = 'input window, operand 9, single buffered']
    #allocation18 [shape = 's32[1]{0}', space=sflag, size = 0x4, scoped, tag = 'scoped memory for tpu_custom_call.1']
    #allocation19 [shape = 'u8[1024]{0}', space=vmem, size = 0x400, scoped, tag = 'input window, operand 10, single buffered']
    #allocation20 [shape = 'u8[65536]{0}', space=vmem, size = 0x10000, scoped, tag = 'input window, operand 11, single buffered']
    #allocation21 [shape = 's32[1]{0}', space=sflag, size = 0x4, scoped, tag = 'scoped memory for tpu_custom_call.1']
    #allocation22 [shape = 'u8[65536]{0}', space=vmem, size = 0x10000, scoped, tag = 'input window, operand 12, single buffered']
    #allocation23 [shape = 'u8[1024]{0}', space=vmem, size = 0x400, scoped, tag = 'input window, operand 13, single buffered']
    #allocation24 [shape = 's32[1]{0}', space=sflag, size = 0x4, scoped, tag = 'scoped memory for tpu_custom_call.1']
    #allocation25 [shape = 'u8[1024]{0}', space=vmem, size = 0x400, scoped, tag = 'input window, operand 14, single buffered']
    #allocation26 [shape = 'u8[512]{0}', space=vmem, size = 0x400, scoped, tag = 'input window, operand 15, single buffered']
    #allocation27 [shape = 's32[1]{0}', space=sflag, size = 0x4, scoped, tag = 'scoped memory for tpu_custom_call.1']
    #allocation28 [shape = 'u8[65536]{0}', space=vmem, size = 0x10000, scoped, tag = 'input window, operand 16, single buffered']
    #allocation29 [shape = 'u8[65536]{0}', space=vmem, size = 0x10000, scoped, tag = 'input window, operand 17, single buffered']
    #allocation30 [shape = 's32[1]{0}', space=sflag, size = 0x4, scoped, tag = 'scoped memory for tpu_custom_call.1']
    #allocation31 [shape = 'u8[512]{0}', space=vmem, size = 0x400, scoped, tag = 'input window, operand 18, single buffered']
    #allocation32 [shape = 'u8[512]{0}', space=vmem, size = 0x400, scoped, tag = 'input window, operand 19, single buffered']
    #allocation33 [shape = 's32[1]{0}', space=sflag, size = 0x4, scoped, tag = 'scoped memory for tpu_custom_call.1']
    #allocation34 [shape = 'u8[512]{0}', space=vmem, size = 0x400, scoped, tag = 'input window, operand 20, single buffered']
    #allocation35 [shape = 'u8[512]{0}', space=vmem, size = 0x400, scoped, tag = 'input window, operand 21, single buffered']
    #allocation36 [shape = 's32[1]{0}', space=sflag, size = 0x4, scoped, tag = 'scoped memory for tpu_custom_call.1']
    #allocation37 [shape = 'u8[512]{0}', space=vmem, size = 0x400, scoped, tag = 'input window, operand 22, single buffered']
    #allocation38 [shape = 'u8[512]{0}', space=vmem, size = 0x400, scoped, tag = 'input window, operand 23, single buffered']
    #allocation39 [shape = 's32[1]{0}', space=sflag, size = 0x4, scoped, tag = 'scoped memory for tpu_custom_call.1']
    #allocation40 [shape = 'u8[32768]{0}', space=vmem, size = 0x8000, scoped, tag = 'output window, operand 0, single buffered']
    %29 = vsyncpa [#allocation3], 0
    %30 = vsyncpa [#allocation6], 0
    %31 = vsyncpa [#allocation9], 0
    %32 = vsyncpa [#allocation12], 0
    %33 = vsyncpa [#allocation15], 0
    %34 = vsyncpa [#allocation18], 0
    %35 = vsyncpa [#allocation21], 0
    %36 = vsyncpa [#allocation24], 0
    %37 = vsyncpa [#allocation27], 0
    %38 = vsyncpa [#allocation30], 0
    %39 = vsyncpa [#allocation33], 0
    %40 = vsyncpa [#allocation36], 0
    %41 = vsyncpa [#allocation39], 0
    %42 = vsyncpa [#allocation4], 0
    // Predicated region
    $region2: #{tpu_custom_call.1} parent=1 // pred_check
      _
    $region3: #{tpu_custom_call.1} parent=1 // pred_check_branch
      %44 = sbr.rel (0) target = $region5
    $region4: #{tpu_custom_call.1} parent=1 // pred_region
      %s46 = ssub.s32 1024, 1024
      %47 = vsyncadd [#allocation3], %s46
      %s48 = sshll.u32 [#allocation2], 4
      %s49 = int_to_ptr.vmem [resolvable:$true] %s48
      %54 = dma.hbm_to_vmem [thread:$0]  %s0, 1024, %s49, [#allocation3], 128, 128, 8
    $region5: #{tpu_custom_call.1} parent=1 // pred_fallthru
      _
    // Predicated region
    $region6: #{tpu_custom_call.1} parent=1 // pred_check
      _
    $region7: #{tpu_custom_call.1} parent=1 // pred_check_branch
      %56 = sbr.rel (0) target = $region9
    $region8: #{tpu_custom_call.1} parent=1 // pred_region
      %s58 = ssub.s32 1024, 1024
      %59 = vsyncadd [#allocation6], %s58
      %s60 = sshll.u32 [#allocation5], 4
      %s61 = int_to_ptr.vmem [resolvable:$true] %s60
      %66 = dma.hbm_to_vmem [thread:$0]  %s1, 1024, %s61, [#allocation6], 128, 128, 8
    $region9: #{tpu_custom_call.1} parent=1 // pred_fallthru
      _
    // Predicated region
    $region10: #{tpu_custom_call.1} parent=1 // pred_check
      _
    $region11: #{tpu_custom_call.1} parent=1 // pred_check_branch
      %68 = sbr.rel (0) target = $region13
    $region12: #{tpu_custom_call.1} parent=1 // pred_region
      %s70 = ssub.s32 2048, 2048
      %71 = vsyncadd [#allocation6], %s70
      %s72 = sshll.u32 [#allocation7], 4
      %s73 = int_to_ptr.vmem [resolvable:$true] %s72
      %78 = dma.hbm_to_vmem [thread:$0]  %s2, 2048, %s73, [#allocation6], 128, 128, 8
    $region13: #{tpu_custom_call.1} parent=1 // pred_fallthru
      _
    // Predicated region
    $region14: #{tpu_custom_call.1} parent=1 // pred_check
      _
    $region15: #{tpu_custom_call.1} parent=1 // pred_check_branch
      %80 = sbr.rel (0) target = $region17
    $region16: #{tpu_custom_call.1} parent=1 // pred_region
      %s82 = ssub.s32 2048, 2048
      %83 = vsyncadd [#allocation9], %s82
      %s84 = sshll.u32 [#allocation8], 4
      %s85 = int_to_ptr.vmem [resolvable:$true] %s84
      %90 = dma.hbm_to_vmem [thread:$0]  %s3, 2048, %s85, [#allocation9], 128, 128, 8
    $region17: #{tpu_custom_call.1} parent=1 // pred_fallthru
      _
    // Predicated region
    $region18: #{tpu_custom_call.1} parent=1 // pred_check
      _
    $region19: #{tpu_custom_call.1} parent=1 // pred_check_branch
      %92 = sbr.rel (0) target = $region21
    $region20: #{tpu_custom_call.1} parent=1 // pred_region
      %s94 = ssub.s32 32, 32
      %95 = vsyncadd [#allocation9], %s94
      %s97 = sshll.u32 [#allocation10], 4
      %s98 = int_to_ptr.vmem [resolvable:$true] %s97
      %100 = dma.hbm_to_vmem [thread:$0]  %s4, 32, %s98, [#allocation9]
    $region21: #{tpu_custom_call.1} parent=1 // pred_fallthru
      _
    // Predicated region
    $region22: #{tpu_custom_call.1} parent=1 // pred_check
      _
    $region23: #{tpu_custom_call.1} parent=1 // pred_check_branch
      %102 = sbr.rel (0) target = $region25
    $region24: #{tpu_custom_call.1} parent=1 // pred_region
      %s104 = ssub.s32 32, 32
      %105 = vsyncadd [#allocation12], %s104
      %s107 = sshll.u32 [#allocation11], 4
      %s108 = int_to_ptr.vmem [resolvable:$true] %s107
      %110 = dma.hbm_to_vmem [thread:$0]  %s5, 32, %s108, [#allocation12]
    $region25: #{tpu_custom_call.1} parent=1 // pred_fallthru
      _
    // Predicated region
    $region26: #{tpu_custom_call.1} parent=1 // pred_check
      _
    $region27: #{tpu_custom_call.1} parent=1 // pred_check_branch
      %112 = sbr.rel (0) target = $region29
    $region28: #{tpu_custom_call.1} parent=1 // pred_region
      %s114 = ssub.s32 16, 16
      %115 = vsyncadd [#allocation12], %s114
      %s117 = sshll.u32 [#allocation13], 4
      %s118 = int_to_ptr.vmem [resolvable:$true] %s117
      %120 = dma.hbm_to_vmem [thread:$0]  %s6, 16, %s118, [#allocation12]
    $region29: #{tpu_custom_call.1} parent=1 // pred_fallthru
      _
    // Predicated region
    $region30: #{tpu_custom_call.1} parent=1 // pred_check
      _
    $region31: #{tpu_custom_call.1} parent=1 // pred_check_branch
      %122 = sbr.rel (0) target = $region33
    $region32: #{tpu_custom_call.1} parent=1 // pred_region
      %s124 = ssub.s32 2048, 2048
      %125 = vsyncadd [#allocation15], %s124
      %s126 = sshll.u32 [#allocation14], 4
      %s127 = int_to_ptr.vmem [resolvable:$true] %s126
      %132 = dma.hbm_to_vmem [thread:$0]  %s7, 2048, %s127, [#allocation15], 128, 128, 8
    $region33: #{tpu_custom_call.1} parent=1 // pred_fallthru
      _
    // Predicated region
    $region34: #{tpu_custom_call.1} parent=1 // pred_check
      _
    $region35: #{tpu_custom_call.1} parent=1 // pred_check_branch
      %134 = sbr.rel (0) target = $region37
    $region36: #{tpu_custom_call.1} parent=1 // pred_region
      %s136 = ssub.s32 2048, 2048
      %137 = vsyncadd [#allocation15], %s136
      %s138 = sshll.u32 [#allocation16], 4
      %s139 = int_to_ptr.vmem [resolvable:$true] %s138
      %144 = dma.hbm_to_vmem [thread:$0]  %s8, 2048, %s139, [#allocation15], 128, 128, 8
    $region37: #{tpu_custom_call.1} parent=1 // pred_fallthru
      _
    // Predicated region
    $region38: #{tpu_custom_call.1} parent=1 // pred_check
      _
    $region39: #{tpu_custom_call.1} parent=1 // pred_check_branch
      %146 = sbr.rel (0) target = $region41
    $region40: #{tpu_custom_call.1} parent=1 // pred_region
      %s148 = ssub.s32 32, 32
      %149 = vsyncadd [#allocation18], %s148
      %s151 = sshll.u32 [#allocation17], 4
      %s152 = int_to_ptr.vmem [resolvable:$true] %s151
      %154 = dma.hbm_to_vmem [thread:$0]  %s9, 32, %s152, [#allocation18]
    $region41: #{tpu_custom_call.1} parent=1 // pred_fallthru
      _
    // Predicated region
    $region42: #{tpu_custom_call.1} parent=1 // pred_check
      _
    $region43: #{tpu_custom_call.1} parent=1 // pred_check_branch
      %156 = sbr.rel (0) target = $region45
    $region44: #{tpu_custom_call.1} parent=1 // pred_region
      %s158 = ssub.s32 32, 32
      %159 = vsyncadd [#allocation18], %s158
      %s161 = sshll.u32 [#allocation19], 4
      %s162 = int_to_ptr.vmem [resolvable:$true] %s161
      %164 = dma.hbm_to_vmem [thread:$0]  %s10, 32, %s162, [#allocation18]
    $region45: #{tpu_custom_call.1} parent=1 // pred_fallthru
      _
    // Predicated region
    $region46: #{tpu_custom_call.1} parent=1 // pred_check
      _
    $region47: #{tpu_custom_call.1} parent=1 // pred_check_branch
      %166 = sbr.rel (0) target = $region49
    $region48: #{tpu_custom_call.1} parent=1 // pred_region
      %s168 = ssub.s32 2048, 2048
      %169 = vsyncadd [#allocation21], %s168
      %s170 = sshll.u32 [#allocation20], 4
      %s171 = int_to_ptr.vmem [resolvable:$true] %s170
      %176 = dma.hbm_to_vmem [thread:$0]  %s11, 2048, %s171, [#allocation21], 128, 128, 8
    $region49: #{tpu_custom_call.1} parent=1 // pred_fallthru
      _
    // Predicated region
    $region50: #{tpu_custom_call.1} parent=1 // pred_check
      _
    $region51: #{tpu_custom_call.1} parent=1 // pred_check_branch
      %178 = sbr.rel (0) target = $region53
    $region52: #{tpu_custom_call.1} parent=1 // pred_region
      %s180 = ssub.s32 2048, 2048
      %181 = vsyncadd [#allocation21], %s180
      %s182 = sshll.u32 [#allocation22], 4
      %s183 = int_to_ptr.vmem [resolvable:$true] %s182
      %188 = dma.hbm_to_vmem [thread:$0]  %s12, 2048, %s183, [#allocation21], 128, 128, 8
    $region53: #{tpu_custom_call.1} parent=1 // pred_fallthru
      _
    // Predicated region
    $region54: #{tpu_custom_call.1} parent=1 // pred_check
      _
    $region55: #{tpu_custom_call.1} parent=1 // pred_check_branch
      %190 = sbr.rel (0) target = $region57
    $region56: #{tpu_custom_call.1} parent=1 // pred_region
      %s192 = ssub.s32 32, 32
      %193 = vsyncadd [#allocation24], %s192
      %s195 = sshll.u32 [#allocation23], 4
      %s196 = int_to_ptr.vmem [resolvable:$true] %s195
      %198 = dma.hbm_to_vmem [thread:$0]  %s13, 32, %s196, [#allocation24]
    $region57: #{tpu_custom_call.1} parent=1 // pred_fallthru
      _
    // Predicated region
    $region58: #{tpu_custom_call.1} parent=1 // pred_check
      _
    $region59: #{tpu_custom_call.1} parent=1 // pred_check_branch
      %200 = sbr.rel (0) target = $region61
    $region60: #{tpu_custom_call.1} parent=1 // pred_region
      %s202 = ssub.s32 32, 32
      %203 = vsyncadd [#allocation24], %s202
      %s205 = sshll.u32 [#allocation25], 4
      %s206 = int_to_ptr.vmem [resolvable:$true] %s205
      %208 = dma.hbm_to_vmem [thread:$0]  %s14, 32, %s206, [#allocation24]
    $region61: #{tpu_custom_call.1} parent=1 // pred_fallthru
      _
    // Predicated region
    $region62: #{tpu_custom_call.1} parent=1 // pred_check
      _
    $region63: #{tpu_custom_call.1} parent=1 // pred_check_branch
      %210 = sbr.rel (0) target = $region65
    $region64: #{tpu_custom_call.1} parent=1 // pred_region
      %s212 = ssub.s32 16, 16
      %213 = vsyncadd [#allocation27], %s212
      %s215 = sshll.u32 [#allocation26], 4
      %s216 = int_to_ptr.vmem [resolvable:$true] %s215
      %218 = dma.hbm_to_vmem [thread:$0]  %s15, 16, %s216, [#allocation27]
    $region65: #{tpu_custom_call.1} parent=1 // pred_fallthru
      _
    // Predicated region
    $region66: #{tpu_custom_call.1} parent=1 // pred_check
      _
    $region67: #{tpu_custom_call.1} parent=1 // pred_check_branch
      %220 = sbr.rel (0) target = $region69
    $region68: #{tpu_custom_call.1} parent=1 // pred_region
      %s222 = ssub.s32 2048, 2048
      %223 = vsyncadd [#allocation27], %s222
      %s224 = sshll.u32 [#allocation28], 4
      %s225 = int_to_ptr.vmem [resolvable:$true] %s224
      %230 = dma.hbm_to_vmem [thread:$0]  %s16, 2048, %s225, [#allocation27], 128, 128, 8
    $region69: #{tpu_custom_call.1} parent=1 // pred_fallthru
      _
    // Predicated region
    $region70: #{tpu_custom_call.1} parent=1 // pred_check
      _
    $region71: #{tpu_custom_call.1} parent=1 // pred_check_branch
      %232 = sbr.rel (0) target = $region73
    $region72: #{tpu_custom_call.1} parent=1 // pred_region
      %s234 = ssub.s32 2048, 2048
      %235 = vsyncadd [#allocation30], %s234
      %s236 = sshll.u32 [#allocation29], 4
      %s237 = int_to_ptr.vmem [resolvable:$true] %s236
      %242 = dma.hbm_to_vmem [thread:$0]  %s17, 2048, %s237, [#allocation30], 128, 128, 8
    $region73: #{tpu_custom_call.1} parent=1 // pred_fallthru
      _
    // Predicated region
    $region74: #{tpu_custom_call.1} parent=1 // pred_check
      _
    $region75: #{tpu_custom_call.1} parent=1 // pred_check_branch
      %244 = sbr.rel (0) target = $region77
    $region76: #{tpu_custom_call.1} parent=1 // pred_region
      %s246 = ssub.s32 16, 16
      %247 = vsyncadd [#allocation30], %s246
      %s249 = sshll.u32 [#allocation31], 4
      %s250 = int_to_ptr.vmem [resolvable:$true] %s249
      %252 = dma.hbm_to_vmem [thread:$0]  %s18, 16, %s250, [#allocation30]
    $region77: #{tpu_custom_call.1} parent=1 // pred_fallthru
      _
    // Predicated region
    $region78: #{tpu_custom_call.1} parent=1 // pred_check
      _
    $region79: #{tpu_custom_call.1} parent=1 // pred_check_branch
      %254 = sbr.rel (0) target = $region81
    $region80: #{tpu_custom_call.1} parent=1 // pred_region
      %s256 = ssub.s32 16, 16
      %257 = vsyncadd [#allocation33], %s256
      %s259 = sshll.u32 [#allocation32], 4
      %s260 = int_to_ptr.vmem [resolvable:$true] %s259
      %262 = dma.hbm_to_vmem [thread:$0]  %s19, 16, %s260, [#allocation33]
    $region81: #{tpu_custom_call.1} parent=1 // pred_fallthru
      _
    // Predicated region
    $region82: #{tpu_custom_call.1} parent=1 // pred_check
      _
    $region83: #{tpu_custom_call.1} parent=1 // pred_check_branch
      %264 = sbr.rel (0) target = $region85
    $region84: #{tpu_custom_call.1} parent=1 // pred_region
      %s266 = ssub.s32 16, 16
      %267 = vsyncadd [#allocation33], %s266
      %s269 = sshll.u32 [#allocation34], 4
      %s270 = int_to_ptr.vmem [resolvable:$true] %s269
      %272 = dma.hbm_to_vmem [thread:$0]  %s20, 16, %s270, [#allocation33]
    $region85: #{tpu_custom_call.1} parent=1 // pred_fallthru
      _
    // Predicated region
    $region86: #{tpu_custom_call.1} parent=1 // pred_check
      _
    $region87: #{tpu_custom_call.1} parent=1 // pred_check_branch
      %274 = sbr.rel (0) target = $region89
    $region88: #{tpu_custom_call.1} parent=1 // pred_region
      %s276 = ssub.s32 16, 16
      %277 = vsyncadd [#allocation36], %s276
      %s279 = sshll.u32 [#allocation35], 4
      %s280 = int_to_ptr.vmem [resolvable:$true] %s279
      %282 = dma.hbm_to_vmem [thread:$0]  %s21, 16, %s280, [#allocation36]
    $region89: #{tpu_custom_call.1} parent=1 // pred_fallthru
      _
    // Predicated region
    $region90: #{tpu_custom_call.1} parent=1 // pred_check
      _
    $region91: #{tpu_custom_call.1} parent=1 // pred_check_branch
      %284 = sbr.rel (0) target = $region93
    $region92: #{tpu_custom_call.1} parent=1 // pred_region
      %s286 = ssub.s32 16, 16
      %287 = vsyncadd [#allocation36], %s286
      %s289 = sshll.u32 [#allocation37], 4
      %s290 = int_to_ptr.vmem [resolvable:$true] %s289
      %292 = dma.hbm_to_vmem [thread:$0]  %s22, 16, %s290, [#allocation36]
    $region93: #{tpu_custom_call.1} parent=1 // pred_fallthru
      _
    // Predicated region
    $region94: #{tpu_custom_call.1} parent=1 // pred_check
      _
    $region95: #{tpu_custom_call.1} parent=1 // pred_check_branch
      %294 = sbr.rel (0) target = $region97
    $region96: #{tpu_custom_call.1} parent=1 // pred_region
      %s296 = ssub.s32 16, 16
      %297 = vsyncadd [#allocation39], %s296
      %s299 = sshll.u32 [#allocation38], 4
      %s300 = int_to_ptr.vmem [resolvable:$true] %s299
      %302 = dma.hbm_to_vmem [thread:$0]  %s23, 16, %s300, [#allocation39]
    $region97: #{tpu_custom_call.1} parent=1 // pred_fallthru
      _
    // Predicated region
    $region98: #{tpu_custom_call.1} parent=1 // pred_check
      _
    $region99: #{tpu_custom_call.1} parent=1 // pred_check_branch
      %304 = sbr.rel (0) target = $region101
    $region100: #{tpu_custom_call.1} parent=1 // pred_region
      %305 = dma.done [#allocation3], 1024
    $region101: #{tpu_custom_call.1} parent=1 // pred_fallthru
      _
    // Predicated region
    $region102: #{tpu_custom_call.1} parent=1 // pred_check
      _
    $region103: #{tpu_custom_call.1} parent=1 // pred_check_branch
      %307 = sbr.rel (0) target = $region105
    $region104: #{tpu_custom_call.1} parent=1 // pred_region
      %308 = dma.done [#allocation6], 1024
    $region105: #{tpu_custom_call.1} parent=1 // pred_fallthru
      _
    // Predicated region
    $region106: #{tpu_custom_call.1} parent=1 // pred_check
      _
    $region107: #{tpu_custom_call.1} parent=1 // pred_check_branch
      %310 = sbr.rel (0) target = $region109
    $region108: #{tpu_custom_call.1} parent=1 // pred_region
      %311 = dma.done [#allocation6], 2048
    $region109: #{tpu_custom_call.1} parent=1 // pred_fallthru
      _
    // Predicated region
    $region110: #{tpu_custom_call.1} parent=1 // pred_check
      _
    $region111: #{tpu_custom_call.1} parent=1 // pred_check_branch
      %313 = sbr.rel (0) target = $region113
    $region112: #{tpu_custom_call.1} parent=1 // pred_region
      %314 = dma.done [#allocation9], 2048
    $region113: #{tpu_custom_call.1} parent=1 // pred_fallthru
      _
    // Predicated region
    $region114: #{tpu_custom_call.1} parent=1 // pred_check
      _
    $region115: #{tpu_custom_call.1} parent=1 // pred_check_branch
      %316 = sbr.rel (0) target = $region117
    $region116: #{tpu_custom_call.1} parent=1 // pred_region
      %317 = dma.done [#allocation9], 32
    $region117: #{tpu_custom_call.1} parent=1 // pred_fallthru
      _
    // Predicated region
    $region118: #{tpu_custom_call.1} parent=1 // pred_check
      _
    $region119: #{tpu_custom_call.1} parent=1 // pred_check_branch
      %319 = sbr.rel (0) target = $region121
    $region120: #{tpu_custom_call.1} parent=1 // pred_region
      %320 = dma.done [#allocation12], 32
    $region121: #{tpu_custom_call.1} parent=1 // pred_fallthru
      _
    // Predicated region
    $region122: #{tpu_custom_call.1} parent=1 // pred_check
      _
    $region123: #{tpu_custom_call.1} parent=1 // pred_check_branch
      %322 = sbr.rel (0) target = $region125
    $region124: #{tpu_custom_call.1} parent=1 // pred_region
      %323 = dma.done [#allocation12], 16
    $region125: #{tpu_custom_call.1} parent=1 // pred_fallthru
      _
    // Predicated region
    $region126: #{tpu_custom_call.1} parent=1 // pred_check
      _
    $region127: #{tpu_custom_call.1} parent=1 // pred_check_branch
      %325 = sbr.rel (0) target = $region129
    $region128: #{tpu_custom_call.1} parent=1 // pred_region
      %326 = dma.done [#allocation15], 2048
    $region129: #{tpu_custom_call.1} parent=1 // pred_fallthru
      _
    // Predicated region
    $region130: #{tpu_custom_call.1} parent=1 // pred_check
      _
    $region131: #{tpu_custom_call.1} parent=1 // pred_check_branch
      %328 = sbr.rel (0) target = $region133
    $region132: #{tpu_custom_call.1} parent=1 // pred_region
      %329 = dma.done [#allocation15], 2048
    $region133: #{tpu_custom_call.1} parent=1 // pred_fallthru
      _
    // Predicated region
    $region134: #{tpu_custom_call.1} parent=1 // pred_check
      _
    $region135: #{tpu_custom_call.1} parent=1 // pred_check_branch
      %331 = sbr.rel (0) target = $region137
    $region136: #{tpu_custom_call.1} parent=1 // pred_region
      %332 = dma.done [#allocation18], 32
    $region137: #{tpu_custom_call.1} parent=1 // pred_fallthru
      _
    // Predicated region
    $region138: #{tpu_custom_call.1} parent=1 // pred_check
      _
    $region139: #{tpu_custom_call.1} parent=1 // pred_check_branch
      %334 = sbr.rel (0) target = $region141
    $region140: #{tpu_custom_call.1} parent=1 // pred_region
      %335 = dma.done [#allocation18], 32
    $region141: #{tpu_custom_call.1} parent=1 // pred_fallthru
      _
    // Predicated region
    $region142: #{tpu_custom_call.1} parent=1 // pred_check
      _
    $region143: #{tpu_custom_call.1} parent=1 // pred_check_branch
      %337 = sbr.rel (0) target = $region145
    $region144: #{tpu_custom_call.1} parent=1 // pred_region
      %338 = dma.done [#allocation21], 2048
    $region145: #{tpu_custom_call.1} parent=1 // pred_fallthru
      _
    // Predicated region
    $region146: #{tpu_custom_call.1} parent=1 // pred_check
      _
    $region147: #{tpu_custom_call.1} parent=1 // pred_check_branch
      %340 = sbr.rel (0) target = $region149
    $region148: #{tpu_custom_call.1} parent=1 // pred_region
      %341 = dma.done [#allocation21], 2048
    $region149: #{tpu_custom_call.1} parent=1 // pred_fallthru
      _
    // Predicated region
    $region150: #{tpu_custom_call.1} parent=1 // pred_check
      _
    $region151: #{tpu_custom_call.1} parent=1 // pred_check_branch
      %343 = sbr.rel (0) target = $region153
    $region152: #{tpu_custom_call.1} parent=1 // pred_region
      %344 = dma.done [#allocation24], 32
    $region153: #{tpu_custom_call.1} parent=1 // pred_fallthru
      _
    // Predicated region
    $region154: #{tpu_custom_call.1} parent=1 // pred_check
      _
    $region155: #{tpu_custom_call.1} parent=1 // pred_check_branch
      %346 = sbr.rel (0) target = $region157
    $region156: #{tpu_custom_call.1} parent=1 // pred_region
      %347 = dma.done [#allocation24], 32
    $region157: #{tpu_custom_call.1} parent=1 // pred_fallthru
      _
    // Predicated region
    $region158: #{tpu_custom_call.1} parent=1 // pred_check
      _
    $region159: #{tpu_custom_call.1} parent=1 // pred_check_branch
      %349 = sbr.rel (0) target = $region161
    $region160: #{tpu_custom_call.1} parent=1 // pred_region
      %350 = dma.done [#allocation27], 16
    $region161: #{tpu_custom_call.1} parent=1 // pred_fallthru
      _
    // Predicated region
    $region162: #{tpu_custom_call.1} parent=1 // pred_check
      _
    $region163: #{tpu_custom_call.1} parent=1 // pred_check_branch
      %352 = sbr.rel (0) target = $region165
    $region164: #{tpu_custom_call.1} parent=1 // pred_region
      %353 = dma.done [#allocation27], 2048
    $region165: #{tpu_custom_call.1} parent=1 // pred_fallthru
      _
    // Predicated region
    $region166: #{tpu_custom_call.1} parent=1 // pred_check
      _
    $region167: #{tpu_custom_call.1} parent=1 // pred_check_branch
      %355 = sbr.rel (0) target = $region169
    $region168: #{tpu_custom_call.1} parent=1 // pred_region
      %356 = dma.done [#allocation30], 2048
    $region169: #{tpu_custom_call.1} parent=1 // pred_fallthru
      _
    // Predicated region
    $region170: #{tpu_custom_call.1} parent=1 // pred_check
      _
    $region171: #{tpu_custom_call.1} parent=1 // pred_check_branch
      %358 = sbr.rel (0) target = $region173
    $region172: #{tpu_custom_call.1} parent=1 // pred_region
      %359 = dma.done [#allocation30], 16
    $region173: #{tpu_custom_call.1} parent=1 // pred_fallthru
      _
    // Predicated region
    $region174: #{tpu_custom_call.1} parent=1 // pred_check
      _
    $region175: #{tpu_custom_call.1} parent=1 // pred_check_branch
      %361 = sbr.rel (0) target = $region177
    $region176: #{tpu_custom_call.1} parent=1 // pred_region
      %362 = dma.done [#allocation33], 16
    $region177: #{tpu_custom_call.1} parent=1 // pred_fallthru
      _
    // Predicated region
    $region178: #{tpu_custom_call.1} parent=1 // pred_check
      _
    $region179: #{tpu_custom_call.1} parent=1 // pred_check_branch
      %364 = sbr.rel (0) target = $region181
    $region180: #{tpu_custom_call.1} parent=1 // pred_region
      %365 = dma.done [#allocation33], 16
    $region181: #{tpu_custom_call.1} parent=1 // pred_fallthru
      _
    // Predicated region
    $region182: #{tpu_custom_call.1} parent=1 // pred_check
      _
    $region183: #{tpu_custom_call.1} parent=1 // pred_check_branch
      %367 = sbr.rel (0) target = $region185
    $region184: #{tpu_custom_call.1} parent=1 // pred_region
      %368 = dma.done [#allocation36], 16
    $region185: #{tpu_custom_call.1} parent=1 // pred_fallthru
      _
    // Predicated region
    $region186: #{tpu_custom_call.1} parent=1 // pred_check
      _
    $region187: #{tpu_custom_call.1} parent=1 // pred_check_branch
      %370 = sbr.rel (0) target = $region189
    $region188: #{tpu_custom_call.1} parent=1 // pred_region
      %371 = dma.done [#allocation36], 16
    $region189: #{tpu_custom_call.1} parent=1 // pred_fallthru
      _
    // Predicated region
    $region190: #{tpu_custom_call.1} parent=1 // pred_check
      _
    $region191: #{tpu_custom_call.1} parent=1 // pred_check_branch
      %373 = sbr.rel (0) target = $region193
    $region192: #{tpu_custom_call.1} parent=1 // pred_region
      %374 = dma.done [#allocation39], 16
    $region193: #{tpu_custom_call.1} parent=1 // pred_fallthru
      _
    %v375 = vld [vmem:[#allocation5] sm:$0xff]
    %v376 = vld [vmem:[#allocation5 + $0x8] sm:$0xff]
    %v377 = vld [vmem:[#allocation5 + $0x10] sm:$0xff]
    %v378 = vld [vmem:[#allocation5 + $0x18] sm:$0xff]
    %v379 = vld [vmem:[#allocation5 + $0x20] sm:$0xff]
    %v380 = vld [vmem:[#allocation5 + $0x28] sm:$0xff]
    %v381 = vld [vmem:[#allocation5 + $0x30] sm:$0xff]
    %v382 = vld [vmem:[#allocation5 + $0x38] sm:$0xff]
    %v383 = vld [vmem:[#allocation2] sm:$0xff]
    %v384 = vld [vmem:[#allocation2 + $0x8] sm:$0xff]
    %v385 = vld [vmem:[#allocation2 + $0x10] sm:$0xff]
    %v386 = vld [vmem:[#allocation2 + $0x18] sm:$0xff]
    %v387 = vld [vmem:[#allocation2 + $0x20] sm:$0xff]
    %v388 = vld [vmem:[#allocation2 + $0x28] sm:$0xff]
    %v389 = vld [vmem:[#allocation2 + $0x30] sm:$0xff]
    %v390 = vld [vmem:[#allocation2 + $0x38] sm:$0xff]
    %v391 = vld [vmem:[#allocation7] sm:$0xff]
    %v392 = vld [vmem:[#allocation7 + $0x8] sm:$0xff]
    %v393 = vld [vmem:[#allocation7 + $0x10] sm:$0xff]
    %v394 = vld [vmem:[#allocation7 + $0x18] sm:$0xff]
    %v395 = vld [vmem:[#allocation7 + $0x20] sm:$0xff]
    %v396 = vld [vmem:[#allocation7 + $0x28] sm:$0xff]
    %v397 = vld [vmem:[#allocation7 + $0x30] sm:$0xff]
    %v398 = vld [vmem:[#allocation7 + $0x38] sm:$0xff]
    %v399 = vld [vmem:[#allocation7 + $0x40] sm:$0xff]
    %v400 = vld [vmem:[#allocation7 + $0x48] sm:$0xff]
    %v401 = vld [vmem:[#allocation7 + $0x50] sm:$0xff]
    %v402 = vld [vmem:[#allocation7 + $0x58] sm:$0xff]
    %v403 = vld [vmem:[#allocation7 + $0x60] sm:$0xff]
    %v404 = vld [vmem:[#allocation7 + $0x68] sm:$0xff]
    %v405 = vld [vmem:[#allocation7 + $0x70] sm:$0xff]
    %v406 = vld [vmem:[#allocation7 + $0x78] sm:$0xff]
    %407 = vmatprep.subr.mxu0 0.0
    %408 = vmatpush1.msra.mxu0 %v391
    %409 = vmatprep.subr.mxu0 0.0
    %410 = vmatpush1.msra.mxu0 %v392
    %411 = vmatprep.subr.mxu0 0.0
    %412 = vmatpush1.msra.mxu0 %v393
    %413 = vmatprep.subr.mxu0 0.0
    %414 = vmatpush1.msra.mxu0 %v394
    %415 = vmatprep.subr.mxu0 0.0
    %416 = vmatpush1.msra.mxu0 %v395
    %417 = vmatprep.subr.mxu0 0.0
    %418 = vmatpush1.msra.mxu0 %v396
    %419 = vmatprep.subr.mxu0 0.0
    %420 = vmatpush1.msra.mxu0 %v397
    %421 = vmatprep.subr.mxu0 0.0
    %422 = vmatpush1.msra.mxu0 %v398
    %423 = vmatprep.subr.mxu0 0.0
    %424 = vmatpush1.msra.mxu0 %v399
    %425 = vmatprep.subr.mxu0 0.0
    %426 = vmatpush1.msra.mxu0 %v400
    %427 = vmatprep.subr.mxu0 0.0
    %428 = vmatpush1.msra.mxu0 %v401
    %429 = vmatprep.subr.mxu0 0.0
    %430 = vmatpush1.msra.mxu0 %v402
    %431 = vmatprep.subr.mxu0 0.0
    %432 = vmatpush1.msra.mxu0 %v403
    %433 = vmatprep.subr.mxu0 0.0
    %434 = vmatpush1.msra.mxu0 %v404
    %435 = vmatprep.subr.mxu0 0.0
    %436 = vmatpush1.msra.mxu0 %v405
    %437 = vmatprep.subr.mxu0 0.0
    %438 = vmatpush1.msra.mxu0 %v406
    %439 = vmatprep.subr.mxu0 0.0
    %440 = vmatpush1.msra.mxu0 0.0
    %441 = vmatprep.subr.mxu0 0.0
    %442 = vmatpush1.msra.mxu0 0.0
    %443 = vmatprep.subr.mxu0 0.0
    %444 = vmatpush1.msra.mxu0 0.0
    %445 = vmatprep.subr.mxu0 0.0
    %446 = vmatpush1.msra.mxu0 0.0
    %447 = vmatprep.subr.mxu0 0.0
    %448 = vmatpush1.msra.mxu0 0.0
    %449 = vmatprep.subr.mxu0 0.0
    %450 = vmatpush1.msra.mxu0 0.0
    %451 = vmatprep.subr.mxu0 0.0
    %452 = vmatpush1.msra.mxu0 0.0
    %453 = vmatprep.subr.mxu0 0.0
    %454 = vmatpush1.msra.mxu0 0.0
    %455 = vmatprep.subr.mxu0 0.0
    %456 = vmatpush1.msra.mxu0 0.0
    %457 = vmatprep.subr.mxu0 0.0
    %458 = vmatpush1.msra.mxu0 0.0
    %459 = vmatprep.subr.mxu0 0.0
    %460 = vmatpush1.msra.mxu0 0.0
    %461 = vmatprep.subr.mxu0 0.0
    %462 = vmatpush1.msra.mxu0 0.0
    %463 = vmatprep.subr.mxu0 0.0
    %464 = vmatpush1.msra.mxu0 0.0
    %465 = vmatprep.subr.mxu0 0.0
    %466 = vmatpush1.msra.mxu0 0.0
    %467 = vmatprep.subr.mxu0 0.0
    %468 = vmatpush1.msra.mxu0 0.0
    %469 = vmatprep.subr.mxu0 0.0
    %470 = vmatpush1.msra.mxu0 0.0
    %471 = vmatprep.mubr.f32.mxu0 0.0
    %472 = vmatmul.mubr.f32.gmra.mrb[0].mxu0 %v383
    %v473 = vpop.f32.mrb[0].mxu0
    %v474 = vadd.f32 0.0, %v473
    %v475 = vpop.f32.mrb[0].mxu0
    %476 = vmatprep.mubr.f32.mxu0 0.0
    %477 = vmatmul.mubr.f32.gmra.mrb[0].mxu0 %v384
    %v478 = vpop.f32.mrb[0].mxu0
    %v479 = vadd.f32 0.0, %v478
    %v480 = vpop.f32.mrb[0].mxu0
    %481 = vmatprep.mubr.f32.mxu0 0.0
    %482 = vmatmul.mubr.f32.gmra.mrb[0].mxu0 %v385
    %v483 = vpop.f32.mrb[0].mxu0
    %v484 = vadd.f32 0.0, %v483
    %v485 = vpop.f32.mrb[0].mxu0
    %486 = vmatprep.mubr.f32.mxu0 0.0
    %487 = vmatmul.mubr.f32.gmra.mrb[0].mxu0 %v386
    %v488 = vpop.f32.mrb[0].mxu0
    %v489 = vadd.f32 0.0, %v488
    %v490 = vpop.f32.mrb[0].mxu0
    %491 = vmatprep.mubr.f32.mxu0 0.0
    %492 = vmatmul.mubr.f32.gmra.mrb[0].mxu0 %v387
    %v493 = vpop.f32.mrb[0].mxu0
    %v494 = vadd.f32 0.0, %v493
    %v495 = vpop.f32.mrb[0].mxu0
    %496 = vmatprep.mubr.f32.mxu0 0.0
    %497 = vmatmul.mubr.f32.gmra.mrb[0].mxu0 %v388
    %v498 = vpop.f32.mrb[0].mxu0
    %v499 = vadd.f32 0.0, %v498
    %v500 = vpop.f32.mrb[0].mxu0
    %501 = vmatprep.mubr.f32.mxu0 0.0
    %502 = vmatmul.mubr.f32.gmra.mrb[0].mxu0 %v389
    %v503 = vpop.f32.mrb[0].mxu0
    %v504 = vadd.f32 0.0, %v503
    %v505 = vpop.f32.mrb[0].mxu0
    %506 = vmatprep.mubr.f32.mxu0 0.0
    %507 = vmatmul.mubr.f32.gmra.mrb[0].mxu0 %v390
    %v508 = vpop.f32.mrb[0].mxu0
    %v509 = vadd.f32 0.0, %v508
    %v510 = vpop.f32.mrb[0].mxu0
    %511 = vdwg.mxu0
    %v512 = vld [vmem:[#allocation8] sm:$0xff]
    %v513 = vld [vmem:[#allocation8 + $0x8] sm:$0xff]
    %v514 = vld [vmem:[#allocation8 + $0x10] sm:$0xff]
    %v515 = vld [vmem:[#allocation8 + $0x18] sm:$0xff]
    %v516 = vld [vmem:[#allocation8 + $0x20] sm:$0xff]
    %v517 = vld [vmem:[#allocation8 + $0x28] sm:$0xff]
    %v518 = vld [vmem:[#allocation8 + $0x30] sm:$0xff]
    %v519 = vld [vmem:[#allocation8 + $0x38] sm:$0xff]
    %v520 = vld [vmem:[#allocation8 + $0x40] sm:$0xff]
    %v521 = vld [vmem:[#allocation8 + $0x48] sm:$0xff]
    %v522 = vld [vmem:[#allocation8 + $0x50] sm:$0xff]
    %v523 = vld [vmem:[#allocation8 + $0x58] sm:$0xff]
    %v524 = vld [vmem:[#allocation8 + $0x60] sm:$0xff]
    %v525 = vld [vmem:[#allocation8 + $0x68] sm:$0xff]
    %v526 = vld [vmem:[#allocation8 + $0x70] sm:$0xff]
    %v527 = vld [vmem:[#allocation8 + $0x78] sm:$0xff]
    %528 = vmatprep.subr.mxu0 0.0
    %529 = vmatpush1.msra.mxu0 %v512
    %530 = vmatprep.subr.mxu0 0.0
    %531 = vmatpush1.msra.mxu0 %v513
    %532 = vmatprep.subr.mxu0 0.0
    %533 = vmatpush1.msra.mxu0 %v514
    %534 = vmatprep.subr.mxu0 0.0
    %535 = vmatpush1.msra.mxu0 %v515
    %536 = vmatprep.subr.mxu0 0.0
    %537 = vmatpush1.msra.mxu0 %v516
    %538 = vmatprep.subr.mxu0 0.0
    %539 = vmatpush1.msra.mxu0 %v517
    %540 = vmatprep.subr.mxu0 0.0
    %541 = vmatpush1.msra.mxu0 %v518
    %542 = vmatprep.subr.mxu0 0.0
    %543 = vmatpush1.msra.mxu0 %v519
    %544 = vmatprep.subr.mxu0 0.0
    %545 = vmatpush1.msra.mxu0 %v520
    %546 = vmatprep.subr.mxu0 0.0
    %547 = vmatpush1.msra.mxu0 %v521
    %548 = vmatprep.subr.mxu0 0.0
    %549 = vmatpush1.msra.mxu0 %v522
    %550 = vmatprep.subr.mxu0 0.0
    %551 = vmatpush1.msra.mxu0 %v523
    %552 = vmatprep.subr.mxu0 0.0
    %553 = vmatpush1.msra.mxu0 %v524
    %554 = vmatprep.subr.mxu0 0.0
    %555 = vmatpush1.msra.mxu0 %v525
    %556 = vmatprep.subr.mxu0 0.0
    %557 = vmatpush1.msra.mxu0 %v526
    %558 = vmatprep.subr.mxu0 0.0
    %559 = vmatpush1.msra.mxu0 %v527
    %560 = vmatprep.subr.mxu0 0.0
    %561 = vmatpush1.msra.mxu0 0.0
    %562 = vmatprep.subr.mxu0 0.0
    %563 = vmatpush1.msra.mxu0 0.0
    %564 = vmatprep.subr.mxu0 0.0
    %565 = vmatpush1.msra.mxu0 0.0
    %566 = vmatprep.subr.mxu0 0.0
    %567 = vmatpush1.msra.mxu0 0.0
    %568 = vmatprep.subr.mxu0 0.0
    %569 = vmatpush1.msra.mxu0 0.0
    %570 = vmatprep.subr.mxu0 0.0
    %571 = vmatpush1.msra.mxu0 0.0
    %572 = vmatprep.subr.mxu0 0.0
    %573 = vmatpush1.msra.mxu0 0.0
    %574 = vmatprep.subr.mxu0 0.0
    %575 = vmatpush1.msra.mxu0 0.0
    %576 = vmatprep.subr.mxu0 0.0
    %577 = vmatpush1.msra.mxu0 0.0
    %578 = vmatprep.subr.mxu0 0.0
    %579 = vmatpush1.msra.mxu0 0.0
    %580 = vmatprep.subr.mxu0 0.0
    %581 = vmatpush1.msra.mxu0 0.0
    %582 = vmatprep.subr.mxu0 0.0
    %583 = vmatpush1.msra.mxu0 0.0
    %584 = vmatprep.subr.mxu0 0.0
    %585 = vmatpush1.msra.mxu0 0.0
    %586 = vmatprep.subr.mxu0 0.0
    %587 = vmatpush1.msra.mxu0 0.0
    %588 = vmatprep.subr.mxu0 0.0
    %589 = vmatpush1.msra.mxu0 0.0
    %590 = vmatprep.subr.mxu0 0.0
    %591 = vmatpush1.msra.mxu0 0.0
    %592 = vmatprep.mubr.f32.mxu0 0.0
    %593 = vmatmul.mubr.f32.gmra.mrb[0].mxu0 %v474
    %v594 = vpop.f32.mrb[0].mxu0
    %v595 = vadd.f32 0.0, %v594
    %v596 = vpop.f32.mrb[0].mxu0
    %597 = vmatprep.mubr.f32.mxu0 0.0
    %598 = vmatmul.mubr.f32.gmra.mrb[0].mxu0 %v479
    %v599 = vpop.f32.mrb[0].mxu0
    %v600 = vadd.f32 0.0, %v599
    %v601 = vpop.f32.mrb[0].mxu0
    %602 = vmatprep.mubr.f32.mxu0 0.0
    %603 = vmatmul.mubr.f32.gmra.mrb[0].mxu0 %v484
    %v604 = vpop.f32.mrb[0].mxu0
    %v605 = vadd.f32 0.0, %v604
    %v606 = vpop.f32.mrb[0].mxu0
    %607 = vmatprep.mubr.f32.mxu0 0.0
    %608 = vmatmul.mubr.f32.gmra.mrb[0].mxu0 %v489
    %v609 = vpop.f32.mrb[0].mxu0
    %v610 = vadd.f32 0.0, %v609
    %v611 = vpop.f32.mrb[0].mxu0
    %612 = vmatprep.mubr.f32.mxu0 0.0
    %613 = vmatmul.mubr.f32.gmra.mrb[0].mxu0 %v494
    %v614 = vpop.f32.mrb[0].mxu0
    %v615 = vadd.f32 0.0, %v614
    %v616 = vpop.f32.mrb[0].mxu0
    %617 = vmatprep.mubr.f32.mxu0 0.0
    %618 = vmatmul.mubr.f32.gmra.mrb[0].mxu0 %v499
    %v619 = vpop.f32.mrb[0].mxu0
    %v620 = vadd.f32 0.0, %v619
    %v621 = vpop.f32.mrb[0].mxu0
    %622 = vmatprep.mubr.f32.mxu0 0.0
    %623 = vmatmul.mubr.f32.gmra.mrb[0].mxu0 %v504
    %v624 = vpop.f32.mrb[0].mxu0
    %v625 = vadd.f32 0.0, %v624
    %v626 = vpop.f32.mrb[0].mxu0
    %627 = vmatprep.mubr.f32.mxu0 0.0
    %628 = vmatmul.mubr.f32.gmra.mrb[0].mxu0 %v509
    %v629 = vpop.f32.mrb[0].mxu0
    %v630 = vadd.f32 0.0, %v629
    %v631 = vpop.f32.mrb[0].mxu0
    %632 = vdwg.mxu0
    %v633 = vld [vmem:[#allocation10] sm:$0x3]
    %634 = vmatprep.subr.mxu0 0.0
    %635 = vmatpush1.xpose.msra.mxu0 %v474
    %636 = vmatprep.subr.mxu0 0.0
    %637 = vmatpush1.xpose.msra.mxu0 %v479
    %638 = vmatprep.subr.mxu0 0.0
    %639 = vmatpush1.xpose.msra.mxu0 %v484
    %640 = vmatprep.subr.mxu0 0.0
    %641 = vmatpush1.xpose.msra.mxu0 %v489
    %642 = vmatprep.subr.mxu0 0.0
    %643 = vmatpush1.xpose.msra.mxu0 %v494
    %644 = vmatprep.subr.mxu0 0.0
    %645 = vmatpush1.xpose.msra.mxu0 %v499
    %646 = vmatprep.subr.mxu0 0.0
    %647 = vmatpush1.xpose.msra.mxu0 %v504
    %648 = vmatprep.subr.mxu0 0.0
    %649 = vmatpush1.xpose.msra.mxu0 %v509
    %650 = vmatprep.subr.mxu0 0.0
    %651 = vmatpush1.xpose.msra.mxu0 0.0
    %652 = vmatprep.subr.mxu0 0.0
    %653 = vmatpush1.xpose.msra.mxu0 0.0
    %654 = vmatprep.subr.mxu0 0.0
    %655 = vmatpush1.xpose.msra.mxu0 0.0
    %656 = vmatprep.subr.mxu0 0.0
    %657 = vmatpush1.xpose.msra.mxu0 0.0
    %658 = vmatprep.subr.mxu0 0.0
    %659 = vmatpush1.xpose.msra.mxu0 0.0
    %660 = vmatprep.subr.mxu0 0.0
    %661 = vmatpush1.xpose.msra.mxu0 0.0
    %662 = vmatprep.subr.mxu0 0.0
    %663 = vmatpush1.xpose.msra.mxu0 0.0
    %664 = vmatprep.subr.mxu0 0.0
    %665 = vmatpush1.xpose.msra.mxu0 0.0
    %666 = vmatprep.subr.mxu0 0.0
    %667 = vmatpush1.xpose.msra.mxu0 0.0
    %668 = vmatprep.subr.mxu0 0.0
    %669 = vmatpush1.xpose.msra.mxu0 0.0
    %670 = vmatprep.subr.mxu0 0.0
    %671 = vmatpush1.xpose.msra.mxu0 0.0
    %672 = vmatprep.subr.mxu0 0.0
    %673 = vmatpush1.xpose.msra.mxu0 0.0
    %674 = vmatprep.subr.mxu0 0.0
    %675 = vmatpush1.xpose.msra.mxu0 0.0
    %676 = vmatprep.subr.mxu0 0.0
    %677 = vmatpush1.xpose.msra.mxu0 0.0
    %678 = vmatprep.subr.mxu0 0.0
    %679 = vmatpush1.xpose.msra.mxu0 0.0
    %680 = vmatprep.subr.mxu0 0.0
    %681 = vmatpush1.xpose.msra.mxu0 0.0
    %682 = vmatprep.subr.mxu0 0.0
    %683 = vmatpush1.xpose.msra.mxu0 0.0
    %684 = vmatprep.subr.mxu0 0.0
    %685 = vmatpush1.xpose.msra.mxu0 0.0
    %686 = vmatprep.subr.mxu0 0.0
    %687 = vmatpush1.xpose.msra.mxu0 0.0
    %688 = vmatprep.subr.mxu0 0.0
    %689 = vmatpush1.xpose.msra.mxu0 0.0
    %690 = vmatprep.subr.mxu0 0.0
    %691 = vmatpush1.xpose.msra.mxu0 0.0
    %692 = vmatprep.subr.mxu0 0.0
    %693 = vmatpush1.xpose.msra.mxu0 0.0
    %694 = vmatprep.subr.mxu0 0.0
    %695 = vmatpush1.xpose.msra.mxu0 0.0
    %696 = vmatprep.subr.mxu0 0.0
    %697 = vmatpush1.xpose.msra.mxu0 0.0
    %698 = vmatprep.mubr.f32.mxu0 0.0
    %699 = vmatmul.mubr.f32.gmra.mrb[0].mxu0 %v633
    %v700 = vpop.f32.mrb[0].mxu0
    %v701 = vadd.f32 0.0, %v700
    %v702 = vpop.f32.mrb[0].mxu0
    %703 = vdwg.mxu0
    %705 = vset.pattern.permute.xlu0 0
    %706 = vperm.xlu0 %705, %v595
    %v707 = vpop.permute.xlu0 %706
    %710 = vset.pattern.permute.xlu0 0
    %711 = vperm.xlu0 %710, %v600
    %v712 = vpop.permute.xlu0 %711
    %715 = vset.pattern.permute.xlu0 0
    %716 = vperm.xlu0 %715, %v605
    %v717 = vpop.permute.xlu0 %716
    %720 = vset.pattern.permute.xlu0 0
    %721 = vperm.xlu0 %720, %v610
    %v722 = vpop.permute.xlu0 %721
    %725 = vset.pattern.permute.xlu0 0
    %726 = vperm.xlu0 %725, %v615
    %v727 = vpop.permute.xlu0 %726
    %730 = vset.pattern.permute.xlu0 0
    %731 = vperm.xlu0 %730, %v620
    %v732 = vpop.permute.xlu0 %731
    %735 = vset.pattern.permute.xlu0 0
    %736 = vperm.xlu0 %735, %v625
    %v737 = vpop.permute.xlu0 %736
    %740 = vset.pattern.permute.xlu0 0
    %741 = vperm.xlu0 %740, %v630
    %v742 = vpop.permute.xlu0 %741
    %v744 = vlaneseq
    %v745 = vshrl.u32 %v744, 7
    %v746 = vsub.s32 0, %v745
    %v747 = vrot.slane %v701, %v746
    %v748 = vadd.f32 %v707, %v747
    %v749 = vadd.f32 %v712, %v747
    %v750 = vadd.f32 %v717, %v747
    %v751 = vadd.f32 %v722, %v747
    %v752 = vadd.f32 %v727, %v747
    %v753 = vadd.f32 %v732, %v747
    %v754 = vadd.f32 %v737, %v747
    %v755 = vadd.f32 %v742, %v747
    %v756 = vmul.f32 %v748, 0.2
    %v757 = vmul.f32 %v749, 0.2
    %v758 = vmul.f32 %v750, 0.2
    %v759 = vmul.f32 %v751, 0.2
    %v760 = vmul.f32 %v752, 0.2
    %v761 = vmul.f32 %v753, 0.2
    %v762 = vmul.f32 %v754, 0.2
    %v763 = vmul.f32 %v755, 0.2
    %v764 = vmax.f32 %v748, %v756
    %v765 = vmax.f32 %v749, %v757
    %v766 = vmax.f32 %v750, %v758
    %v767 = vmax.f32 %v751, %v759
    %v768 = vmax.f32 %v752, %v760
    %v769 = vmax.f32 %v753, %v761
    %v770 = vmax.f32 %v754, %v762
    %v771 = vmax.f32 %v755, %v763
    %v772 = vadd.f32 %v764, %v375
    %v773 = vadd.f32 %v765, %v376
    %v774 = vadd.f32 %v766, %v377
    %v775 = vadd.f32 %v767, %v378
    %v776 = vadd.f32 %v768, %v379
    %v777 = vadd.f32 %v769, %v380
    %v778 = vadd.f32 %v770, %v381
    %v779 = vadd.f32 %v771, %v382
    %vm780 = vcmask 523264
    %v781 = vsel %vm780, %v772, -inf
    %782 = vmax.xlane.f32.xlu0 %v781
    %v783 = vpop.xlane.xlu0 %782
    %v784 = vsel %vm780, %v773, -inf
    %785 = vmax.xlane.f32.xlu0 %v784
    %v786 = vpop.xlane.xlu0 %785
    %v787 = vsel %vm780, %v774, -inf
    %788 = vmax.xlane.f32.xlu0 %v787
    %v789 = vpop.xlane.xlu0 %788
    %v790 = vsel %vm780, %v775, -inf
    %791 = vmax.xlane.f32.xlu0 %v790
    %v792 = vpop.xlane.xlu0 %791
    %v793 = vsel %vm780, %v776, -inf
    %794 = vmax.xlane.f32.xlu0 %v793
    %v795 = vpop.xlane.xlu0 %794
    %v796 = vsel %vm780, %v777, -inf
    %797 = vmax.xlane.f32.xlu0 %v796
    %v798 = vpop.xlane.xlu0 %797
    %v799 = vsel %vm780, %v778, -inf
    %800 = vmax.xlane.f32.xlu0 %v799
    %v801 = vpop.xlane.xlu0 %800
    %v802 = vsel %vm780, %v779, -inf
    %803 = vmax.xlane.f32.xlu0 %v802
    %v804 = vpop.xlane.xlu0 %803
    %v805 = vsub.f32 %v772, %v783
    %v806 = vsub.f32 %v773, %v786
    %v807 = vsub.f32 %v774, %v789
    %v808 = vsub.f32 %v775, %v792
    %v809 = vsub.f32 %v776, %v795
    %v810 = vsub.f32 %v777, %v798
    %v811 = vsub.f32 %v778, %v801
    %v812 = vsub.f32 %v779, %v804
    %v813 = vmul.f32 %v805, 1.442695
    %v814 = vpow.pop %v813
    %v815 = vmul.f32 %v806, 1.442695
    %v816 = vpow.pop %v815
    %v817 = vmul.f32 %v807, 1.442695
    %v818 = vpow.pop %v817
    %v819 = vmul.f32 %v808, 1.442695
    %v820 = vpow.pop %v819
    %v821 = vmul.f32 %v809, 1.442695
    %v822 = vpow.pop %v821
    %v823 = vmul.f32 %v810, 1.442695
    %v824 = vpow.pop %v823
    %v825 = vmul.f32 %v811, 1.442695
    %v826 = vpow.pop %v825
    %v827 = vmul.f32 %v812, 1.442695
    %v828 = vpow.pop %v827
    %v829 = vsel %vm780, %v814, 0.0
    %830 = vadd.xlane.f32.xlu0 %v829
    %v831 = vpop.xlane.xlu0 %830
    %v832 = vsel %vm780, %v816, 0.0
    %833 = vadd.xlane.f32.xlu0 %v832
    %v834 = vpop.xlane.xlu0 %833
    %v835 = vsel %vm780, %v818, 0.0
    %836 = vadd.xlane.f32.xlu0 %v835
    %v837 = vpop.xlane.xlu0 %836
    %v838 = vsel %vm780, %v820, 0.0
    %839 = vadd.xlane.f32.xlu0 %v838
    %v840 = vpop.xlane.xlu0 %839
    %v841 = vsel %vm780, %v822, 0.0
    %842 = vadd.xlane.f32.xlu0 %v841
    %v843 = vpop.xlane.xlu0 %842
    %v844 = vsel %vm780, %v824, 0.0
    %845 = vadd.xlane.f32.xlu0 %v844
    %v846 = vpop.xlane.xlu0 %845
    %v847 = vsel %vm780, %v826, 0.0
    %848 = vadd.xlane.f32.xlu0 %v847
    %v849 = vpop.xlane.xlu0 %848
    %v850 = vsel %vm780, %v828, 0.0
    %851 = vadd.xlane.f32.xlu0 %v850
    %v852 = vpop.xlane.xlu0 %851
    %v853 = vrcp.pop %v831
    %v854 = vrcp.pop %v834
    %v855 = vrcp.pop %v837
    %v856 = vrcp.pop %v840
    %v857 = vrcp.pop %v843
    %v858 = vrcp.pop %v846
    %v859 = vrcp.pop %v849
    %v860 = vrcp.pop %v852
    %v861 = vmul.f32 %v814, %v853
    %v862 = vmul.f32 %v816, %v854
    %v863 = vmul.f32 %v818, %v855
    %v864 = vmul.f32 %v820, %v856
    %v865 = vmul.f32 %v822, %v857
    %v866 = vmul.f32 %v824, %v858
    %v867 = vmul.f32 %v826, %v859
    %v868 = vmul.f32 %v828, %v860
    %869 = vset.pattern.permute.xlu0 1
    %870 = vperm.xlu0 %869, %v595
    %v871 = vpop.permute.xlu0 %870
    %873 = vset.pattern.permute.xlu0 1
    %874 = vperm.xlu0 %873, %v600
    %v875 = vpop.permute.xlu0 %874
    %877 = vset.pattern.permute.xlu0 1
    %878 = vperm.xlu0 %877, %v605
    %v879 = vpop.permute.xlu0 %878
    %881 = vset.pattern.permute.xlu0 1
    %882 = vperm.xlu0 %881, %v610
    %v883 = vpop.permute.xlu0 %882
    %885 = vset.pattern.permute.xlu0 1
    %886 = vperm.xlu0 %885, %v615
    %v887 = vpop.permute.xlu0 %886
    %889 = vset.pattern.permute.xlu0 1
    %890 = vperm.xlu0 %889, %v620
    %v891 = vpop.permute.xlu0 %890
    %893 = vset.pattern.permute.xlu0 1
    %894 = vperm.xlu0 %893, %v625
    %v895 = vpop.permute.xlu0 %894
    %897 = vset.pattern.permute.xlu0 1
    %898 = vperm.xlu0 %897, %v630
    %v899 = vpop.permute.xlu0 %898
    %v901 = vlaneseq
    %v902 = vshrl.u32 %v901, 7
    %v903 = vsub.s32 1, %v902
    %v904 = vrot.slane %v701, %v903
    %v905 = vadd.f32 %v871, %v904
    %v906 = vadd.f32 %v875, %v904
    %v907 = vadd.f32 %v879, %v904
    %v908 = vadd.f32 %v883, %v904
    %v909 = vadd.f32 %v887, %v904
    %v910 = vadd.f32 %v891, %v904
    %v911 = vadd.f32 %v895, %v904
    %v912 = vadd.f32 %v899, %v904
    %v913 = vmul.f32 %v905, 0.2
    %v914 = vmul.f32 %v906, 0.2
    %v915 = vmul.f32 %v907, 0.2
    %v916 = vmul.f32 %v908, 0.2
    %v917 = vmul.f32 %v909, 0.2
    %v918 = vmul.f32 %v910, 0.2
    %v919 = vmul.f32 %v911, 0.2
    %v920 = vmul.f32 %v912, 0.2
    %v921 = vmax.f32 %v905, %v913
    %v922 = vmax.f32 %v906, %v914
    %v923 = vmax.f32 %v907, %v915
    %v924 = vmax.f32 %v908, %v916
    %v925 = vmax.f32 %v909, %v917
    %v926 = vmax.f32 %v910, %v918
    %v927 = vmax.f32 %v911, %v919
    %v928 = vmax.f32 %v912, %v920
    %v929 = vadd.f32 %v921, %v375
    %v930 = vadd.f32 %v922, %v376
    %v931 = vadd.f32 %v923, %v377
    %v932 = vadd.f32 %v924, %v378
    %v933 = vadd.f32 %v925, %v379
    %v934 = vadd.f32 %v926, %v380
    %v935 = vadd.f32 %v927, %v381
    %v936 = vadd.f32 %v928, %v382
    %v937 = vsel %vm780, %v929, -inf
    %938 = vmax.xlane.f32.xlu0 %v937
    %v939 = vpop.xlane.xlu0 %938
    %v940 = vsel %vm780, %v930, -inf
    %941 = vmax.xlane.f32.xlu0 %v940
    %v942 = vpop.xlane.xlu0 %941
    %v943 = vsel %vm780, %v931, -inf
    %944 = vmax.xlane.f32.xlu0 %v943
    %v945 = vpop.xlane.xlu0 %944
    %v946 = vsel %vm780, %v932, -inf
    %947 = vmax.xlane.f32.xlu0 %v946
    %v948 = vpop.xlane.xlu0 %947
    %v949 = vsel %vm780, %v933, -inf
    %950 = vmax.xlane.f32.xlu0 %v949
    %v951 = vpop.xlane.xlu0 %950
    %v952 = vsel %vm780, %v934, -inf
    %953 = vmax.xlane.f32.xlu0 %v952
    %v954 = vpop.xlane.xlu0 %953
    %v955 = vsel %vm780, %v935, -inf
    %956 = vmax.xlane.f32.xlu0 %v955
    %v957 = vpop.xlane.xlu0 %956
    %v958 = vsel %vm780, %v936, -inf
    %959 = vmax.xlane.f32.xlu0 %v958
    %v960 = vpop.xlane.xlu0 %959
    %v961 = vsub.f32 %v929, %v939
    %v962 = vsub.f32 %v930, %v942
    %v963 = vsub.f32 %v931, %v945
    %v964 = vsub.f32 %v932, %v948
    %v965 = vsub.f32 %v933, %v951
    %v966 = vsub.f32 %v934, %v954
    %v967 = vsub.f32 %v935, %v957
    %v968 = vsub.f32 %v936, %v960
    %v969 = vmul.f32 %v961, 1.442695
    %v970 = vpow.pop %v969
    %v971 = vmul.f32 %v962, 1.442695
    %v972 = vpow.pop %v971
    %v973 = vmul.f32 %v963, 1.442695
    %v974 = vpow.pop %v973
    %v975 = vmul.f32 %v964, 1.442695
    %v976 = vpow.pop %v975
    %v977 = vmul.f32 %v965, 1.442695
    %v978 = vpow.pop %v977
    %v979 = vmul.f32 %v966, 1.442695
    %v980 = vpow.pop %v979
    %v981 = vmul.f32 %v967, 1.442695
    %v982 = vpow.pop %v981
    %v983 = vmul.f32 %v968, 1.442695
    %v984 = vpow.pop %v983
    %v985 = vsel %vm780, %v970, 0.0
    %986 = vadd.xlane.f32.xlu0 %v985
    %v987 = vpop.xlane.xlu0 %986
    %v988 = vsel %vm780, %v972, 0.0
    %989 = vadd.xlane.f32.xlu0 %v988
    %v990 = vpop.xlane.xlu0 %989
    %v991 = vsel %vm780, %v974, 0.0
    %992 = vadd.xlane.f32.xlu0 %v991
    %v993 = vpop.xlane.xlu0 %992
    %v994 = vsel %vm780, %v976, 0.0
    %995 = vadd.xlane.f32.xlu0 %v994
    %v996 = vpop.xlane.xlu0 %995
    %v997 = vsel %vm780, %v978, 0.0
    %998 = vadd.xlane.f32.xlu0 %v997
    %v999 = vpop.xlane.xlu0 %998
    %v1000 = vsel %vm780, %v980, 0.0
    %1001 = vadd.xlane.f32.xlu0 %v1000
    %v1002 = vpop.xlane.xlu0 %1001
    %v1003 = vsel %vm780, %v982, 0.0
    %1004 = vadd.xlane.f32.xlu0 %v1003
    %v1005 = vpop.xlane.xlu0 %1004
    %v1006 = vsel %vm780, %v984, 0.0
    %1007 = vadd.xlane.f32.xlu0 %v1006
    %v1008 = vpop.xlane.xlu0 %1007
    %v1009 = vrcp.pop %v987
    %v1010 = vrcp.pop %v990
    %v1011 = vrcp.pop %v993
    %v1012 = vrcp.pop %v996
    %v1013 = vrcp.pop %v999
    %v1014 = vrcp.pop %v1002
    %v1015 = vrcp.pop %v1005
    %v1016 = vrcp.pop %v1008
    %v1017 = vmul.f32 %v970, %v1009
    %v1018 = vmul.f32 %v972, %v1010
    %v1019 = vmul.f32 %v974, %v1011
    %v1020 = vmul.f32 %v976, %v1012
    %v1021 = vmul.f32 %v978, %v1013
    %v1022 = vmul.f32 %v980, %v1014
    %v1023 = vmul.f32 %v982, %v1015
    %v1024 = vmul.f32 %v984, %v1016
    %v1025 = vld [vmem:[#allocation11] sm:$0x3]
    %1034 = vrot.lane.b32.xlu0 %v1017, 64
    %v1035 = vpop.permute.xlu0 %1034
    %1036 = vrot.lane.b32.xlu0 %v1018, 64
    %v1037 = vpop.permute.xlu0 %1036
    %1038 = vrot.lane.b32.xlu0 %v1019, 64
    %v1039 = vpop.permute.xlu0 %1038
    %1040 = vrot.lane.b32.xlu0 %v1020, 64
    %v1041 = vpop.permute.xlu0 %1040
    %1042 = vrot.lane.b32.xlu0 %v1021, 64
    %v1043 = vpop.permute.xlu0 %1042
    %1044 = vrot.lane.b32.xlu0 %v1022, 64
    %v1045 = vpop.permute.xlu0 %1044
    %1046 = vrot.lane.b32.xlu0 %v1023, 64
    %v1047 = vpop.permute.xlu0 %1046
    %1048 = vrot.lane.b32.xlu0 %v1024, 64
    %v1049 = vpop.permute.xlu0 %1048
    %v1058 = vsel %vm780, %v861, %v1035
    %v1059 = vsel %vm780, %v862, %v1037
    %v1060 = vsel %vm780, %v863, %v1039
    %v1061 = vsel %vm780, %v864, %v1041
    %v1062 = vsel %vm780, %v865, %v1043
    %v1063 = vsel %vm780, %v866, %v1045
    %v1064 = vsel %vm780, %v867, %v1047
    %v1065 = vsel %vm780, %v868, %v1049
    %v1066 = vlaneseq
    %v1067 = vshrl.u32 %v1066, 7
    %v1068 = vsub.s32 0, %v1067
    %v1069 = vrot.slane %v1025, %v1068
    %v1070 = vmul.f32 %v474, %v1069
    %v1071 = vmul.f32 %v479, %v1069
    %v1072 = vmul.f32 %v484, %v1069
    %v1073 = vmul.f32 %v489, %v1069
    %v1074 = vmul.f32 %v494, %v1069
    %v1075 = vmul.f32 %v499, %v1069
    %v1076 = vmul.f32 %v504, %v1069
    %v1077 = vmul.f32 %v509, %v1069
    %v1078 = vlaneseq
    %v1079 = vshrl.u32 %v1078, 7
    %v1080 = vsub.s32 1, %v1079
    %v1081 = vrot.slane %v1025, %v1080
    %v1082 = vmul.f32 %v474, %v1081
    %v1083 = vmul.f32 %v479, %v1081
    %v1084 = vmul.f32 %v484, %v1081
    %v1085 = vmul.f32 %v489, %v1081
    %v1086 = vmul.f32 %v494, %v1081
    %v1087 = vmul.f32 %v499, %v1081
    %v1088 = vmul.f32 %v504, %v1081
    %v1089 = vmul.f32 %v509, %v1081
    %v1090 = vld [vmem:[#allocation13] sm:$0x1]
    %v1092 = vlaneseq
    %v1093 = vshrl.u32 %v1092, 7
    %v1094 = vsub.s32 0, %v1093
    %v1095 = vrot.slane %v1090, %v1094
    %1097 = vmatprep.subr.mxu0 0.0
    %1098 = vmatpush1.msra.mxu0 %v1070
    %1099 = vmatprep.subr.mxu0 0.0
    %1100 = vmatpush1.msra.mxu0 %v1071
    %1101 = vmatprep.subr.mxu0 0.0
    %1102 = vmatpush1.msra.mxu0 %v1072
    %1103 = vmatprep.subr.mxu0 0.0
    %1104 = vmatpush1.msra.mxu0 %v1073
    %1105 = vmatprep.subr.mxu0 0.0
    %1106 = vmatpush1.msra.mxu0 %v1074
    %1107 = vmatprep.subr.mxu0 0.0
    %1108 = vmatpush1.msra.mxu0 %v1075
    %1109 = vmatprep.subr.mxu0 0.0
    %1110 = vmatpush1.msra.mxu0 %v1076
    %1111 = vmatprep.subr.mxu0 0.0
    %1112 = vmatpush1.msra.mxu0 %v1077
    %1113 = vmatprep.subr.mxu0 0.0
    %1114 = vmatpush1.msra.mxu0 %v1082
    %1115 = vmatprep.subr.mxu0 0.0
    %1116 = vmatpush1.msra.mxu0 %v1083
    %1117 = vmatprep.subr.mxu0 0.0
    %1118 = vmatpush1.msra.mxu0 %v1084
    %1119 = vmatprep.subr.mxu0 0.0
    %1120 = vmatpush1.msra.mxu0 %v1085
    %1121 = vmatprep.subr.mxu0 0.0
    %1122 = vmatpush1.msra.mxu0 %v1086
    %1123 = vmatprep.subr.mxu0 0.0
    %1124 = vmatpush1.msra.mxu0 %v1087
    %1125 = vmatprep.subr.mxu0 0.0
    %1126 = vmatpush1.msra.mxu0 %v1088
    %1127 = vmatprep.subr.mxu0 0.0
    %1128 = vmatpush1.msra.mxu0 %v1089
    %1129 = vmatprep.subr.mxu0 0.0
    %1130 = vmatpush1.msra.mxu0 0.0
    %1131 = vmatprep.subr.mxu0 0.0
    %1132 = vmatpush1.msra.mxu0 0.0
    %1133 = vmatprep.subr.mxu0 0.0
    %1134 = vmatpush1.msra.mxu0 0.0
    %1135 = vmatprep.subr.mxu0 0.0
    %1136 = vmatpush1.msra.mxu0 0.0
    %1137 = vmatprep.subr.mxu0 0.0
    %1138 = vmatpush1.msra.mxu0 0.0
    %1139 = vmatprep.subr.mxu0 0.0
    %1140 = vmatpush1.msra.mxu0 0.0
    %1141 = vmatprep.subr.mxu0 0.0
    %1142 = vmatpush1.msra.mxu0 0.0
    %1143 = vmatprep.subr.mxu0 0.0
    %1144 = vmatpush1.msra.mxu0 0.0
    %1145 = vmatprep.subr.mxu0 0.0
    %1146 = vmatpush1.msra.mxu0 0.0
    %1147 = vmatprep.subr.mxu0 0.0
    %1148 = vmatpush1.msra.mxu0 0.0
    %1149 = vmatprep.subr.mxu0 0.0
    %1150 = vmatpush1.msra.mxu0 0.0
    %1151 = vmatprep.subr.mxu0 0.0
    %1152 = vmatpush1.msra.mxu0 0.0
    %1153 = vmatprep.subr.mxu0 0.0
    %1154 = vmatpush1.msra.mxu0 0.0
    %1155 = vmatprep.subr.mxu0 0.0
    %1156 = vmatpush1.msra.mxu0 0.0
    %1157 = vmatprep.subr.mxu0 0.0
    %1158 = vmatpush1.msra.mxu0 0.0
    %1159 = vmatprep.subr.mxu0 0.0
    %1160 = vmatpush1.msra.mxu0 0.0
    %1161 = vmatprep.mubr.f32.mxu0 0.0
    %1162 = vmatmul.mubr.f32.gmra.mrb[0].mxu0 %v1058
    %v1163 = vpop.f32.mrb[0].mxu0
    %v1164 = vadd.f32 %v1095, %v1163
    %v1165 = vpop.f32.mrb[0].mxu0
    %1166 = vmatprep.mubr.f32.mxu0 0.0
    %1167 = vmatmul.mubr.f32.gmra.mrb[0].mxu0 %v1059
    %v1168 = vpop.f32.mrb[0].mxu0
    %v1169 = vadd.f32 %v1095, %v1168
    %v1170 = vpop.f32.mrb[0].mxu0
    %1171 = vmatprep.mubr.f32.mxu0 0.0
    %1172 = vmatmul.mubr.f32.gmra.mrb[0].mxu0 %v1060
    %v1173 = vpop.f32.mrb[0].mxu0
    %v1174 = vadd.f32 %v1095, %v1173
    %v1175 = vpop.f32.mrb[0].mxu0
    %1176 = vmatprep.mubr.f32.mxu0 0.0
    %1177 = vmatmul.mubr.f32.gmra.mrb[0].mxu0 %v1061
    %v1178 = vpop.f32.mrb[0].mxu0
    %v1179 = vadd.f32 %v1095, %v1178
    %v1180 = vpop.f32.mrb[0].mxu0
    %1181 = vmatprep.mubr.f32.mxu0 0.0
    %1182 = vmatmul.mubr.f32.gmra.mrb[0].mxu0 %v1062
    %v1183 = vpop.f32.mrb[0].mxu0
    %v1184 = vadd.f32 %v1095, %v1183
    %v1185 = vpop.f32.mrb[0].mxu0
    %1186 = vmatprep.mubr.f32.mxu0 0.0
    %1187 = vmatmul.mubr.f32.gmra.mrb[0].mxu0 %v1063
    %v1188 = vpop.f32.mrb[0].mxu0
    %v1189 = vadd.f32 %v1095, %v1188
    %v1190 = vpop.f32.mrb[0].mxu0
    %1191 = vmatprep.mubr.f32.mxu0 0.0
    %1192 = vmatmul.mubr.f32.gmra.mrb[0].mxu0 %v1064
    %v1193 = vpop.f32.mrb[0].mxu0
    %v1194 = vadd.f32 %v1095, %v1193
    %v1195 = vpop.f32.mrb[0].mxu0
    %1196 = vmatprep.mubr.f32.mxu0 0.0
    %1197 = vmatmul.mubr.f32.gmra.mrb[0].mxu0 %v1065
    %v1198 = vpop.f32.mrb[0].mxu0
    %v1199 = vadd.f32 %v1095, %v1198
    %v1200 = vpop.f32.mrb[0].mxu0
    %1201 = vdwg.mxu0
    %v1202 = vld [vmem:[#allocation34] sm:$0x1]
    %v1204 = vlaneseq
    %v1205 = vshrl.u32 %v1204, 7
    %v1206 = vsub.s32 0, %v1205
    %v1207 = vrot.slane %v1202, %v1206
    %v1209 = vmul.f32 %v1164, %v1207
    %v1210 = vmul.f32 %v1169, %v1207
    %v1211 = vmul.f32 %v1174, %v1207
    %v1212 = vmul.f32 %v1179, %v1207
    %v1213 = vmul.f32 %v1184, %v1207
    %v1214 = vmul.f32 %v1189, %v1207
    %v1215 = vmul.f32 %v1194, %v1207
    %v1216 = vmul.f32 %v1199, %v1207
    %v1217 = vld [vmem:[#allocation35] sm:$0x1]
    %v1219 = vlaneseq
    %v1220 = vshrl.u32 %v1219, 7
    %v1221 = vsub.s32 0, %v1220
    %v1222 = vrot.slane %v1217, %v1221
    %v1224 = vadd.f32 %v1209, %v1222
    %v1225 = vadd.f32 %v1210, %v1222
    %v1226 = vadd.f32 %v1211, %v1222
    %v1227 = vadd.f32 %v1212, %v1222
    %v1228 = vadd.f32 %v1213, %v1222
    %v1229 = vadd.f32 %v1214, %v1222
    %v1230 = vadd.f32 %v1215, %v1222
    %v1231 = vadd.f32 %v1216, %v1222
    %v1232 = vmax.f32 %v1224, 0.0
    %v1233 = vmax.f32 %v1225, 0.0
    %v1234 = vmax.f32 %v1226, 0.0
    %v1235 = vmax.f32 %v1227, 0.0
    %v1236 = vmax.f32 %v1228, 0.0
    %v1237 = vmax.f32 %v1229, 0.0
    %v1238 = vmax.f32 %v1230, 0.0
    %v1239 = vmax.f32 %v1231, 0.0
    %v1240 = vld [vmem:[#allocation14] sm:$0xff]
    %v1241 = vld [vmem:[#allocation14 + $0x8] sm:$0xff]
    %v1242 = vld [vmem:[#allocation14 + $0x10] sm:$0xff]
    %v1243 = vld [vmem:[#allocation14 + $0x18] sm:$0xff]
    %v1244 = vld [vmem:[#allocation14 + $0x20] sm:$0xff]
    %v1245 = vld [vmem:[#allocation14 + $0x28] sm:$0xff]
    %v1246 = vld [vmem:[#allocation14 + $0x30] sm:$0xff]
    %v1247 = vld [vmem:[#allocation14 + $0x38] sm:$0xff]
    %v1248 = vld [vmem:[#allocation14 + $0x40] sm:$0xff]
    %v1249 = vld [vmem:[#allocation14 + $0x48] sm:$0xff]
    %v1250 = vld [vmem:[#allocation14 + $0x50] sm:$0xff]
    %v1251 = vld [vmem:[#allocation14 + $0x58] sm:$0xff]
    %v1252 = vld [vmem:[#allocation14 + $0x60] sm:$0xff]
    %v1253 = vld [vmem:[#allocation14 + $0x68] sm:$0xff]
    %v1254 = vld [vmem:[#allocation14 + $0x70] sm:$0xff]
    %v1255 = vld [vmem:[#allocation14 + $0x78] sm:$0xff]
    %1256 = vmatprep.subr.mxu0 0.0
    %1257 = vmatpush1.msra.mxu0 %v1240
    %1258 = vmatprep.subr.mxu0 0.0
    %1259 = vmatpush1.msra.mxu0 %v1241
    %1260 = vmatprep.subr.mxu0 0.0
    %1261 = vmatpush1.msra.mxu0 %v1242
    %1262 = vmatprep.subr.mxu0 0.0
    %1263 = vmatpush1.msra.mxu0 %v1243
    %1264 = vmatprep.subr.mxu0 0.0
    %1265 = vmatpush1.msra.mxu0 %v1244
    %1266 = vmatprep.subr.mxu0 0.0
    %1267 = vmatpush1.msra.mxu0 %v1245
    %1268 = vmatprep.subr.mxu0 0.0
    %1269 = vmatpush1.msra.mxu0 %v1246
    %1270 = vmatprep.subr.mxu0 0.0
    %1271 = vmatpush1.msra.mxu0 %v1247
    %1272 = vmatprep.subr.mxu0 0.0
    %1273 = vmatpush1.msra.mxu0 %v1248
    %1274 = vmatprep.subr.mxu0 0.0
    %1275 = vmatpush1.msra.mxu0 %v1249
    %1276 = vmatprep.subr.mxu0 0.0
    %1277 = vmatpush1.msra.mxu0 %v1250
    %1278 = vmatprep.subr.mxu0 0.0
    %1279 = vmatpush1.msra.mxu0 %v1251
    %1280 = vmatprep.subr.mxu0 0.0
    %1281 = vmatpush1.msra.mxu0 %v1252
    %1282 = vmatprep.subr.mxu0 0.0
    %1283 = vmatpush1.msra.mxu0 %v1253
    %1284 = vmatprep.subr.mxu0 0.0
    %1285 = vmatpush1.msra.mxu0 %v1254
    %1286 = vmatprep.subr.mxu0 0.0
    %1287 = vmatpush1.msra.mxu0 %v1255
    %1288 = vmatprep.subr.mxu0 0.0
    %1289 = vmatpush1.msra.mxu0 0.0
    %1290 = vmatprep.subr.mxu0 0.0
    %1291 = vmatpush1.msra.mxu0 0.0
    %1292 = vmatprep.subr.mxu0 0.0
    %1293 = vmatpush1.msra.mxu0 0.0
    %1294 = vmatprep.subr.mxu0 0.0
    %1295 = vmatpush1.msra.mxu0 0.0
    %1296 = vmatprep.subr.mxu0 0.0
    %1297 = vmatpush1.msra.mxu0 0.0
    %1298 = vmatprep.subr.mxu0 0.0
    %1299 = vmatpush1.msra.mxu0 0.0
    %1300 = vmatprep.subr.mxu0 0.0
    %1301 = vmatpush1.msra.mxu0 0.0
    %1302 = vmatprep.subr.mxu0 0.0
    %1303 = vmatpush1.msra.mxu0 0.0
    %1304 = vmatprep.subr.mxu0 0.0
    %1305 = vmatpush1.msra.mxu0 0.0
    %1306 = vmatprep.subr.mxu0 0.0
    %1307 = vmatpush1.msra.mxu0 0.0
    %1308 = vmatprep.subr.mxu0 0.0
    %1309 = vmatpush1.msra.mxu0 0.0
    %1310 = vmatprep.subr.mxu0 0.0
    %1311 = vmatpush1.msra.mxu0 0.0
    %1312 = vmatprep.subr.mxu0 0.0
    %1313 = vmatpush1.msra.mxu0 0.0
    %1314 = vmatprep.subr.mxu0 0.0
    %1315 = vmatpush1.msra.mxu0 0.0
    %1316 = vmatprep.subr.mxu0 0.0
    %1317 = vmatpush1.msra.mxu0 0.0
    %1318 = vmatprep.subr.mxu0 0.0
    %1319 = vmatpush1.msra.mxu0 0.0
    %1320 = vmatprep.mubr.f32.mxu0 0.0
    %1321 = vmatmul.mubr.f32.gmra.mrb[0].mxu0 %v1232
    %v1322 = vpop.f32.mrb[0].mxu0
    %v1323 = vadd.f32 0.0, %v1322
    %v1324 = vpop.f32.mrb[0].mxu0
    %1325 = vmatprep.mubr.f32.mxu0 0.0
    %1326 = vmatmul.mubr.f32.gmra.mrb[0].mxu0 %v1233
    %v1327 = vpop.f32.mrb[0].mxu0
    %v1328 = vadd.f32 0.0, %v1327
    %v1329 = vpop.f32.mrb[0].mxu0
    %1330 = vmatprep.mubr.f32.mxu0 0.0
    %1331 = vmatmul.mubr.f32.gmra.mrb[0].mxu0 %v1234
    %v1332 = vpop.f32.mrb[0].mxu0
    %v1333 = vadd.f32 0.0, %v1332
    %v1334 = vpop.f32.mrb[0].mxu0
    %1335 = vmatprep.mubr.f32.mxu0 0.0
    %1336 = vmatmul.mubr.f32.gmra.mrb[0].mxu0 %v1235
    %v1337 = vpop.f32.mrb[0].mxu0
    %v1338 = vadd.f32 0.0, %v1337
    %v1339 = vpop.f32.mrb[0].mxu0
    %1340 = vmatprep.mubr.f32.mxu0 0.0
    %1341 = vmatmul.mubr.f32.gmra.mrb[0].mxu0 %v1236
    %v1342 = vpop.f32.mrb[0].mxu0
    %v1343 = vadd.f32 0.0, %v1342
    %v1344 = vpop.f32.mrb[0].mxu0
    %1345 = vmatprep.mubr.f32.mxu0 0.0
    %1346 = vmatmul.mubr.f32.gmra.mrb[0].mxu0 %v1237
    %v1347 = vpop.f32.mrb[0].mxu0
    %v1348 = vadd.f32 0.0, %v1347
    %v1349 = vpop.f32.mrb[0].mxu0
    %1350 = vmatprep.mubr.f32.mxu0 0.0
    %1351 = vmatmul.mubr.f32.gmra.mrb[0].mxu0 %v1238
    %v1352 = vpop.f32.mrb[0].mxu0
    %v1353 = vadd.f32 0.0, %v1352
    %v1354 = vpop.f32.mrb[0].mxu0
    %1355 = vmatprep.mubr.f32.mxu0 0.0
    %1356 = vmatmul.mubr.f32.gmra.mrb[0].mxu0 %v1239
    %v1357 = vpop.f32.mrb[0].mxu0
    %v1358 = vadd.f32 0.0, %v1357
    %v1359 = vpop.f32.mrb[0].mxu0
    %1360 = vdwg.mxu0
    %v1361 = vld [vmem:[#allocation16] sm:$0xff]
    %v1362 = vld [vmem:[#allocation16 + $0x8] sm:$0xff]
    %v1363 = vld [vmem:[#allocation16 + $0x10] sm:$0xff]
    %v1364 = vld [vmem:[#allocation16 + $0x18] sm:$0xff]
    %v1365 = vld [vmem:[#allocation16 + $0x20] sm:$0xff]
    %v1366 = vld [vmem:[#allocation16 + $0x28] sm:$0xff]
    %v1367 = vld [vmem:[#allocation16 + $0x30] sm:$0xff]
    %v1368 = vld [vmem:[#allocation16 + $0x38] sm:$0xff]
    %v1369 = vld [vmem:[#allocation16 + $0x40] sm:$0xff]
    %v1370 = vld [vmem:[#allocation16 + $0x48] sm:$0xff]
    %v1371 = vld [vmem:[#allocation16 + $0x50] sm:$0xff]
    %v1372 = vld [vmem:[#allocation16 + $0x58] sm:$0xff]
    %v1373 = vld [vmem:[#allocation16 + $0x60] sm:$0xff]
    %v1374 = vld [vmem:[#allocation16 + $0x68] sm:$0xff]
    %v1375 = vld [vmem:[#allocation16 + $0x70] sm:$0xff]
    %v1376 = vld [vmem:[#allocation16 + $0x78] sm:$0xff]
    %1377 = vmatprep.subr.mxu0 0.0
    %1378 = vmatpush1.msra.mxu0 %v1361
    %1379 = vmatprep.subr.mxu0 0.0
    %1380 = vmatpush1.msra.mxu0 %v1362
    %1381 = vmatprep.subr.mxu0 0.0
    %1382 = vmatpush1.msra.mxu0 %v1363
    %1383 = vmatprep.subr.mxu0 0.0
    %1384 = vmatpush1.msra.mxu0 %v1364
    %1385 = vmatprep.subr.mxu0 0.0
    %1386 = vmatpush1.msra.mxu0 %v1365
    %1387 = vmatprep.subr.mxu0 0.0
    %1388 = vmatpush1.msra.mxu0 %v1366
    %1389 = vmatprep.subr.mxu0 0.0
    %1390 = vmatpush1.msra.mxu0 %v1367
    %1391 = vmatprep.subr.mxu0 0.0
    %1392 = vmatpush1.msra.mxu0 %v1368
    %1393 = vmatprep.subr.mxu0 0.0
    %1394 = vmatpush1.msra.mxu0 %v1369
    %1395 = vmatprep.subr.mxu0 0.0
    %1396 = vmatpush1.msra.mxu0 %v1370
    %1397 = vmatprep.subr.mxu0 0.0
    %1398 = vmatpush1.msra.mxu0 %v1371
    %1399 = vmatprep.subr.mxu0 0.0
    %1400 = vmatpush1.msra.mxu0 %v1372
    %1401 = vmatprep.subr.mxu0 0.0
    %1402 = vmatpush1.msra.mxu0 %v1373
    %1403 = vmatprep.subr.mxu0 0.0
    %1404 = vmatpush1.msra.mxu0 %v1374
    %1405 = vmatprep.subr.mxu0 0.0
    %1406 = vmatpush1.msra.mxu0 %v1375
    %1407 = vmatprep.subr.mxu0 0.0
    %1408 = vmatpush1.msra.mxu0 %v1376
    %1409 = vmatprep.subr.mxu0 0.0
    %1410 = vmatpush1.msra.mxu0 0.0
    %1411 = vmatprep.subr.mxu0 0.0
    %1412 = vmatpush1.msra.mxu0 0.0
    %1413 = vmatprep.subr.mxu0 0.0
    %1414 = vmatpush1.msra.mxu0 0.0
    %1415 = vmatprep.subr.mxu0 0.0
    %1416 = vmatpush1.msra.mxu0 0.0
    %1417 = vmatprep.subr.mxu0 0.0
    %1418 = vmatpush1.msra.mxu0 0.0
    %1419 = vmatprep.subr.mxu0 0.0
    %1420 = vmatpush1.msra.mxu0 0.0
    %1421 = vmatprep.subr.mxu0 0.0
    %1422 = vmatpush1.msra.mxu0 0.0
    %1423 = vmatprep.subr.mxu0 0.0
    %1424 = vmatpush1.msra.mxu0 0.0
    %1425 = vmatprep.subr.mxu0 0.0
    %1426 = vmatpush1.msra.mxu0 0.0
    %1427 = vmatprep.subr.mxu0 0.0
    %1428 = vmatpush1.msra.mxu0 0.0
    %1429 = vmatprep.subr.mxu0 0.0
    %1430 = vmatpush1.msra.mxu0 0.0
    %1431 = vmatprep.subr.mxu0 0.0
    %1432 = vmatpush1.msra.mxu0 0.0
    %1433 = vmatprep.subr.mxu0 0.0
    %1434 = vmatpush1.msra.mxu0 0.0
    %1435 = vmatprep.subr.mxu0 0.0
    %1436 = vmatpush1.msra.mxu0 0.0
    %1437 = vmatprep.subr.mxu0 0.0
    %1438 = vmatpush1.msra.mxu0 0.0
    %1439 = vmatprep.subr.mxu0 0.0
    %1440 = vmatpush1.msra.mxu0 0.0
    %1441 = vmatprep.mubr.f32.mxu0 0.0
    %1442 = vmatmul.mubr.f32.gmra.mrb[0].mxu0 %v1323
    %v1443 = vpop.f32.mrb[0].mxu0
    %v1444 = vadd.f32 0.0, %v1443
    %v1445 = vpop.f32.mrb[0].mxu0
    %1446 = vmatprep.mubr.f32.mxu0 0.0
    %1447 = vmatmul.mubr.f32.gmra.mrb[0].mxu0 %v1328
    %v1448 = vpop.f32.mrb[0].mxu0
    %v1449 = vadd.f32 0.0, %v1448
    %v1450 = vpop.f32.mrb[0].mxu0
    %1451 = vmatprep.mubr.f32.mxu0 0.0
    %1452 = vmatmul.mubr.f32.gmra.mrb[0].mxu0 %v1333
    %v1453 = vpop.f32.mrb[0].mxu0
    %v1454 = vadd.f32 0.0, %v1453
    %v1455 = vpop.f32.mrb[0].mxu0
    %1456 = vmatprep.mubr.f32.mxu0 0.0
    %1457 = vmatmul.mubr.f32.gmra.mrb[0].mxu0 %v1338
    %v1458 = vpop.f32.mrb[0].mxu0
    %v1459 = vadd.f32 0.0, %v1458
    %v1460 = vpop.f32.mrb[0].mxu0
    %1461 = vmatprep.mubr.f32.mxu0 0.0
    %1462 = vmatmul.mubr.f32.gmra.mrb[0].mxu0 %v1343
    %v1463 = vpop.f32.mrb[0].mxu0
    %v1464 = vadd.f32 0.0, %v1463
    %v1465 = vpop.f32.mrb[0].mxu0
    %1466 = vmatprep.mubr.f32.mxu0 0.0
    %1467 = vmatmul.mubr.f32.gmra.mrb[0].mxu0 %v1348
    %v1468 = vpop.f32.mrb[0].mxu0
    %v1469 = vadd.f32 0.0, %v1468
    %v1470 = vpop.f32.mrb[0].mxu0
    %1471 = vmatprep.mubr.f32.mxu0 0.0
    %1472 = vmatmul.mubr.f32.gmra.mrb[0].mxu0 %v1353
    %v1473 = vpop.f32.mrb[0].mxu0
    %v1474 = vadd.f32 0.0, %v1473
    %v1475 = vpop.f32.mrb[0].mxu0
    %1476 = vmatprep.mubr.f32.mxu0 0.0
    %1477 = vmatmul.mubr.f32.gmra.mrb[0].mxu0 %v1358
    %v1478 = vpop.f32.mrb[0].mxu0
    %v1479 = vadd.f32 0.0, %v1478
    %v1480 = vpop.f32.mrb[0].mxu0
    %1481 = vdwg.mxu0
    %v1482 = vld [vmem:[#allocation17] sm:$0x3]
    %1483 = vmatprep.subr.mxu0 0.0
    %1484 = vmatpush1.xpose.msra.mxu0 %v1323
    %1485 = vmatprep.subr.mxu0 0.0
    %1486 = vmatpush1.xpose.msra.mxu0 %v1328
    %1487 = vmatprep.subr.mxu0 0.0
    %1488 = vmatpush1.xpose.msra.mxu0 %v1333
    %1489 = vmatprep.subr.mxu0 0.0
    %1490 = vmatpush1.xpose.msra.mxu0 %v1338
    %1491 = vmatprep.subr.mxu0 0.0
    %1492 = vmatpush1.xpose.msra.mxu0 %v1343
    %1493 = vmatprep.subr.mxu0 0.0
    %1494 = vmatpush1.xpose.msra.mxu0 %v1348
    %1495 = vmatprep.subr.mxu0 0.0
    %1496 = vmatpush1.xpose.msra.mxu0 %v1353
    %1497 = vmatprep.subr.mxu0 0.0
    %1498 = vmatpush1.xpose.msra.mxu0 %v1358
    %1499 = vmatprep.subr.mxu0 0.0
    %1500 = vmatpush1.xpose.msra.mxu0 0.0
    %1501 = vmatprep.subr.mxu0 0.0
    %1502 = vmatpush1.xpose.msra.mxu0 0.0
    %1503 = vmatprep.subr.mxu0 0.0
    %1504 = vmatpush1.xpose.msra.mxu0 0.0
    %1505 = vmatprep.subr.mxu0 0.0
    %1506 = vmatpush1.xpose.msra.mxu0 0.0
    %1507 = vmatprep.subr.mxu0 0.0
    %1508 = vmatpush1.xpose.msra.mxu0 0.0
    %1509 = vmatprep.subr.mxu0 0.0
    %1510 = vmatpush1.xpose.msra.mxu0 0.0
    %1511 = vmatprep.subr.mxu0 0.0
    %1512 = vmatpush1.xpose.msra.mxu0 0.0
    %1513 = vmatprep.subr.mxu0 0.0
    %1514 = vmatpush1.xpose.msra.mxu0 0.0
    %1515 = vmatprep.subr.mxu0 0.0
    %1516 = vmatpush1.xpose.msra.mxu0 0.0
    %1517 = vmatprep.subr.mxu0 0.0
    %1518 = vmatpush1.xpose.msra.mxu0 0.0
    %1519 = vmatprep.subr.mxu0 0.0
    %1520 = vmatpush1.xpose.msra.mxu0 0.0
    %1521 = vmatprep.subr.mxu0 0.0
    %1522 = vmatpush1.xpose.msra.mxu0 0.0
    %1523 = vmatprep.subr.mxu0 0.0
    %1524 = vmatpush1.xpose.msra.mxu0 0.0
    %1525 = vmatprep.subr.mxu0 0.0
    %1526 = vmatpush1.xpose.msra.mxu0 0.0
    %1527 = vmatprep.subr.mxu0 0.0
    %1528 = vmatpush1.xpose.msra.mxu0 0.0
    %1529 = vmatprep.subr.mxu0 0.0
    %1530 = vmatpush1.xpose.msra.mxu0 0.0
    %1531 = vmatprep.subr.mxu0 0.0
    %1532 = vmatpush1.xpose.msra.mxu0 0.0
    %1533 = vmatprep.subr.mxu0 0.0
    %1534 = vmatpush1.xpose.msra.mxu0 0.0
    %1535 = vmatprep.subr.mxu0 0.0
    %1536 = vmatpush1.xpose.msra.mxu0 0.0
    %1537 = vmatprep.subr.mxu0 0.0
    %1538 = vmatpush1.xpose.msra.mxu0 0.0
    %1539 = vmatprep.subr.mxu0 0.0
    %1540 = vmatpush1.xpose.msra.mxu0 0.0
    %1541 = vmatprep.subr.mxu0 0.0
    %1542 = vmatpush1.xpose.msra.mxu0 0.0
    %1543 = vmatprep.subr.mxu0 0.0
    %1544 = vmatpush1.xpose.msra.mxu0 0.0
    %1545 = vmatprep.subr.mxu0 0.0
    %1546 = vmatpush1.xpose.msra.mxu0 0.0
    %1547 = vmatprep.mubr.f32.mxu0 0.0
    %1548 = vmatmul.mubr.f32.gmra.mrb[0].mxu0 %v1482
    %v1549 = vpop.f32.mrb[0].mxu0
    %v1550 = vadd.f32 0.0, %v1549
    %v1551 = vpop.f32.mrb[0].mxu0
    %1552 = vdwg.mxu0
    %1554 = vset.pattern.permute.xlu0 0
    %1555 = vperm.xlu0 %1554, %v1444
    %v1556 = vpop.permute.xlu0 %1555
    %1559 = vset.pattern.permute.xlu0 0
    %1560 = vperm.xlu0 %1559, %v1449
    %v1561 = vpop.permute.xlu0 %1560
    %1564 = vset.pattern.permute.xlu0 0
    %1565 = vperm.xlu0 %1564, %v1454
    %v1566 = vpop.permute.xlu0 %1565
    %1569 = vset.pattern.permute.xlu0 0
    %1570 = vperm.xlu0 %1569, %v1459
    %v1571 = vpop.permute.xlu0 %1570
    %1574 = vset.pattern.permute.xlu0 0
    %1575 = vperm.xlu0 %1574, %v1464
    %v1576 = vpop.permute.xlu0 %1575
    %1579 = vset.pattern.permute.xlu0 0
    %1580 = vperm.xlu0 %1579, %v1469
    %v1581 = vpop.permute.xlu0 %1580
    %1584 = vset.pattern.permute.xlu0 0
    %1585 = vperm.xlu0 %1584, %v1474
    %v1586 = vpop.permute.xlu0 %1585
    %1589 = vset.pattern.permute.xlu0 0
    %1590 = vperm.xlu0 %1589, %v1479
    %v1591 = vpop.permute.xlu0 %1590
    %v1593 = vlaneseq
    %v1594 = vshrl.u32 %v1593, 7
    %v1595 = vsub.s32 0, %v1594
    %v1596 = vrot.slane %v1550, %v1595
    %v1597 = vadd.f32 %v1556, %v1596
    %v1598 = vadd.f32 %v1561, %v1596
    %v1599 = vadd.f32 %v1566, %v1596
    %v1600 = vadd.f32 %v1571, %v1596
    %v1601 = vadd.f32 %v1576, %v1596
    %v1602 = vadd.f32 %v1581, %v1596
    %v1603 = vadd.f32 %v1586, %v1596
    %v1604 = vadd.f32 %v1591, %v1596
    %v1605 = vmul.f32 %v1597, 0.2
    %v1606 = vmul.f32 %v1598, 0.2
    %v1607 = vmul.f32 %v1599, 0.2
    %v1608 = vmul.f32 %v1600, 0.2
    %v1609 = vmul.f32 %v1601, 0.2
    %v1610 = vmul.f32 %v1602, 0.2
    %v1611 = vmul.f32 %v1603, 0.2
    %v1612 = vmul.f32 %v1604, 0.2
    %v1613 = vmax.f32 %v1597, %v1605
    %v1614 = vmax.f32 %v1598, %v1606
    %v1615 = vmax.f32 %v1599, %v1607
    %v1616 = vmax.f32 %v1600, %v1608
    %v1617 = vmax.f32 %v1601, %v1609
    %v1618 = vmax.f32 %v1602, %v1610
    %v1619 = vmax.f32 %v1603, %v1611
    %v1620 = vmax.f32 %v1604, %v1612
    %v1621 = vadd.f32 %v1613, %v375
    %v1622 = vadd.f32 %v1614, %v376
    %v1623 = vadd.f32 %v1615, %v377
    %v1624 = vadd.f32 %v1616, %v378
    %v1625 = vadd.f32 %v1617, %v379
    %v1626 = vadd.f32 %v1618, %v380
    %v1627 = vadd.f32 %v1619, %v381
    %v1628 = vadd.f32 %v1620, %v382
    %v1629 = vsel %vm780, %v1621, -inf
    %1630 = vmax.xlane.f32.xlu0 %v1629
    %v1631 = vpop.xlane.xlu0 %1630
    %v1632 = vsel %vm780, %v1622, -inf
    %1633 = vmax.xlane.f32.xlu0 %v1632
    %v1634 = vpop.xlane.xlu0 %1633
    %v1635 = vsel %vm780, %v1623, -inf
    %1636 = vmax.xlane.f32.xlu0 %v1635
    %v1637 = vpop.xlane.xlu0 %1636
    %v1638 = vsel %vm780, %v1624, -inf
    %1639 = vmax.xlane.f32.xlu0 %v1638
    %v1640 = vpop.xlane.xlu0 %1639
    %v1641 = vsel %vm780, %v1625, -inf
    %1642 = vmax.xlane.f32.xlu0 %v1641
    %v1643 = vpop.xlane.xlu0 %1642
    %v1644 = vsel %vm780, %v1626, -inf
    %1645 = vmax.xlane.f32.xlu0 %v1644
    %v1646 = vpop.xlane.xlu0 %1645
    %v1647 = vsel %vm780, %v1627, -inf
    %1648 = vmax.xlane.f32.xlu0 %v1647
    %v1649 = vpop.xlane.xlu0 %1648
    %v1650 = vsel %vm780, %v1628, -inf
    %1651 = vmax.xlane.f32.xlu0 %v1650
    %v1652 = vpop.xlane.xlu0 %1651
    %v1653 = vsub.f32 %v1621, %v1631
    %v1654 = vsub.f32 %v1622, %v1634
    %v1655 = vsub.f32 %v1623, %v1637
    %v1656 = vsub.f32 %v1624, %v1640
    %v1657 = vsub.f32 %v1625, %v1643
    %v1658 = vsub.f32 %v1626, %v1646
    %v1659 = vsub.f32 %v1627, %v1649
    %v1660 = vsub.f32 %v1628, %v1652
    %v1661 = vmul.f32 %v1653, 1.442695
    %v1662 = vpow.pop %v1661
    %v1663 = vmul.f32 %v1654, 1.442695
    %v1664 = vpow.pop %v1663
    %v1665 = vmul.f32 %v1655, 1.442695
    %v1666 = vpow.pop %v1665
    %v1667 = vmul.f32 %v1656, 1.442695
    %v1668 = vpow.pop %v1667
    %v1669 = vmul.f32 %v1657, 1.442695
    %v1670 = vpow.pop %v1669
    %v1671 = vmul.f32 %v1658, 1.442695
    %v1672 = vpow.pop %v1671
    %v1673 = vmul.f32 %v1659, 1.442695
    %v1674 = vpow.pop %v1673
    %v1675 = vmul.f32 %v1660, 1.442695
    %v1676 = vpow.pop %v1675
    %v1677 = vsel %vm780, %v1662, 0.0
    %1678 = vadd.xlane.f32.xlu0 %v1677
    %v1679 = vpop.xlane.xlu0 %1678
    %v1680 = vsel %vm780, %v1664, 0.0
    %1681 = vadd.xlane.f32.xlu0 %v1680
    %v1682 = vpop.xlane.xlu0 %1681
    %v1683 = vsel %vm780, %v1666, 0.0
    %1684 = vadd.xlane.f32.xlu0 %v1683
    %v1685 = vpop.xlane.xlu0 %1684
    %v1686 = vsel %vm780, %v1668, 0.0
    %1687 = vadd.xlane.f32.xlu0 %v1686
    %v1688 = vpop.xlane.xlu0 %1687
    %v1689 = vsel %vm780, %v1670, 0.0
    %1690 = vadd.xlane.f32.xlu0 %v1689
    %v1691 = vpop.xlane.xlu0 %1690
    %v1692 = vsel %vm780, %v1672, 0.0
    %1693 = vadd.xlane.f32.xlu0 %v1692
    %v1694 = vpop.xlane.xlu0 %1693
    %v1695 = vsel %vm780, %v1674, 0.0
    %1696 = vadd.xlane.f32.xlu0 %v1695
    %v1697 = vpop.xlane.xlu0 %1696
    %v1698 = vsel %vm780, %v1676, 0.0
    %1699 = vadd.xlane.f32.xlu0 %v1698
    %v1700 = vpop.xlane.xlu0 %1699
    %v1701 = vrcp.pop %v1679
    %v1702 = vrcp.pop %v1682
    %v1703 = vrcp.pop %v1685
    %v1704 = vrcp.pop %v1688
    %v1705 = vrcp.pop %v1691
    %v1706 = vrcp.pop %v1694
    %v1707 = vrcp.pop %v1697
    %v1708 = vrcp.pop %v1700
    %v1709 = vmul.f32 %v1662, %v1701
    %v1710 = vmul.f32 %v1664, %v1702
    %v1711 = vmul.f32 %v1666, %v1703
    %v1712 = vmul.f32 %v1668, %v1704
    %v1713 = vmul.f32 %v1670, %v1705
    %v1714 = vmul.f32 %v1672, %v1706
    %v1715 = vmul.f32 %v1674, %v1707
    %v1716 = vmul.f32 %v1676, %v1708
    %1717 = vset.pattern.permute.xlu0 1
    %1718 = vperm.xlu0 %1717, %v1444
    %v1719 = vpop.permute.xlu0 %1718
    %1721 = vset.pattern.permute.xlu0 1
    %1722 = vperm.xlu0 %1721, %v1449
    %v1723 = vpop.permute.xlu0 %1722
    %1725 = vset.pattern.permute.xlu0 1
    %1726 = vperm.xlu0 %1725, %v1454
    %v1727 = vpop.permute.xlu0 %1726
    %1729 = vset.pattern.permute.xlu0 1
    %1730 = vperm.xlu0 %1729, %v1459
    %v1731 = vpop.permute.xlu0 %1730
    %1733 = vset.pattern.permute.xlu0 1
    %1734 = vperm.xlu0 %1733, %v1464
    %v1735 = vpop.permute.xlu0 %1734
    %1737 = vset.pattern.permute.xlu0 1
    %1738 = vperm.xlu0 %1737, %v1469
    %v1739 = vpop.permute.xlu0 %1738
    %1741 = vset.pattern.permute.xlu0 1
    %1742 = vperm.xlu0 %1741, %v1474
    %v1743 = vpop.permute.xlu0 %1742
    %1745 = vset.pattern.permute.xlu0 1
    %1746 = vperm.xlu0 %1745, %v1479
    %v1747 = vpop.permute.xlu0 %1746
    %v1749 = vlaneseq
    %v1750 = vshrl.u32 %v1749, 7
    %v1751 = vsub.s32 1, %v1750
    %v1752 = vrot.slane %v1550, %v1751
    %v1753 = vadd.f32 %v1719, %v1752
    %v1754 = vadd.f32 %v1723, %v1752
    %v1755 = vadd.f32 %v1727, %v1752
    %v1756 = vadd.f32 %v1731, %v1752
    %v1757 = vadd.f32 %v1735, %v1752
    %v1758 = vadd.f32 %v1739, %v1752
    %v1759 = vadd.f32 %v1743, %v1752
    %v1760 = vadd.f32 %v1747, %v1752
    %v1761 = vmul.f32 %v1753, 0.2
    %v1762 = vmul.f32 %v1754, 0.2
    %v1763 = vmul.f32 %v1755, 0.2
    %v1764 = vmul.f32 %v1756, 0.2
    %v1765 = vmul.f32 %v1757, 0.2
    %v1766 = vmul.f32 %v1758, 0.2
    %v1767 = vmul.f32 %v1759, 0.2
    %v1768 = vmul.f32 %v1760, 0.2
    %v1769 = vmax.f32 %v1753, %v1761
    %v1770 = vmax.f32 %v1754, %v1762
    %v1771 = vmax.f32 %v1755, %v1763
    %v1772 = vmax.f32 %v1756, %v1764
    %v1773 = vmax.f32 %v1757, %v1765
    %v1774 = vmax.f32 %v1758, %v1766
    %v1775 = vmax.f32 %v1759, %v1767
    %v1776 = vmax.f32 %v1760, %v1768
    %v1777 = vadd.f32 %v1769, %v375
    %v1778 = vadd.f32 %v1770, %v376
    %v1779 = vadd.f32 %v1771, %v377
    %v1780 = vadd.f32 %v1772, %v378
    %v1781 = vadd.f32 %v1773, %v379
    %v1782 = vadd.f32 %v1774, %v380
    %v1783 = vadd.f32 %v1775, %v381
    %v1784 = vadd.f32 %v1776, %v382
    %v1785 = vsel %vm780, %v1777, -inf
    %1786 = vmax.xlane.f32.xlu0 %v1785
    %v1787 = vpop.xlane.xlu0 %1786
    %v1788 = vsel %vm780, %v1778, -inf
    %1789 = vmax.xlane.f32.xlu0 %v1788
    %v1790 = vpop.xlane.xlu0 %1789
    %v1791 = vsel %vm780, %v1779, -inf
    %1792 = vmax.xlane.f32.xlu0 %v1791
    %v1793 = vpop.xlane.xlu0 %1792
    %v1794 = vsel %vm780, %v1780, -inf
    %1795 = vmax.xlane.f32.xlu0 %v1794
    %v1796 = vpop.xlane.xlu0 %1795
    %v1797 = vsel %vm780, %v1781, -inf
    %1798 = vmax.xlane.f32.xlu0 %v1797
    %v1799 = vpop.xlane.xlu0 %1798
    %v1800 = vsel %vm780, %v1782, -inf
    %1801 = vmax.xlane.f32.xlu0 %v1800
    %v1802 = vpop.xlane.xlu0 %1801
    %v1803 = vsel %vm780, %v1783, -inf
    %1804 = vmax.xlane.f32.xlu0 %v1803
    %v1805 = vpop.xlane.xlu0 %1804
    %v1806 = vsel %vm780, %v1784, -inf
    %1807 = vmax.xlane.f32.xlu0 %v1806
    %v1808 = vpop.xlane.xlu0 %1807
    %v1809 = vsub.f32 %v1777, %v1787
    %v1810 = vsub.f32 %v1778, %v1790
    %v1811 = vsub.f32 %v1779, %v1793
    %v1812 = vsub.f32 %v1780, %v1796
    %v1813 = vsub.f32 %v1781, %v1799
    %v1814 = vsub.f32 %v1782, %v1802
    %v1815 = vsub.f32 %v1783, %v1805
    %v1816 = vsub.f32 %v1784, %v1808
    %v1817 = vmul.f32 %v1809, 1.442695
    %v1818 = vpow.pop %v1817
    %v1819 = vmul.f32 %v1810, 1.442695
    %v1820 = vpow.pop %v1819
    %v1821 = vmul.f32 %v1811, 1.442695
    %v1822 = vpow.pop %v1821
    %v1823 = vmul.f32 %v1812, 1.442695
    %v1824 = vpow.pop %v1823
    %v1825 = vmul.f32 %v1813, 1.442695
    %v1826 = vpow.pop %v1825
    %v1827 = vmul.f32 %v1814, 1.442695
    %v1828 = vpow.pop %v1827
    %v1829 = vmul.f32 %v1815, 1.442695
    %v1830 = vpow.pop %v1829
    %v1831 = vmul.f32 %v1816, 1.442695
    %v1832 = vpow.pop %v1831
    %v1833 = vsel %vm780, %v1818, 0.0
    %1834 = vadd.xlane.f32.xlu0 %v1833
    %v1835 = vpop.xlane.xlu0 %1834
    %v1836 = vsel %vm780, %v1820, 0.0
    %1837 = vadd.xlane.f32.xlu0 %v1836
    %v1838 = vpop.xlane.xlu0 %1837
    %v1839 = vsel %vm780, %v1822, 0.0
    %1840 = vadd.xlane.f32.xlu0 %v1839
    %v1841 = vpop.xlane.xlu0 %1840
    %v1842 = vsel %vm780, %v1824, 0.0
    %1843 = vadd.xlane.f32.xlu0 %v1842
    %v1844 = vpop.xlane.xlu0 %1843
    %v1845 = vsel %vm780, %v1826, 0.0
    %1846 = vadd.xlane.f32.xlu0 %v1845
    %v1847 = vpop.xlane.xlu0 %1846
    %v1848 = vsel %vm780, %v1828, 0.0
    %1849 = vadd.xlane.f32.xlu0 %v1848
    %v1850 = vpop.xlane.xlu0 %1849
    %v1851 = vsel %vm780, %v1830, 0.0
    %1852 = vadd.xlane.f32.xlu0 %v1851
    %v1853 = vpop.xlane.xlu0 %1852
    %v1854 = vsel %vm780, %v1832, 0.0
    %1855 = vadd.xlane.f32.xlu0 %v1854
    %v1856 = vpop.xlane.xlu0 %1855
    %v1857 = vrcp.pop %v1835
    %v1858 = vrcp.pop %v1838
    %v1859 = vrcp.pop %v1841
    %v1860 = vrcp.pop %v1844
    %v1861 = vrcp.pop %v1847
    %v1862 = vrcp.pop %v1850
    %v1863 = vrcp.pop %v1853
    %v1864 = vrcp.pop %v1856
    %v1865 = vmul.f32 %v1818, %v1857
    %v1866 = vmul.f32 %v1820, %v1858
    %v1867 = vmul.f32 %v1822, %v1859
    %v1868 = vmul.f32 %v1824, %v1860
    %v1869 = vmul.f32 %v1826, %v1861
    %v1870 = vmul.f32 %v1828, %v1862
    %v1871 = vmul.f32 %v1830, %v1863
    %v1872 = vmul.f32 %v1832, %v1864
    %v1873 = vld [vmem:[#allocation19] sm:$0x3]
    %1882 = vrot.lane.b32.xlu0 %v1865, 64
    %v1883 = vpop.permute.xlu0 %1882
    %1884 = vrot.lane.b32.xlu0 %v1866, 64
    %v1885 = vpop.permute.xlu0 %1884
    %1886 = vrot.lane.b32.xlu0 %v1867, 64
    %v1887 = vpop.permute.xlu0 %1886
    %1888 = vrot.lane.b32.xlu0 %v1868, 64
    %v1889 = vpop.permute.xlu0 %1888
    %1890 = vrot.lane.b32.xlu0 %v1869, 64
    %v1891 = vpop.permute.xlu0 %1890
    %1892 = vrot.lane.b32.xlu0 %v1870, 64
    %v1893 = vpop.permute.xlu0 %1892
    %1894 = vrot.lane.b32.xlu0 %v1871, 64
    %v1895 = vpop.permute.xlu0 %1894
    %1896 = vrot.lane.b32.xlu0 %v1872, 64
    %v1897 = vpop.permute.xlu0 %1896
    %v1906 = vsel %vm780, %v1709, %v1883
    %v1907 = vsel %vm780, %v1710, %v1885
    %v1908 = vsel %vm780, %v1711, %v1887
    %v1909 = vsel %vm780, %v1712, %v1889
    %v1910 = vsel %vm780, %v1713, %v1891
    %v1911 = vsel %vm780, %v1714, %v1893
    %v1912 = vsel %vm780, %v1715, %v1895
    %v1913 = vsel %vm780, %v1716, %v1897
    %v1914 = vlaneseq
    %v1915 = vshrl.u32 %v1914, 7
    %v1916 = vsub.s32 0, %v1915
    %v1917 = vrot.slane %v1873, %v1916
    %v1918 = vmul.f32 %v1323, %v1917
    %v1919 = vmul.f32 %v1328, %v1917
    %v1920 = vmul.f32 %v1333, %v1917
    %v1921 = vmul.f32 %v1338, %v1917
    %v1922 = vmul.f32 %v1343, %v1917
    %v1923 = vmul.f32 %v1348, %v1917
    %v1924 = vmul.f32 %v1353, %v1917
    %v1925 = vmul.f32 %v1358, %v1917
    %v1926 = vlaneseq
    %v1927 = vshrl.u32 %v1926, 7
    %v1928 = vsub.s32 1, %v1927
    %v1929 = vrot.slane %v1873, %v1928
    %v1930 = vmul.f32 %v1323, %v1929
    %v1931 = vmul.f32 %v1328, %v1929
    %v1932 = vmul.f32 %v1333, %v1929
    %v1933 = vmul.f32 %v1338, %v1929
    %v1934 = vmul.f32 %v1343, %v1929
    %v1935 = vmul.f32 %v1348, %v1929
    %v1936 = vmul.f32 %v1353, %v1929
    %v1937 = vmul.f32 %v1358, %v1929
    %1938 = vmatprep.subr.mxu0 0.0
    %1939 = vmatpush1.msra.mxu0 %v1918
    %1940 = vmatprep.subr.mxu0 0.0
    %1941 = vmatpush1.msra.mxu0 %v1919
    %1942 = vmatprep.subr.mxu0 0.0
    %1943 = vmatpush1.msra.mxu0 %v1920
    %1944 = vmatprep.subr.mxu0 0.0
    %1945 = vmatpush1.msra.mxu0 %v1921
    %1946 = vmatprep.subr.mxu0 0.0
    %1947 = vmatpush1.msra.mxu0 %v1922
    %1948 = vmatprep.subr.mxu0 0.0
    %1949 = vmatpush1.msra.mxu0 %v1923
    %1950 = vmatprep.subr.mxu0 0.0
    %1951 = vmatpush1.msra.mxu0 %v1924
    %1952 = vmatprep.subr.mxu0 0.0
    %1953 = vmatpush1.msra.mxu0 %v1925
    %1954 = vmatprep.subr.mxu0 0.0
    %1955 = vmatpush1.msra.mxu0 %v1930
    %1956 = vmatprep.subr.mxu0 0.0
    %1957 = vmatpush1.msra.mxu0 %v1931
    %1958 = vmatprep.subr.mxu0 0.0
    %1959 = vmatpush1.msra.mxu0 %v1932
    %1960 = vmatprep.subr.mxu0 0.0
    %1961 = vmatpush1.msra.mxu0 %v1933
    %1962 = vmatprep.subr.mxu0 0.0
    %1963 = vmatpush1.msra.mxu0 %v1934
    %1964 = vmatprep.subr.mxu0 0.0
    %1965 = vmatpush1.msra.mxu0 %v1935
    %1966 = vmatprep.subr.mxu0 0.0
    %1967 = vmatpush1.msra.mxu0 %v1936
    %1968 = vmatprep.subr.mxu0 0.0
    %1969 = vmatpush1.msra.mxu0 %v1937
    %1970 = vmatprep.subr.mxu0 0.0
    %1971 = vmatpush1.msra.mxu0 0.0
    %1972 = vmatprep.subr.mxu0 0.0
    %1973 = vmatpush1.msra.mxu0 0.0
    %1974 = vmatprep.subr.mxu0 0.0
    %1975 = vmatpush1.msra.mxu0 0.0
    %1976 = vmatprep.subr.mxu0 0.0
    %1977 = vmatpush1.msra.mxu0 0.0
    %1978 = vmatprep.subr.mxu0 0.0
    %1979 = vmatpush1.msra.mxu0 0.0
    %1980 = vmatprep.subr.mxu0 0.0
    %1981 = vmatpush1.msra.mxu0 0.0
    %1982 = vmatprep.subr.mxu0 0.0
    %1983 = vmatpush1.msra.mxu0 0.0
    %1984 = vmatprep.subr.mxu0 0.0
    %1985 = vmatpush1.msra.mxu0 0.0
    %1986 = vmatprep.subr.mxu0 0.0
    %1987 = vmatpush1.msra.mxu0 0.0
    %1988 = vmatprep.subr.mxu0 0.0
    %1989 = vmatpush1.msra.mxu0 0.0
    %1990 = vmatprep.subr.mxu0 0.0
    %1991 = vmatpush1.msra.mxu0 0.0
    %1992 = vmatprep.subr.mxu0 0.0
    %1993 = vmatpush1.msra.mxu0 0.0
    %1994 = vmatprep.subr.mxu0 0.0
    %1995 = vmatpush1.msra.mxu0 0.0
    %1996 = vmatprep.subr.mxu0 0.0
    %1997 = vmatpush1.msra.mxu0 0.0
    %1998 = vmatprep.subr.mxu0 0.0
    %1999 = vmatpush1.msra.mxu0 0.0
    %2000 = vmatprep.subr.mxu0 0.0
    %2001 = vmatpush1.msra.mxu0 0.0
    %2002 = vmatprep.mubr.f32.mxu0 0.0
    %2003 = vmatmul.mubr.f32.gmra.mrb[0].mxu0 %v1906
    %v2004 = vpop.f32.mrb[0].mxu0
    %v2005 = vadd.f32 0.0, %v2004
    %v2006 = vpop.f32.mrb[0].mxu0
    %2007 = vmatprep.mubr.f32.mxu0 0.0
    %2008 = vmatmul.mubr.f32.gmra.mrb[0].mxu0 %v1907
    %v2009 = vpop.f32.mrb[0].mxu0
    %v2010 = vadd.f32 0.0, %v2009
    %v2011 = vpop.f32.mrb[0].mxu0
    %2012 = vmatprep.mubr.f32.mxu0 0.0
    %2013 = vmatmul.mubr.f32.gmra.mrb[0].mxu0 %v1908
    %v2014 = vpop.f32.mrb[0].mxu0
    %v2015 = vadd.f32 0.0, %v2014
    %v2016 = vpop.f32.mrb[0].mxu0
    %2017 = vmatprep.mubr.f32.mxu0 0.0
    %2018 = vmatmul.mubr.f32.gmra.mrb[0].mxu0 %v1909
    %v2019 = vpop.f32.mrb[0].mxu0
    %v2020 = vadd.f32 0.0, %v2019
    %v2021 = vpop.f32.mrb[0].mxu0
    %2022 = vmatprep.mubr.f32.mxu0 0.0
    %2023 = vmatmul.mubr.f32.gmra.mrb[0].mxu0 %v1910
    %v2024 = vpop.f32.mrb[0].mxu0
    %v2025 = vadd.f32 0.0, %v2024
    %v2026 = vpop.f32.mrb[0].mxu0
    %2027 = vmatprep.mubr.f32.mxu0 0.0
    %2028 = vmatmul.mubr.f32.gmra.mrb[0].mxu0 %v1911
    %v2029 = vpop.f32.mrb[0].mxu0
    %v2030 = vadd.f32 0.0, %v2029
    %v2031 = vpop.f32.mrb[0].mxu0
    %2032 = vmatprep.mubr.f32.mxu0 0.0
    %2033 = vmatmul.mubr.f32.gmra.mrb[0].mxu0 %v1912
    %v2034 = vpop.f32.mrb[0].mxu0
    %v2035 = vadd.f32 0.0, %v2034
    %v2036 = vpop.f32.mrb[0].mxu0
    %2037 = vmatprep.mubr.f32.mxu0 0.0
    %2038 = vmatmul.mubr.f32.gmra.mrb[0].mxu0 %v1913
    %v2039 = vpop.f32.mrb[0].mxu0
    %v2040 = vadd.f32 0.0, %v2039
    %v2041 = vpop.f32.mrb[0].mxu0
    %2042 = vdwg.mxu0
    %v2043 = vld [vmem:[#allocation37] sm:$0x1]
    %v2045 = vlaneseq
    %v2046 = vshrl.u32 %v2045, 7
    %v2047 = vsub.s32 0, %v2046
    %v2048 = vrot.slane %v2043, %v2047
    %v2050 = vmul.f32 %v2005, %v2048
    %v2051 = vmul.f32 %v2010, %v2048
    %v2052 = vmul.f32 %v2015, %v2048
    %v2053 = vmul.f32 %v2020, %v2048
    %v2054 = vmul.f32 %v2025, %v2048
    %v2055 = vmul.f32 %v2030, %v2048
    %v2056 = vmul.f32 %v2035, %v2048
    %v2057 = vmul.f32 %v2040, %v2048
    %v2058 = vld [vmem:[#allocation38] sm:$0x1]
    %v2060 = vlaneseq
    %v2061 = vshrl.u32 %v2060, 7
    %v2062 = vsub.s32 0, %v2061
    %v2063 = vrot.slane %v2058, %v2062
    %v2065 = vadd.f32 %v2050, %v2063
    %v2066 = vadd.f32 %v2051, %v2063
    %v2067 = vadd.f32 %v2052, %v2063
    %v2068 = vadd.f32 %v2053, %v2063
    %v2069 = vadd.f32 %v2054, %v2063
    %v2070 = vadd.f32 %v2055, %v2063
    %v2071 = vadd.f32 %v2056, %v2063
    %v2072 = vadd.f32 %v2057, %v2063
    %v2073 = vmax.f32 %v2065, 0.0
    %v2074 = vmax.f32 %v2066, 0.0
    %v2075 = vmax.f32 %v2067, 0.0
    %v2076 = vmax.f32 %v2068, 0.0
    %v2077 = vmax.f32 %v2069, 0.0
    %v2078 = vmax.f32 %v2070, 0.0
    %v2079 = vmax.f32 %v2071, 0.0
    %v2080 = vmax.f32 %v2072, 0.0
    %v2081 = vld [vmem:[#allocation20] sm:$0xff]
    %v2082 = vld [vmem:[#allocation20 + $0x8] sm:$0xff]
    %v2083 = vld [vmem:[#allocation20 + $0x10] sm:$0xff]
    %v2084 = vld [vmem:[#allocation20 + $0x18] sm:$0xff]
    %v2085 = vld [vmem:[#allocation20 + $0x20] sm:$0xff]
    %v2086 = vld [vmem:[#allocation20 + $0x28] sm:$0xff]
    %v2087 = vld [vmem:[#allocation20 + $0x30] sm:$0xff]
    %v2088 = vld [vmem:[#allocation20 + $0x38] sm:$0xff]
    %v2089 = vld [vmem:[#allocation20 + $0x40] sm:$0xff]
    %v2090 = vld [vmem:[#allocation20 + $0x48] sm:$0xff]
    %v2091 = vld [vmem:[#allocation20 + $0x50] sm:$0xff]
    %v2092 = vld [vmem:[#allocation20 + $0x58] sm:$0xff]
    %v2093 = vld [vmem:[#allocation20 + $0x60] sm:$0xff]
    %v2094 = vld [vmem:[#allocation20 + $0x68] sm:$0xff]
    %v2095 = vld [vmem:[#allocation20 + $0x70] sm:$0xff]
    %v2096 = vld [vmem:[#allocation20 + $0x78] sm:$0xff]
    %2097 = vmatprep.subr.mxu0 0.0
    %2098 = vmatpush1.msra.mxu0 %v2081
    %2099 = vmatprep.subr.mxu0 0.0
    %2100 = vmatpush1.msra.mxu0 %v2082
    %2101 = vmatprep.subr.mxu0 0.0
    %2102 = vmatpush1.msra.mxu0 %v2083
    %2103 = vmatprep.subr.mxu0 0.0
    %2104 = vmatpush1.msra.mxu0 %v2084
    %2105 = vmatprep.subr.mxu0 0.0
    %2106 = vmatpush1.msra.mxu0 %v2085
    %2107 = vmatprep.subr.mxu0 0.0
    %2108 = vmatpush1.msra.mxu0 %v2086
    %2109 = vmatprep.subr.mxu0 0.0
    %2110 = vmatpush1.msra.mxu0 %v2087
    %2111 = vmatprep.subr.mxu0 0.0
    %2112 = vmatpush1.msra.mxu0 %v2088
    %2113 = vmatprep.subr.mxu0 0.0
    %2114 = vmatpush1.msra.mxu0 %v2089
    %2115 = vmatprep.subr.mxu0 0.0
    %2116 = vmatpush1.msra.mxu0 %v2090
    %2117 = vmatprep.subr.mxu0 0.0
    %2118 = vmatpush1.msra.mxu0 %v2091
    %2119 = vmatprep.subr.mxu0 0.0
    %2120 = vmatpush1.msra.mxu0 %v2092
    %2121 = vmatprep.subr.mxu0 0.0
    %2122 = vmatpush1.msra.mxu0 %v2093
    %2123 = vmatprep.subr.mxu0 0.0
    %2124 = vmatpush1.msra.mxu0 %v2094
    %2125 = vmatprep.subr.mxu0 0.0
    %2126 = vmatpush1.msra.mxu0 %v2095
    %2127 = vmatprep.subr.mxu0 0.0
    %2128 = vmatpush1.msra.mxu0 %v2096
    %2129 = vmatprep.subr.mxu0 0.0
    %2130 = vmatpush1.msra.mxu0 0.0
    %2131 = vmatprep.subr.mxu0 0.0
    %2132 = vmatpush1.msra.mxu0 0.0
    %2133 = vmatprep.subr.mxu0 0.0
    %2134 = vmatpush1.msra.mxu0 0.0
    %2135 = vmatprep.subr.mxu0 0.0
    %2136 = vmatpush1.msra.mxu0 0.0
    %2137 = vmatprep.subr.mxu0 0.0
    %2138 = vmatpush1.msra.mxu0 0.0
    %2139 = vmatprep.subr.mxu0 0.0
    %2140 = vmatpush1.msra.mxu0 0.0
    %2141 = vmatprep.subr.mxu0 0.0
    %2142 = vmatpush1.msra.mxu0 0.0
    %2143 = vmatprep.subr.mxu0 0.0
    %2144 = vmatpush1.msra.mxu0 0.0
    %2145 = vmatprep.subr.mxu0 0.0
    %2146 = vmatpush1.msra.mxu0 0.0
    %2147 = vmatprep.subr.mxu0 0.0
    %2148 = vmatpush1.msra.mxu0 0.0
    %2149 = vmatprep.subr.mxu0 0.0
    %2150 = vmatpush1.msra.mxu0 0.0
    %2151 = vmatprep.subr.mxu0 0.0
    %2152 = vmatpush1.msra.mxu0 0.0
    %2153 = vmatprep.subr.mxu0 0.0
    %2154 = vmatpush1.msra.mxu0 0.0
    %2155 = vmatprep.subr.mxu0 0.0
    %2156 = vmatpush1.msra.mxu0 0.0
    %2157 = vmatprep.subr.mxu0 0.0
    %2158 = vmatpush1.msra.mxu0 0.0
    %2159 = vmatprep.subr.mxu0 0.0
    %2160 = vmatpush1.msra.mxu0 0.0
    %2161 = vmatprep.mubr.f32.mxu0 0.0
    %2162 = vmatmul.mubr.f32.gmra.mrb[0].mxu0 %v2073
    %v2163 = vpop.f32.mrb[0].mxu0
    %v2164 = vadd.f32 0.0, %v2163
    %v2165 = vpop.f32.mrb[0].mxu0
    %2166 = vmatprep.mubr.f32.mxu0 0.0
    %2167 = vmatmul.mubr.f32.gmra.mrb[0].mxu0 %v2074
    %v2168 = vpop.f32.mrb[0].mxu0
    %v2169 = vadd.f32 0.0, %v2168
    %v2170 = vpop.f32.mrb[0].mxu0
    %2171 = vmatprep.mubr.f32.mxu0 0.0
    %2172 = vmatmul.mubr.f32.gmra.mrb[0].mxu0 %v2075
    %v2173 = vpop.f32.mrb[0].mxu0
    %v2174 = vadd.f32 0.0, %v2173
    %v2175 = vpop.f32.mrb[0].mxu0
    %2176 = vmatprep.mubr.f32.mxu0 0.0
    %2177 = vmatmul.mubr.f32.gmra.mrb[0].mxu0 %v2076
    %v2178 = vpop.f32.mrb[0].mxu0
    %v2179 = vadd.f32 0.0, %v2178
    %v2180 = vpop.f32.mrb[0].mxu0
    %2181 = vmatprep.mubr.f32.mxu0 0.0
    %2182 = vmatmul.mubr.f32.gmra.mrb[0].mxu0 %v2077
    %v2183 = vpop.f32.mrb[0].mxu0
    %v2184 = vadd.f32 0.0, %v2183
    %v2185 = vpop.f32.mrb[0].mxu0
    %2186 = vmatprep.mubr.f32.mxu0 0.0
    %2187 = vmatmul.mubr.f32.gmra.mrb[0].mxu0 %v2078
    %v2188 = vpop.f32.mrb[0].mxu0
    %v2189 = vadd.f32 0.0, %v2188
    %v2190 = vpop.f32.mrb[0].mxu0
    %2191 = vmatprep.mubr.f32.mxu0 0.0
    %2192 = vmatmul.mubr.f32.gmra.mrb[0].mxu0 %v2079
    %v2193 = vpop.f32.mrb[0].mxu0
    %v2194 = vadd.f32 0.0, %v2193
    %v2195 = vpop.f32.mrb[0].mxu0
    %2196 = vmatprep.mubr.f32.mxu0 0.0
    %2197 = vmatmul.mubr.f32.gmra.mrb[0].mxu0 %v2080
    %v2198 = vpop.f32.mrb[0].mxu0
    %v2199 = vadd.f32 0.0, %v2198
    %v2200 = vpop.f32.mrb[0].mxu0
    %2201 = vdwg.mxu0
    %v2202 = vld [vmem:[#allocation22] sm:$0xff]
    %v2203 = vld [vmem:[#allocation22 + $0x8] sm:$0xff]
    %v2204 = vld [vmem:[#allocation22 + $0x10] sm:$0xff]
    %v2205 = vld [vmem:[#allocation22 + $0x18] sm:$0xff]
    %v2206 = vld [vmem:[#allocation22 + $0x20] sm:$0xff]
    %v2207 = vld [vmem:[#allocation22 + $0x28] sm:$0xff]
    %v2208 = vld [vmem:[#allocation22 + $0x30] sm:$0xff]
    %v2209 = vld [vmem:[#allocation22 + $0x38] sm:$0xff]
    %v2210 = vld [vmem:[#allocation22 + $0x40] sm:$0xff]
    %v2211 = vld [vmem:[#allocation22 + $0x48] sm:$0xff]
    %v2212 = vld [vmem:[#allocation22 + $0x50] sm:$0xff]
    %v2213 = vld [vmem:[#allocation22 + $0x58] sm:$0xff]
    %v2214 = vld [vmem:[#allocation22 + $0x60] sm:$0xff]
    %v2215 = vld [vmem:[#allocation22 + $0x68] sm:$0xff]
    %v2216 = vld [vmem:[#allocation22 + $0x70] sm:$0xff]
    %v2217 = vld [vmem:[#allocation22 + $0x78] sm:$0xff]
    %2218 = vmatprep.subr.mxu0 0.0
    %2219 = vmatpush1.msra.mxu0 %v2202
    %2220 = vmatprep.subr.mxu0 0.0
    %2221 = vmatpush1.msra.mxu0 %v2203
    %2222 = vmatprep.subr.mxu0 0.0
    %2223 = vmatpush1.msra.mxu0 %v2204
    %2224 = vmatprep.subr.mxu0 0.0
    %2225 = vmatpush1.msra.mxu0 %v2205
    %2226 = vmatprep.subr.mxu0 0.0
    %2227 = vmatpush1.msra.mxu0 %v2206
    %2228 = vmatprep.subr.mxu0 0.0
    %2229 = vmatpush1.msra.mxu0 %v2207
    %2230 = vmatprep.subr.mxu0 0.0
    %2231 = vmatpush1.msra.mxu0 %v2208
    %2232 = vmatprep.subr.mxu0 0.0
    %2233 = vmatpush1.msra.mxu0 %v2209
    %2234 = vmatprep.subr.mxu0 0.0
    %2235 = vmatpush1.msra.mxu0 %v2210
    %2236 = vmatprep.subr.mxu0 0.0
    %2237 = vmatpush1.msra.mxu0 %v2211
    %2238 = vmatprep.subr.mxu0 0.0
    %2239 = vmatpush1.msra.mxu0 %v2212
    %2240 = vmatprep.subr.mxu0 0.0
    %2241 = vmatpush1.msra.mxu0 %v2213
    %2242 = vmatprep.subr.mxu0 0.0
    %2243 = vmatpush1.msra.mxu0 %v2214
    %2244 = vmatprep.subr.mxu0 0.0
    %2245 = vmatpush1.msra.mxu0 %v2215
    %2246 = vmatprep.subr.mxu0 0.0
    %2247 = vmatpush1.msra.mxu0 %v2216
    %2248 = vmatprep.subr.mxu0 0.0
    %2249 = vmatpush1.msra.mxu0 %v2217
    %2250 = vmatprep.subr.mxu0 0.0
    %2251 = vmatpush1.msra.mxu0 0.0
    %2252 = vmatprep.subr.mxu0 0.0
    %2253 = vmatpush1.msra.mxu0 0.0
    %2254 = vmatprep.subr.mxu0 0.0
    %2255 = vmatpush1.msra.mxu0 0.0
    %2256 = vmatprep.subr.mxu0 0.0
    %2257 = vmatpush1.msra.mxu0 0.0
    %2258 = vmatprep.subr.mxu0 0.0
    %2259 = vmatpush1.msra.mxu0 0.0
    %2260 = vmatprep.subr.mxu0 0.0
    %2261 = vmatpush1.msra.mxu0 0.0
    %2262 = vmatprep.subr.mxu0 0.0
    %2263 = vmatpush1.msra.mxu0 0.0
    %2264 = vmatprep.subr.mxu0 0.0
    %2265 = vmatpush1.msra.mxu0 0.0
    %2266 = vmatprep.subr.mxu0 0.0
    %2267 = vmatpush1.msra.mxu0 0.0
    %2268 = vmatprep.subr.mxu0 0.0
    %2269 = vmatpush1.msra.mxu0 0.0
    %2270 = vmatprep.subr.mxu0 0.0
    %2271 = vmatpush1.msra.mxu0 0.0
    %2272 = vmatprep.subr.mxu0 0.0
    %2273 = vmatpush1.msra.mxu0 0.0
    %2274 = vmatprep.subr.mxu0 0.0
    %2275 = vmatpush1.msra.mxu0 0.0
    %2276 = vmatprep.subr.mxu0 0.0
    %2277 = vmatpush1.msra.mxu0 0.0
    %2278 = vmatprep.subr.mxu0 0.0
    %2279 = vmatpush1.msra.mxu0 0.0
    %2280 = vmatprep.subr.mxu0 0.0
    %2281 = vmatpush1.msra.mxu0 0.0
    %2282 = vmatprep.mubr.f32.mxu0 0.0
    %2283 = vmatmul.mubr.f32.gmra.mrb[0].mxu0 %v2164
    %v2284 = vpop.f32.mrb[0].mxu0
    %v2285 = vadd.f32 0.0, %v2284
    %v2286 = vpop.f32.mrb[0].mxu0
    %2287 = vmatprep.mubr.f32.mxu0 0.0
    %2288 = vmatmul.mubr.f32.gmra.mrb[0].mxu0 %v2169
    %v2289 = vpop.f32.mrb[0].mxu0
    %v2290 = vadd.f32 0.0, %v2289
    %v2291 = vpop.f32.mrb[0].mxu0
    %2292 = vmatprep.mubr.f32.mxu0 0.0
    %2293 = vmatmul.mubr.f32.gmra.mrb[0].mxu0 %v2174
    %v2294 = vpop.f32.mrb[0].mxu0
    %v2295 = vadd.f32 0.0, %v2294
    %v2296 = vpop.f32.mrb[0].mxu0
    %2297 = vmatprep.mubr.f32.mxu0 0.0
    %2298 = vmatmul.mubr.f32.gmra.mrb[0].mxu0 %v2179
    %v2299 = vpop.f32.mrb[0].mxu0
    %v2300 = vadd.f32 0.0, %v2299
    %v2301 = vpop.f32.mrb[0].mxu0
    %2302 = vmatprep.mubr.f32.mxu0 0.0
    %2303 = vmatmul.mubr.f32.gmra.mrb[0].mxu0 %v2184
    %v2304 = vpop.f32.mrb[0].mxu0
    %v2305 = vadd.f32 0.0, %v2304
    %v2306 = vpop.f32.mrb[0].mxu0
    %2307 = vmatprep.mubr.f32.mxu0 0.0
    %2308 = vmatmul.mubr.f32.gmra.mrb[0].mxu0 %v2189
    %v2309 = vpop.f32.mrb[0].mxu0
    %v2310 = vadd.f32 0.0, %v2309
    %v2311 = vpop.f32.mrb[0].mxu0
    %2312 = vmatprep.mubr.f32.mxu0 0.0
    %2313 = vmatmul.mubr.f32.gmra.mrb[0].mxu0 %v2194
    %v2314 = vpop.f32.mrb[0].mxu0
    %v2315 = vadd.f32 0.0, %v2314
    %v2316 = vpop.f32.mrb[0].mxu0
    %2317 = vmatprep.mubr.f32.mxu0 0.0
    %2318 = vmatmul.mubr.f32.gmra.mrb[0].mxu0 %v2199
    %v2319 = vpop.f32.mrb[0].mxu0
    %v2320 = vadd.f32 0.0, %v2319
    %v2321 = vpop.f32.mrb[0].mxu0
    %2322 = vdwg.mxu0
    %v2323 = vld [vmem:[#allocation23] sm:$0x3]
    %2324 = vmatprep.subr.mxu0 0.0
    %2325 = vmatpush1.xpose.msra.mxu0 %v2164
    %2326 = vmatprep.subr.mxu0 0.0
    %2327 = vmatpush1.xpose.msra.mxu0 %v2169
    %2328 = vmatprep.subr.mxu0 0.0
    %2329 = vmatpush1.xpose.msra.mxu0 %v2174
    %2330 = vmatprep.subr.mxu0 0.0
    %2331 = vmatpush1.xpose.msra.mxu0 %v2179
    %2332 = vmatprep.subr.mxu0 0.0
    %2333 = vmatpush1.xpose.msra.mxu0 %v2184
    %2334 = vmatprep.subr.mxu0 0.0
    %2335 = vmatpush1.xpose.msra.mxu0 %v2189
    %2336 = vmatprep.subr.mxu0 0.0
    %2337 = vmatpush1.xpose.msra.mxu0 %v2194
    %2338 = vmatprep.subr.mxu0 0.0
    %2339 = vmatpush1.xpose.msra.mxu0 %v2199
    %2340 = vmatprep.subr.mxu0 0.0
    %2341 = vmatpush1.xpose.msra.mxu0 0.0
    %2342 = vmatprep.subr.mxu0 0.0
    %2343 = vmatpush1.xpose.msra.mxu0 0.0
    %2344 = vmatprep.subr.mxu0 0.0
    %2345 = vmatpush1.xpose.msra.mxu0 0.0
    %2346 = vmatprep.subr.mxu0 0.0
    %2347 = vmatpush1.xpose.msra.mxu0 0.0
    %2348 = vmatprep.subr.mxu0 0.0
    %2349 = vmatpush1.xpose.msra.mxu0 0.0
    %2350 = vmatprep.subr.mxu0 0.0
    %2351 = vmatpush1.xpose.msra.mxu0 0.0
    %2352 = vmatprep.subr.mxu0 0.0
    %2353 = vmatpush1.xpose.msra.mxu0 0.0
    %2354 = vmatprep.subr.mxu0 0.0
    %2355 = vmatpush1.xpose.msra.mxu0 0.0
    %2356 = vmatprep.subr.mxu0 0.0
    %2357 = vmatpush1.xpose.msra.mxu0 0.0
    %2358 = vmatprep.subr.mxu0 0.0
    %2359 = vmatpush1.xpose.msra.mxu0 0.0
    %2360 = vmatprep.subr.mxu0 0.0
    %2361 = vmatpush1.xpose.msra.mxu0 0.0
    %2362 = vmatprep.subr.mxu0 0.0
    %2363 = vmatpush1.xpose.msra.mxu0 0.0
    %2364 = vmatprep.subr.mxu0 0.0
    %2365 = vmatpush1.xpose.msra.mxu0 0.0
    %2366 = vmatprep.subr.mxu0 0.0
    %2367 = vmatpush1.xpose.msra.mxu0 0.0
    %2368 = vmatprep.subr.mxu0 0.0
    %2369 = vmatpush1.xpose.msra.mxu0 0.0
    %2370 = vmatprep.subr.mxu0 0.0
    %2371 = vmatpush1.xpose.msra.mxu0 0.0
    %2372 = vmatprep.subr.mxu0 0.0
    %2373 = vmatpush1.xpose.msra.mxu0 0.0
    %2374 = vmatprep.subr.mxu0 0.0
    %2375 = vmatpush1.xpose.msra.mxu0 0.0
    %2376 = vmatprep.subr.mxu0 0.0
    %2377 = vmatpush1.xpose.msra.mxu0 0.0
    %2378 = vmatprep.subr.mxu0 0.0
    %2379 = vmatpush1.xpose.msra.mxu0 0.0
    %2380 = vmatprep.subr.mxu0 0.0
    %2381 = vmatpush1.xpose.msra.mxu0 0.0
    %2382 = vmatprep.subr.mxu0 0.0
    %2383 = vmatpush1.xpose.msra.mxu0 0.0
    %2384 = vmatprep.subr.mxu0 0.0
    %2385 = vmatpush1.xpose.msra.mxu0 0.0
    %2386 = vmatprep.subr.mxu0 0.0
    %2387 = vmatpush1.xpose.msra.mxu0 0.0
    %2388 = vmatprep.mubr.f32.mxu0 0.0
    %2389 = vmatmul.mubr.f32.gmra.mrb[0].mxu0 %v2323
    %v2390 = vpop.f32.mrb[0].mxu0
    %v2391 = vadd.f32 0.0, %v2390
    %v2392 = vpop.f32.mrb[0].mxu0
    %2393 = vdwg.mxu0
    %2395 = vset.pattern.permute.xlu0 0
    %2396 = vperm.xlu0 %2395, %v2285
    %v2397 = vpop.permute.xlu0 %2396
    %2400 = vset.pattern.permute.xlu0 0
    %2401 = vperm.xlu0 %2400, %v2290
    %v2402 = vpop.permute.xlu0 %2401
    %2405 = vset.pattern.permute.xlu0 0
    %2406 = vperm.xlu0 %2405, %v2295
    %v2407 = vpop.permute.xlu0 %2406
    %2410 = vset.pattern.permute.xlu0 0
    %2411 = vperm.xlu0 %2410, %v2300
    %v2412 = vpop.permute.xlu0 %2411
    %2415 = vset.pattern.permute.xlu0 0
    %2416 = vperm.xlu0 %2415, %v2305
    %v2417 = vpop.permute.xlu0 %2416
    %2420 = vset.pattern.permute.xlu0 0
    %2421 = vperm.xlu0 %2420, %v2310
    %v2422 = vpop.permute.xlu0 %2421
    %2425 = vset.pattern.permute.xlu0 0
    %2426 = vperm.xlu0 %2425, %v2315
    %v2427 = vpop.permute.xlu0 %2426
    %2430 = vset.pattern.permute.xlu0 0
    %2431 = vperm.xlu0 %2430, %v2320
    %v2432 = vpop.permute.xlu0 %2431
    %v2434 = vlaneseq
    %v2435 = vshrl.u32 %v2434, 7
    %v2436 = vsub.s32 0, %v2435
    %v2437 = vrot.slane %v2391, %v2436
    %v2438 = vadd.f32 %v2397, %v2437
    %v2439 = vadd.f32 %v2402, %v2437
    %v2440 = vadd.f32 %v2407, %v2437
    %v2441 = vadd.f32 %v2412, %v2437
    %v2442 = vadd.f32 %v2417, %v2437
    %v2443 = vadd.f32 %v2422, %v2437
    %v2444 = vadd.f32 %v2427, %v2437
    %v2445 = vadd.f32 %v2432, %v2437
    %v2446 = vmul.f32 %v2438, 0.2
    %v2447 = vmul.f32 %v2439, 0.2
    %v2448 = vmul.f32 %v2440, 0.2
    %v2449 = vmul.f32 %v2441, 0.2
    %v2450 = vmul.f32 %v2442, 0.2
    %v2451 = vmul.f32 %v2443, 0.2
    %v2452 = vmul.f32 %v2444, 0.2
    %v2453 = vmul.f32 %v2445, 0.2
    %v2454 = vmax.f32 %v2438, %v2446
    %v2455 = vmax.f32 %v2439, %v2447
    %v2456 = vmax.f32 %v2440, %v2448
    %v2457 = vmax.f32 %v2441, %v2449
    %v2458 = vmax.f32 %v2442, %v2450
    %v2459 = vmax.f32 %v2443, %v2451
    %v2460 = vmax.f32 %v2444, %v2452
    %v2461 = vmax.f32 %v2445, %v2453
    %v2462 = vadd.f32 %v2454, %v375
    %v2463 = vadd.f32 %v2455, %v376
    %v2464 = vadd.f32 %v2456, %v377
    %v2465 = vadd.f32 %v2457, %v378
    %v2466 = vadd.f32 %v2458, %v379
    %v2467 = vadd.f32 %v2459, %v380
    %v2468 = vadd.f32 %v2460, %v381
    %v2469 = vadd.f32 %v2461, %v382
    %v2470 = vsel %vm780, %v2462, -inf
    %2471 = vmax.xlane.f32.xlu0 %v2470
    %v2472 = vpop.xlane.xlu0 %2471
    %v2473 = vsel %vm780, %v2463, -inf
    %2474 = vmax.xlane.f32.xlu0 %v2473
    %v2475 = vpop.xlane.xlu0 %2474
    %v2476 = vsel %vm780, %v2464, -inf
    %2477 = vmax.xlane.f32.xlu0 %v2476
    %v2478 = vpop.xlane.xlu0 %2477
    %v2479 = vsel %vm780, %v2465, -inf
    %2480 = vmax.xlane.f32.xlu0 %v2479
    %v2481 = vpop.xlane.xlu0 %2480
    %v2482 = vsel %vm780, %v2466, -inf
    %2483 = vmax.xlane.f32.xlu0 %v2482
    %v2484 = vpop.xlane.xlu0 %2483
    %v2485 = vsel %vm780, %v2467, -inf
    %2486 = vmax.xlane.f32.xlu0 %v2485
    %v2487 = vpop.xlane.xlu0 %2486
    %v2488 = vsel %vm780, %v2468, -inf
    %2489 = vmax.xlane.f32.xlu0 %v2488
    %v2490 = vpop.xlane.xlu0 %2489
    %v2491 = vsel %vm780, %v2469, -inf
    %2492 = vmax.xlane.f32.xlu0 %v2491
    %v2493 = vpop.xlane.xlu0 %2492
    %v2494 = vsub.f32 %v2462, %v2472
    %v2495 = vsub.f32 %v2463, %v2475
    %v2496 = vsub.f32 %v2464, %v2478
    %v2497 = vsub.f32 %v2465, %v2481
    %v2498 = vsub.f32 %v2466, %v2484
    %v2499 = vsub.f32 %v2467, %v2487
    %v2500 = vsub.f32 %v2468, %v2490
    %v2501 = vsub.f32 %v2469, %v2493
    %v2502 = vmul.f32 %v2494, 1.442695
    %v2503 = vpow.pop %v2502
    %v2504 = vmul.f32 %v2495, 1.442695
    %v2505 = vpow.pop %v2504
    %v2506 = vmul.f32 %v2496, 1.442695
    %v2507 = vpow.pop %v2506
    %v2508 = vmul.f32 %v2497, 1.442695
    %v2509 = vpow.pop %v2508
    %v2510 = vmul.f32 %v2498, 1.442695
    %v2511 = vpow.pop %v2510
    %v2512 = vmul.f32 %v2499, 1.442695
    %v2513 = vpow.pop %v2512
    %v2514 = vmul.f32 %v2500, 1.442695
    %v2515 = vpow.pop %v2514
    %v2516 = vmul.f32 %v2501, 1.442695
    %v2517 = vpow.pop %v2516
    %v2518 = vsel %vm780, %v2503, 0.0
    %2519 = vadd.xlane.f32.xlu0 %v2518
    %v2520 = vpop.xlane.xlu0 %2519
    %v2521 = vsel %vm780, %v2505, 0.0
    %2522 = vadd.xlane.f32.xlu0 %v2521
    %v2523 = vpop.xlane.xlu0 %2522
    %v2524 = vsel %vm780, %v2507, 0.0
    %2525 = vadd.xlane.f32.xlu0 %v2524
    %v2526 = vpop.xlane.xlu0 %2525
    %v2527 = vsel %vm780, %v2509, 0.0
    %2528 = vadd.xlane.f32.xlu0 %v2527
    %v2529 = vpop.xlane.xlu0 %2528
    %v2530 = vsel %vm780, %v2511, 0.0
    %2531 = vadd.xlane.f32.xlu0 %v2530
    %v2532 = vpop.xlane.xlu0 %2531
    %v2533 = vsel %vm780, %v2513, 0.0
    %2534 = vadd.xlane.f32.xlu0 %v2533
    %v2535 = vpop.xlane.xlu0 %2534
    %v2536 = vsel %vm780, %v2515, 0.0
    %2537 = vadd.xlane.f32.xlu0 %v2536
    %v2538 = vpop.xlane.xlu0 %2537
    %v2539 = vsel %vm780, %v2517, 0.0
    %2540 = vadd.xlane.f32.xlu0 %v2539
    %v2541 = vpop.xlane.xlu0 %2540
    %v2542 = vrcp.pop %v2520
    %v2543 = vrcp.pop %v2523
    %v2544 = vrcp.pop %v2526
    %v2545 = vrcp.pop %v2529
    %v2546 = vrcp.pop %v2532
    %v2547 = vrcp.pop %v2535
    %v2548 = vrcp.pop %v2538
    %v2549 = vrcp.pop %v2541
    %v2550 = vmul.f32 %v2503, %v2542
    %v2551 = vmul.f32 %v2505, %v2543
    %v2552 = vmul.f32 %v2507, %v2544
    %v2553 = vmul.f32 %v2509, %v2545
    %v2554 = vmul.f32 %v2511, %v2546
    %v2555 = vmul.f32 %v2513, %v2547
    %v2556 = vmul.f32 %v2515, %v2548
    %v2557 = vmul.f32 %v2517, %v2549
    %2558 = vset.pattern.permute.xlu0 1
    %2559 = vperm.xlu0 %2558, %v2285
    %v2560 = vpop.permute.xlu0 %2559
    %2562 = vset.pattern.permute.xlu0 1
    %2563 = vperm.xlu0 %2562, %v2290
    %v2564 = vpop.permute.xlu0 %2563
    %2566 = vset.pattern.permute.xlu0 1
    %2567 = vperm.xlu0 %2566, %v2295
    %v2568 = vpop.permute.xlu0 %2567
    %2570 = vset.pattern.permute.xlu0 1
    %2571 = vperm.xlu0 %2570, %v2300
    %v2572 = vpop.permute.xlu0 %2571
    %2574 = vset.pattern.permute.xlu0 1
    %2575 = vperm.xlu0 %2574, %v2305
    %v2576 = vpop.permute.xlu0 %2575
    %2578 = vset.pattern.permute.xlu0 1
    %2579 = vperm.xlu0 %2578, %v2310
    %v2580 = vpop.permute.xlu0 %2579
    %2582 = vset.pattern.permute.xlu0 1
    %2583 = vperm.xlu0 %2582, %v2315
    %v2584 = vpop.permute.xlu0 %2583
    %2586 = vset.pattern.permute.xlu0 1
    %2587 = vperm.xlu0 %2586, %v2320
    %v2588 = vpop.permute.xlu0 %2587
    %v2590 = vlaneseq
    %v2591 = vshrl.u32 %v2590, 7
    %v2592 = vsub.s32 1, %v2591
    %v2593 = vrot.slane %v2391, %v2592
    %v2594 = vadd.f32 %v2560, %v2593
    %v2595 = vadd.f32 %v2564, %v2593
    %v2596 = vadd.f32 %v2568, %v2593
    %v2597 = vadd.f32 %v2572, %v2593
    %v2598 = vadd.f32 %v2576, %v2593
    %v2599 = vadd.f32 %v2580, %v2593
    %v2600 = vadd.f32 %v2584, %v2593
    %v2601 = vadd.f32 %v2588, %v2593
    %v2602 = vmul.f32 %v2594, 0.2
    %v2603 = vmul.f32 %v2595, 0.2
    %v2604 = vmul.f32 %v2596, 0.2
    %v2605 = vmul.f32 %v2597, 0.2
    %v2606 = vmul.f32 %v2598, 0.2
    %v2607 = vmul.f32 %v2599, 0.2
    %v2608 = vmul.f32 %v2600, 0.2
    %v2609 = vmul.f32 %v2601, 0.2
    %v2610 = vmax.f32 %v2594, %v2602
    %v2611 = vmax.f32 %v2595, %v2603
    %v2612 = vmax.f32 %v2596, %v2604
    %v2613 = vmax.f32 %v2597, %v2605
    %v2614 = vmax.f32 %v2598, %v2606
    %v2615 = vmax.f32 %v2599, %v2607
    %v2616 = vmax.f32 %v2600, %v2608
    %v2617 = vmax.f32 %v2601, %v2609
    %v2618 = vadd.f32 %v2610, %v375
    %v2619 = vadd.f32 %v2611, %v376
    %v2620 = vadd.f32 %v2612, %v377
    %v2621 = vadd.f32 %v2613, %v378
    %v2622 = vadd.f32 %v2614, %v379
    %v2623 = vadd.f32 %v2615, %v380
    %v2624 = vadd.f32 %v2616, %v381
    %v2625 = vadd.f32 %v2617, %v382
    %v2626 = vsel %vm780, %v2618, -inf
    %2627 = vmax.xlane.f32.xlu0 %v2626
    %v2628 = vpop.xlane.xlu0 %2627
    %v2629 = vsel %vm780, %v2619, -inf
    %2630 = vmax.xlane.f32.xlu0 %v2629
    %v2631 = vpop.xlane.xlu0 %2630
    %v2632 = vsel %vm780, %v2620, -inf
    %2633 = vmax.xlane.f32.xlu0 %v2632
    %v2634 = vpop.xlane.xlu0 %2633
    %v2635 = vsel %vm780, %v2621, -inf
    %2636 = vmax.xlane.f32.xlu0 %v2635
    %v2637 = vpop.xlane.xlu0 %2636
    %v2638 = vsel %vm780, %v2622, -inf
    %2639 = vmax.xlane.f32.xlu0 %v2638
    %v2640 = vpop.xlane.xlu0 %2639
    %v2641 = vsel %vm780, %v2623, -inf
    %2642 = vmax.xlane.f32.xlu0 %v2641
    %v2643 = vpop.xlane.xlu0 %2642
    %v2644 = vsel %vm780, %v2624, -inf
    %2645 = vmax.xlane.f32.xlu0 %v2644
    %v2646 = vpop.xlane.xlu0 %2645
    %v2647 = vsel %vm780, %v2625, -inf
    %2648 = vmax.xlane.f32.xlu0 %v2647
    %v2649 = vpop.xlane.xlu0 %2648
    %v2650 = vsub.f32 %v2618, %v2628
    %v2651 = vsub.f32 %v2619, %v2631
    %v2652 = vsub.f32 %v2620, %v2634
    %v2653 = vsub.f32 %v2621, %v2637
    %v2654 = vsub.f32 %v2622, %v2640
    %v2655 = vsub.f32 %v2623, %v2643
    %v2656 = vsub.f32 %v2624, %v2646
    %v2657 = vsub.f32 %v2625, %v2649
    %v2658 = vmul.f32 %v2650, 1.442695
    %v2659 = vpow.pop %v2658
    %v2660 = vmul.f32 %v2651, 1.442695
    %v2661 = vpow.pop %v2660
    %v2662 = vmul.f32 %v2652, 1.442695
    %v2663 = vpow.pop %v2662
    %v2664 = vmul.f32 %v2653, 1.442695
    %v2665 = vpow.pop %v2664
    %v2666 = vmul.f32 %v2654, 1.442695
    %v2667 = vpow.pop %v2666
    %v2668 = vmul.f32 %v2655, 1.442695
    %v2669 = vpow.pop %v2668
    %v2670 = vmul.f32 %v2656, 1.442695
    %v2671 = vpow.pop %v2670
    %v2672 = vmul.f32 %v2657, 1.442695
    %v2673 = vpow.pop %v2672
    %v2674 = vsel %vm780, %v2659, 0.0
    %2675 = vadd.xlane.f32.xlu0 %v2674
    %v2676 = vpop.xlane.xlu0 %2675
    %v2677 = vsel %vm780, %v2661, 0.0
    %2678 = vadd.xlane.f32.xlu0 %v2677
    %v2679 = vpop.xlane.xlu0 %2678
    %v2680 = vsel %vm780, %v2663, 0.0
    %2681 = vadd.xlane.f32.xlu0 %v2680
    %v2682 = vpop.xlane.xlu0 %2681
    %v2683 = vsel %vm780, %v2665, 0.0
    %2684 = vadd.xlane.f32.xlu0 %v2683
    %v2685 = vpop.xlane.xlu0 %2684
    %v2686 = vsel %vm780, %v2667, 0.0
    %2687 = vadd.xlane.f32.xlu0 %v2686
    %v2688 = vpop.xlane.xlu0 %2687
    %v2689 = vsel %vm780, %v2669, 0.0
    %2690 = vadd.xlane.f32.xlu0 %v2689
    %v2691 = vpop.xlane.xlu0 %2690
    %v2692 = vsel %vm780, %v2671, 0.0
    %2693 = vadd.xlane.f32.xlu0 %v2692
    %v2694 = vpop.xlane.xlu0 %2693
    %v2695 = vsel %vm780, %v2673, 0.0
    %2696 = vadd.xlane.f32.xlu0 %v2695
    %v2697 = vpop.xlane.xlu0 %2696
    %v2698 = vrcp.pop %v2676
    %v2699 = vrcp.pop %v2679
    %v2700 = vrcp.pop %v2682
    %v2701 = vrcp.pop %v2685
    %v2702 = vrcp.pop %v2688
    %v2703 = vrcp.pop %v2691
    %v2704 = vrcp.pop %v2694
    %v2705 = vrcp.pop %v2697
    %v2706 = vmul.f32 %v2659, %v2698
    %v2707 = vmul.f32 %v2661, %v2699
    %v2708 = vmul.f32 %v2663, %v2700
    %v2709 = vmul.f32 %v2665, %v2701
    %v2710 = vmul.f32 %v2667, %v2702
    %v2711 = vmul.f32 %v2669, %v2703
    %v2712 = vmul.f32 %v2671, %v2704
    %v2713 = vmul.f32 %v2673, %v2705
    %v2714 = vld [vmem:[#allocation25] sm:$0x3]
    %2723 = vrot.lane.b32.xlu0 %v2706, 64
    %v2724 = vpop.permute.xlu0 %2723
    %2725 = vrot.lane.b32.xlu0 %v2707, 64
    %v2726 = vpop.permute.xlu0 %2725
    %2727 = vrot.lane.b32.xlu0 %v2708, 64
    %v2728 = vpop.permute.xlu0 %2727
    %2729 = vrot.lane.b32.xlu0 %v2709, 64
    %v2730 = vpop.permute.xlu0 %2729
    %2731 = vrot.lane.b32.xlu0 %v2710, 64
    %v2732 = vpop.permute.xlu0 %2731
    %2733 = vrot.lane.b32.xlu0 %v2711, 64
    %v2734 = vpop.permute.xlu0 %2733
    %2735 = vrot.lane.b32.xlu0 %v2712, 64
    %v2736 = vpop.permute.xlu0 %2735
    %2737 = vrot.lane.b32.xlu0 %v2713, 64
    %v2738 = vpop.permute.xlu0 %2737
    %v2747 = vsel %vm780, %v2550, %v2724
    %v2748 = vsel %vm780, %v2551, %v2726
    %v2749 = vsel %vm780, %v2552, %v2728
    %v2750 = vsel %vm780, %v2553, %v2730
    %v2751 = vsel %vm780, %v2554, %v2732
    %v2752 = vsel %vm780, %v2555, %v2734
    %v2753 = vsel %vm780, %v2556, %v2736
    %v2754 = vsel %vm780, %v2557, %v2738
    %v2755 = vlaneseq
    %v2756 = vshrl.u32 %v2755, 7
    %v2757 = vsub.s32 0, %v2756
    %v2758 = vrot.slane %v2714, %v2757
    %v2759 = vmul.f32 %v2164, %v2758
    %v2760 = vmul.f32 %v2169, %v2758
    %v2761 = vmul.f32 %v2174, %v2758
    %v2762 = vmul.f32 %v2179, %v2758
    %v2763 = vmul.f32 %v2184, %v2758
    %v2764 = vmul.f32 %v2189, %v2758
    %v2765 = vmul.f32 %v2194, %v2758
    %v2766 = vmul.f32 %v2199, %v2758
    %v2767 = vlaneseq
    %v2768 = vshrl.u32 %v2767, 7
    %v2769 = vsub.s32 1, %v2768
    %v2770 = vrot.slane %v2714, %v2769
    %v2771 = vmul.f32 %v2164, %v2770
    %v2772 = vmul.f32 %v2169, %v2770
    %v2773 = vmul.f32 %v2174, %v2770
    %v2774 = vmul.f32 %v2179, %v2770
    %v2775 = vmul.f32 %v2184, %v2770
    %v2776 = vmul.f32 %v2189, %v2770
    %v2777 = vmul.f32 %v2194, %v2770
    %v2778 = vmul.f32 %v2199, %v2770
    %v2779 = vld [vmem:[#allocation26] sm:$0x1]
    %v2781 = vlaneseq
    %v2782 = vshrl.u32 %v2781, 7
    %v2783 = vsub.s32 0, %v2782
    %v2784 = vrot.slane %v2779, %v2783
    %2786 = vmatprep.subr.mxu0 0.0
    %2787 = vmatpush1.msra.mxu0 %v2759
    %2788 = vmatprep.subr.mxu0 0.0
    %2789 = vmatpush1.msra.mxu0 %v2760
    %2790 = vmatprep.subr.mxu0 0.0
    %2791 = vmatpush1.msra.mxu0 %v2761
    %2792 = vmatprep.subr.mxu0 0.0
    %2793 = vmatpush1.msra.mxu0 %v2762
    %2794 = vmatprep.subr.mxu0 0.0
    %2795 = vmatpush1.msra.mxu0 %v2763
    %2796 = vmatprep.subr.mxu0 0.0
    %2797 = vmatpush1.msra.mxu0 %v2764
    %2798 = vmatprep.subr.mxu0 0.0
    %2799 = vmatpush1.msra.mxu0 %v2765
    %2800 = vmatprep.subr.mxu0 0.0
    %2801 = vmatpush1.msra.mxu0 %v2766
    %2802 = vmatprep.subr.mxu0 0.0
    %2803 = vmatpush1.msra.mxu0 %v2771
    %2804 = vmatprep.subr.mxu0 0.0
    %2805 = vmatpush1.msra.mxu0 %v2772
    %2806 = vmatprep.subr.mxu0 0.0
    %2807 = vmatpush1.msra.mxu0 %v2773
    %2808 = vmatprep.subr.mxu0 0.0
    %2809 = vmatpush1.msra.mxu0 %v2774
    %2810 = vmatprep.subr.mxu0 0.0
    %2811 = vmatpush1.msra.mxu0 %v2775
    %2812 = vmatprep.subr.mxu0 0.0
    %2813 = vmatpush1.msra.mxu0 %v2776
    %2814 = vmatprep.subr.mxu0 0.0
    %2815 = vmatpush1.msra.mxu0 %v2777
    %2816 = vmatprep.subr.mxu0 0.0
    %2817 = vmatpush1.msra.mxu0 %v2778
    %2818 = vmatprep.subr.mxu0 0.0
    %2819 = vmatpush1.msra.mxu0 0.0
    %2820 = vmatprep.subr.mxu0 0.0
    %2821 = vmatpush1.msra.mxu0 0.0
    %2822 = vmatprep.subr.mxu0 0.0
    %2823 = vmatpush1.msra.mxu0 0.0
    %2824 = vmatprep.subr.mxu0 0.0
    %2825 = vmatpush1.msra.mxu0 0.0
    %2826 = vmatprep.subr.mxu0 0.0
    %2827 = vmatpush1.msra.mxu0 0.0
    %2828 = vmatprep.subr.mxu0 0.0
    %2829 = vmatpush1.msra.mxu0 0.0
    %2830 = vmatprep.subr.mxu0 0.0
    %2831 = vmatpush1.msra.mxu0 0.0
    %2832 = vmatprep.subr.mxu0 0.0
    %2833 = vmatpush1.msra.mxu0 0.0
    %2834 = vmatprep.subr.mxu0 0.0
    %2835 = vmatpush1.msra.mxu0 0.0
    %2836 = vmatprep.subr.mxu0 0.0
    %2837 = vmatpush1.msra.mxu0 0.0
    %2838 = vmatprep.subr.mxu0 0.0
    %2839 = vmatpush1.msra.mxu0 0.0
    %2840 = vmatprep.subr.mxu0 0.0
    %2841 = vmatpush1.msra.mxu0 0.0
    %2842 = vmatprep.subr.mxu0 0.0
    %2843 = vmatpush1.msra.mxu0 0.0
    %2844 = vmatprep.subr.mxu0 0.0
    %2845 = vmatpush1.msra.mxu0 0.0
    %2846 = vmatprep.subr.mxu0 0.0
    %2847 = vmatpush1.msra.mxu0 0.0
    %2848 = vmatprep.subr.mxu0 0.0
    %2849 = vmatpush1.msra.mxu0 0.0
    %2850 = vmatprep.mubr.f32.mxu0 0.0
    %2851 = vmatmul.mubr.f32.gmra.mrb[0].mxu0 %v2747
    %v2852 = vpop.f32.mrb[0].mxu0
    %v2853 = vadd.f32 %v2784, %v2852
    %v2854 = vpop.f32.mrb[0].mxu0
    %2855 = vmatprep.mubr.f32.mxu0 0.0
    %2856 = vmatmul.mubr.f32.gmra.mrb[0].mxu0 %v2748
    %v2857 = vpop.f32.mrb[0].mxu0
    %v2858 = vadd.f32 %v2784, %v2857
    %v2859 = vpop.f32.mrb[0].mxu0
    %2860 = vmatprep.mubr.f32.mxu0 0.0
    %2861 = vmatmul.mubr.f32.gmra.mrb[0].mxu0 %v2749
    %v2862 = vpop.f32.mrb[0].mxu0
    %v2863 = vadd.f32 %v2784, %v2862
    %v2864 = vpop.f32.mrb[0].mxu0
    %2865 = vmatprep.mubr.f32.mxu0 0.0
    %2866 = vmatmul.mubr.f32.gmra.mrb[0].mxu0 %v2750
    %v2867 = vpop.f32.mrb[0].mxu0
    %v2868 = vadd.f32 %v2784, %v2867
    %v2869 = vpop.f32.mrb[0].mxu0
    %2870 = vmatprep.mubr.f32.mxu0 0.0
    %2871 = vmatmul.mubr.f32.gmra.mrb[0].mxu0 %v2751
    %v2872 = vpop.f32.mrb[0].mxu0
    %v2873 = vadd.f32 %v2784, %v2872
    %v2874 = vpop.f32.mrb[0].mxu0
    %2875 = vmatprep.mubr.f32.mxu0 0.0
    %2876 = vmatmul.mubr.f32.gmra.mrb[0].mxu0 %v2752
    %v2877 = vpop.f32.mrb[0].mxu0
    %v2878 = vadd.f32 %v2784, %v2877
    %v2879 = vpop.f32.mrb[0].mxu0
    %2880 = vmatprep.mubr.f32.mxu0 0.0
    %2881 = vmatmul.mubr.f32.gmra.mrb[0].mxu0 %v2753
    %v2882 = vpop.f32.mrb[0].mxu0
    %v2883 = vadd.f32 %v2784, %v2882
    %v2884 = vpop.f32.mrb[0].mxu0
    %2885 = vmatprep.mubr.f32.mxu0 0.0
    %2886 = vmatmul.mubr.f32.gmra.mrb[0].mxu0 %v2754
    %v2887 = vpop.f32.mrb[0].mxu0
    %v2888 = vadd.f32 %v2784, %v2887
    %v2889 = vpop.f32.mrb[0].mxu0
    %2890 = vdwg.mxu0
    %v2891 = vmul.f32 %v1164, 0.5
    %v2892 = vmul.f32 %v1169, 0.5
    %v2893 = vmul.f32 %v1174, 0.5
    %v2894 = vmul.f32 %v1179, 0.5
    %v2895 = vmul.f32 %v1184, 0.5
    %v2896 = vmul.f32 %v1189, 0.5
    %v2897 = vmul.f32 %v1194, 0.5
    %v2898 = vmul.f32 %v1199, 0.5
    %v2899 = vadd.f32 %v2853, %v2891
    %v2900 = vadd.f32 %v2858, %v2892
    %v2901 = vadd.f32 %v2863, %v2893
    %v2902 = vadd.f32 %v2868, %v2894
    %v2903 = vadd.f32 %v2873, %v2895
    %v2904 = vadd.f32 %v2878, %v2896
    %v2905 = vadd.f32 %v2883, %v2897
    %v2906 = vadd.f32 %v2888, %v2898
    %v2907 = vld [vmem:[#allocation28] sm:$0xff]
    %v2908 = vld [vmem:[#allocation28 + $0x8] sm:$0xff]
    %v2909 = vld [vmem:[#allocation28 + $0x10] sm:$0xff]
    %v2910 = vld [vmem:[#allocation28 + $0x18] sm:$0xff]
    %v2911 = vld [vmem:[#allocation28 + $0x20] sm:$0xff]
    %v2912 = vld [vmem:[#allocation28 + $0x28] sm:$0xff]
    %v2913 = vld [vmem:[#allocation28 + $0x30] sm:$0xff]
    %v2914 = vld [vmem:[#allocation28 + $0x38] sm:$0xff]
    %v2915 = vld [vmem:[#allocation28 + $0x40] sm:$0xff]
    %v2916 = vld [vmem:[#allocation28 + $0x48] sm:$0xff]
    %v2917 = vld [vmem:[#allocation28 + $0x50] sm:$0xff]
    %v2918 = vld [vmem:[#allocation28 + $0x58] sm:$0xff]
    %v2919 = vld [vmem:[#allocation28 + $0x60] sm:$0xff]
    %v2920 = vld [vmem:[#allocation28 + $0x68] sm:$0xff]
    %v2921 = vld [vmem:[#allocation28 + $0x70] sm:$0xff]
    %v2922 = vld [vmem:[#allocation28 + $0x78] sm:$0xff]
    %2923 = vmatprep.subr.mxu0 0.0
    %2924 = vmatpush1.msra.mxu0 %v2907
    %2925 = vmatprep.subr.mxu0 0.0
    %2926 = vmatpush1.msra.mxu0 %v2908
    %2927 = vmatprep.subr.mxu0 0.0
    %2928 = vmatpush1.msra.mxu0 %v2909
    %2929 = vmatprep.subr.mxu0 0.0
    %2930 = vmatpush1.msra.mxu0 %v2910
    %2931 = vmatprep.subr.mxu0 0.0
    %2932 = vmatpush1.msra.mxu0 %v2911
    %2933 = vmatprep.subr.mxu0 0.0
    %2934 = vmatpush1.msra.mxu0 %v2912
    %2935 = vmatprep.subr.mxu0 0.0
    %2936 = vmatpush1.msra.mxu0 %v2913
    %2937 = vmatprep.subr.mxu0 0.0
    %2938 = vmatpush1.msra.mxu0 %v2914
    %2939 = vmatprep.subr.mxu0 0.0
    %2940 = vmatpush1.msra.mxu0 %v2915
    %2941 = vmatprep.subr.mxu0 0.0
    %2942 = vmatpush1.msra.mxu0 %v2916
    %2943 = vmatprep.subr.mxu0 0.0
    %2944 = vmatpush1.msra.mxu0 %v2917
    %2945 = vmatprep.subr.mxu0 0.0
    %2946 = vmatpush1.msra.mxu0 %v2918
    %2947 = vmatprep.subr.mxu0 0.0
    %2948 = vmatpush1.msra.mxu0 %v2919
    %2949 = vmatprep.subr.mxu0 0.0
    %2950 = vmatpush1.msra.mxu0 %v2920
    %2951 = vmatprep.subr.mxu0 0.0
    %2952 = vmatpush1.msra.mxu0 %v2921
    %2953 = vmatprep.subr.mxu0 0.0
    %2954 = vmatpush1.msra.mxu0 %v2922
    %2955 = vmatprep.subr.mxu0 0.0
    %2956 = vmatpush1.msra.mxu0 0.0
    %2957 = vmatprep.subr.mxu0 0.0
    %2958 = vmatpush1.msra.mxu0 0.0
    %2959 = vmatprep.subr.mxu0 0.0
    %2960 = vmatpush1.msra.mxu0 0.0
    %2961 = vmatprep.subr.mxu0 0.0
    %2962 = vmatpush1.msra.mxu0 0.0
    %2963 = vmatprep.subr.mxu0 0.0
    %2964 = vmatpush1.msra.mxu0 0.0
    %2965 = vmatprep.subr.mxu0 0.0
    %2966 = vmatpush1.msra.mxu0 0.0
    %2967 = vmatprep.subr.mxu0 0.0
    %2968 = vmatpush1.msra.mxu0 0.0
    %2969 = vmatprep.subr.mxu0 0.0
    %2970 = vmatpush1.msra.mxu0 0.0
    %2971 = vmatprep.subr.mxu0 0.0
    %2972 = vmatpush1.msra.mxu0 0.0
    %2973 = vmatprep.subr.mxu0 0.0
    %2974 = vmatpush1.msra.mxu0 0.0
    %2975 = vmatprep.subr.mxu0 0.0
    %2976 = vmatpush1.msra.mxu0 0.0
    %2977 = vmatprep.subr.mxu0 0.0
    %2978 = vmatpush1.msra.mxu0 0.0
    %2979 = vmatprep.subr.mxu0 0.0
    %2980 = vmatpush1.msra.mxu0 0.0
    %2981 = vmatprep.subr.mxu0 0.0
    %2982 = vmatpush1.msra.mxu0 0.0
    %2983 = vmatprep.subr.mxu0 0.0
    %2984 = vmatpush1.msra.mxu0 0.0
    %2985 = vmatprep.subr.mxu0 0.0
    %2986 = vmatpush1.msra.mxu0 0.0
    %2987 = vmatprep.mubr.f32.mxu0 0.0
    %2988 = vmatmul.mubr.f32.gmra.mrb[0].mxu0 %v2899
    %v2989 = vpop.f32.mrb[0].mxu0
    %v2990 = vadd.f32 0.0, %v2989
    %v2991 = vpop.f32.mrb[0].mxu0
    %2992 = vmatprep.mubr.f32.mxu0 0.0
    %2993 = vmatmul.mubr.f32.gmra.mrb[0].mxu0 %v2900
    %v2994 = vpop.f32.mrb[0].mxu0
    %v2995 = vadd.f32 0.0, %v2994
    %v2996 = vpop.f32.mrb[0].mxu0
    %2997 = vmatprep.mubr.f32.mxu0 0.0
    %2998 = vmatmul.mubr.f32.gmra.mrb[0].mxu0 %v2901
    %v2999 = vpop.f32.mrb[0].mxu0
    %v3000 = vadd.f32 0.0, %v2999
    %v3001 = vpop.f32.mrb[0].mxu0
    %3002 = vmatprep.mubr.f32.mxu0 0.0
    %3003 = vmatmul.mubr.f32.gmra.mrb[0].mxu0 %v2902
    %v3004 = vpop.f32.mrb[0].mxu0
    %v3005 = vadd.f32 0.0, %v3004
    %v3006 = vpop.f32.mrb[0].mxu0
    %3007 = vmatprep.mubr.f32.mxu0 0.0
    %3008 = vmatmul.mubr.f32.gmra.mrb[0].mxu0 %v2903
    %v3009 = vpop.f32.mrb[0].mxu0
    %v3010 = vadd.f32 0.0, %v3009
    %v3011 = vpop.f32.mrb[0].mxu0
    %3012 = vmatprep.mubr.f32.mxu0 0.0
    %3013 = vmatmul.mubr.f32.gmra.mrb[0].mxu0 %v2904
    %v3014 = vpop.f32.mrb[0].mxu0
    %v3015 = vadd.f32 0.0, %v3014
    %v3016 = vpop.f32.mrb[0].mxu0
    %3017 = vmatprep.mubr.f32.mxu0 0.0
    %3018 = vmatmul.mubr.f32.gmra.mrb[0].mxu0 %v2905
    %v3019 = vpop.f32.mrb[0].mxu0
    %v3020 = vadd.f32 0.0, %v3019
    %v3021 = vpop.f32.mrb[0].mxu0
    %3022 = vmatprep.mubr.f32.mxu0 0.0
    %3023 = vmatmul.mubr.f32.gmra.mrb[0].mxu0 %v2906
    %v3024 = vpop.f32.mrb[0].mxu0
    %v3025 = vadd.f32 0.0, %v3024
    %v3026 = vpop.f32.mrb[0].mxu0
    %3027 = vdwg.mxu0
    %v3028 = vld [vmem:[#allocation29] sm:$0xff]
    %v3029 = vld [vmem:[#allocation29 + $0x8] sm:$0xff]
    %v3030 = vld [vmem:[#allocation29 + $0x10] sm:$0xff]
    %v3031 = vld [vmem:[#allocation29 + $0x18] sm:$0xff]
    %v3032 = vld [vmem:[#allocation29 + $0x20] sm:$0xff]
    %v3033 = vld [vmem:[#allocation29 + $0x28] sm:$0xff]
    %v3034 = vld [vmem:[#allocation29 + $0x30] sm:$0xff]
    %v3035 = vld [vmem:[#allocation29 + $0x38] sm:$0xff]
    %v3036 = vld [vmem:[#allocation29 + $0x40] sm:$0xff]
    %v3037 = vld [vmem:[#allocation29 + $0x48] sm:$0xff]
    %v3038 = vld [vmem:[#allocation29 + $0x50] sm:$0xff]
    %v3039 = vld [vmem:[#allocation29 + $0x58] sm:$0xff]
    %v3040 = vld [vmem:[#allocation29 + $0x60] sm:$0xff]
    %v3041 = vld [vmem:[#allocation29 + $0x68] sm:$0xff]
    %v3042 = vld [vmem:[#allocation29 + $0x70] sm:$0xff]
    %v3043 = vld [vmem:[#allocation29 + $0x78] sm:$0xff]
    %3044 = vmatprep.subr.mxu0 0.0
    %3045 = vmatpush1.msra.mxu0 %v3028
    %3046 = vmatprep.subr.mxu0 0.0
    %3047 = vmatpush1.msra.mxu0 %v3029
    %3048 = vmatprep.subr.mxu0 0.0
    %3049 = vmatpush1.msra.mxu0 %v3030
    %3050 = vmatprep.subr.mxu0 0.0
    %3051 = vmatpush1.msra.mxu0 %v3031
    %3052 = vmatprep.subr.mxu0 0.0
    %3053 = vmatpush1.msra.mxu0 %v3032
    %3054 = vmatprep.subr.mxu0 0.0
    %3055 = vmatpush1.msra.mxu0 %v3033
    %3056 = vmatprep.subr.mxu0 0.0
    %3057 = vmatpush1.msra.mxu0 %v3034
    %3058 = vmatprep.subr.mxu0 0.0
    %3059 = vmatpush1.msra.mxu0 %v3035
    %3060 = vmatprep.subr.mxu0 0.0
    %3061 = vmatpush1.msra.mxu0 %v3036
    %3062 = vmatprep.subr.mxu0 0.0
    %3063 = vmatpush1.msra.mxu0 %v3037
    %3064 = vmatprep.subr.mxu0 0.0
    %3065 = vmatpush1.msra.mxu0 %v3038
    %3066 = vmatprep.subr.mxu0 0.0
    %3067 = vmatpush1.msra.mxu0 %v3039
    %3068 = vmatprep.subr.mxu0 0.0
    %3069 = vmatpush1.msra.mxu0 %v3040
    %3070 = vmatprep.subr.mxu0 0.0
    %3071 = vmatpush1.msra.mxu0 %v3041
    %3072 = vmatprep.subr.mxu0 0.0
    %3073 = vmatpush1.msra.mxu0 %v3042
    %3074 = vmatprep.subr.mxu0 0.0
    %3075 = vmatpush1.msra.mxu0 %v3043
    %3076 = vmatprep.subr.mxu0 0.0
    %3077 = vmatpush1.msra.mxu0 0.0
    %3078 = vmatprep.subr.mxu0 0.0
    %3079 = vmatpush1.msra.mxu0 0.0
    %3080 = vmatprep.subr.mxu0 0.0
    %3081 = vmatpush1.msra.mxu0 0.0
    %3082 = vmatprep.subr.mxu0 0.0
    %3083 = vmatpush1.msra.mxu0 0.0
    %3084 = vmatprep.subr.mxu0 0.0
    %3085 = vmatpush1.msra.mxu0 0.0
    %3086 = vmatprep.subr.mxu0 0.0
    %3087 = vmatpush1.msra.mxu0 0.0
    %3088 = vmatprep.subr.mxu0 0.0
    %3089 = vmatpush1.msra.mxu0 0.0
    %3090 = vmatprep.subr.mxu0 0.0
    %3091 = vmatpush1.msra.mxu0 0.0
    %3092 = vmatprep.subr.mxu0 0.0
    %3093 = vmatpush1.msra.mxu0 0.0
    %3094 = vmatprep.subr.mxu0 0.0
    %3095 = vmatpush1.msra.mxu0 0.0
    %3096 = vmatprep.subr.mxu0 0.0
    %3097 = vmatpush1.msra.mxu0 0.0
    %3098 = vmatprep.subr.mxu0 0.0
    %3099 = vmatpush1.msra.mxu0 0.0
    %3100 = vmatprep.subr.mxu0 0.0
    %3101 = vmatpush1.msra.mxu0 0.0
    %3102 = vmatprep.subr.mxu0 0.0
    %3103 = vmatpush1.msra.mxu0 0.0
    %3104 = vmatprep.subr.mxu0 0.0
    %3105 = vmatpush1.msra.mxu0 0.0
    %3106 = vmatprep.subr.mxu0 0.0
    %3107 = vmatpush1.msra.mxu0 0.0
    %3108 = vmatprep.mubr.f32.mxu0 0.0
    %3109 = vmatmul.mubr.f32.gmra.mrb[0].mxu0 %v2990
    %v3110 = vpop.f32.mrb[0].mxu0
    %v3111 = vadd.f32 0.0, %v3110
    %v3112 = vpop.f32.mrb[0].mxu0
    %3113 = vmatprep.mubr.f32.mxu0 0.0
    %3114 = vmatmul.mubr.f32.gmra.mrb[0].mxu0 %v2995
    %v3115 = vpop.f32.mrb[0].mxu0
    %v3116 = vadd.f32 0.0, %v3115
    %v3117 = vpop.f32.mrb[0].mxu0
    %3118 = vmatprep.mubr.f32.mxu0 0.0
    %3119 = vmatmul.mubr.f32.gmra.mrb[0].mxu0 %v3000
    %v3120 = vpop.f32.mrb[0].mxu0
    %v3121 = vadd.f32 0.0, %v3120
    %v3122 = vpop.f32.mrb[0].mxu0
    %3123 = vmatprep.mubr.f32.mxu0 0.0
    %3124 = vmatmul.mubr.f32.gmra.mrb[0].mxu0 %v3005
    %v3125 = vpop.f32.mrb[0].mxu0
    %v3126 = vadd.f32 0.0, %v3125
    %v3127 = vpop.f32.mrb[0].mxu0
    %3128 = vmatprep.mubr.f32.mxu0 0.0
    %3129 = vmatmul.mubr.f32.gmra.mrb[0].mxu0 %v3010
    %v3130 = vpop.f32.mrb[0].mxu0
    %v3131 = vadd.f32 0.0, %v3130
    %v3132 = vpop.f32.mrb[0].mxu0
    %3133 = vmatprep.mubr.f32.mxu0 0.0
    %3134 = vmatmul.mubr.f32.gmra.mrb[0].mxu0 %v3015
    %v3135 = vpop.f32.mrb[0].mxu0
    %v3136 = vadd.f32 0.0, %v3135
    %v3137 = vpop.f32.mrb[0].mxu0
    %3138 = vmatprep.mubr.f32.mxu0 0.0
    %3139 = vmatmul.mubr.f32.gmra.mrb[0].mxu0 %v3020
    %v3140 = vpop.f32.mrb[0].mxu0
    %v3141 = vadd.f32 0.0, %v3140
    %v3142 = vpop.f32.mrb[0].mxu0
    %3143 = vmatprep.mubr.f32.mxu0 0.0
    %3144 = vmatmul.mubr.f32.gmra.mrb[0].mxu0 %v3025
    %v3145 = vpop.f32.mrb[0].mxu0
    %v3146 = vadd.f32 0.0, %v3145
    %v3147 = vpop.f32.mrb[0].mxu0
    %3148 = vdwg.mxu0
    %v3149 = vld [vmem:[#allocation31] sm:$0x1]
    %3150 = vmatprep.subr.mxu0 0.0
    %3151 = vmatpush1.xpose.msra.mxu0 %v2990
    %3152 = vmatprep.subr.mxu0 0.0
    %3153 = vmatpush1.xpose.msra.mxu0 %v2995
    %3154 = vmatprep.subr.mxu0 0.0
    %3155 = vmatpush1.xpose.msra.mxu0 %v3000
    %3156 = vmatprep.subr.mxu0 0.0
    %3157 = vmatpush1.xpose.msra.mxu0 %v3005
    %3158 = vmatprep.subr.mxu0 0.0
    %3159 = vmatpush1.xpose.msra.mxu0 %v3010
    %3160 = vmatprep.subr.mxu0 0.0
    %3161 = vmatpush1.xpose.msra.mxu0 %v3015
    %3162 = vmatprep.subr.mxu0 0.0
    %3163 = vmatpush1.xpose.msra.mxu0 %v3020
    %3164 = vmatprep.subr.mxu0 0.0
    %3165 = vmatpush1.xpose.msra.mxu0 %v3025
    %3166 = vmatprep.subr.mxu0 0.0
    %3167 = vmatpush1.xpose.msra.mxu0 0.0
    %3168 = vmatprep.subr.mxu0 0.0
    %3169 = vmatpush1.xpose.msra.mxu0 0.0
    %3170 = vmatprep.subr.mxu0 0.0
    %3171 = vmatpush1.xpose.msra.mxu0 0.0
    %3172 = vmatprep.subr.mxu0 0.0
    %3173 = vmatpush1.xpose.msra.mxu0 0.0
    %3174 = vmatprep.subr.mxu0 0.0
    %3175 = vmatpush1.xpose.msra.mxu0 0.0
    %3176 = vmatprep.subr.mxu0 0.0
    %3177 = vmatpush1.xpose.msra.mxu0 0.0
    %3178 = vmatprep.subr.mxu0 0.0
    %3179 = vmatpush1.xpose.msra.mxu0 0.0
    %3180 = vmatprep.subr.mxu0 0.0
    %3181 = vmatpush1.xpose.msra.mxu0 0.0
    %3182 = vmatprep.subr.mxu0 0.0
    %3183 = vmatpush1.xpose.msra.mxu0 0.0
    %3184 = vmatprep.subr.mxu0 0.0
    %3185 = vmatpush1.xpose.msra.mxu0 0.0
    %3186 = vmatprep.subr.mxu0 0.0
    %3187 = vmatpush1.xpose.msra.mxu0 0.0
    %3188 = vmatprep.subr.mxu0 0.0
    %3189 = vmatpush1.xpose.msra.mxu0 0.0
    %3190 = vmatprep.subr.mxu0 0.0
    %3191 = vmatpush1.xpose.msra.mxu0 0.0
    %3192 = vmatprep.subr.mxu0 0.0
    %3193 = vmatpush1.xpose.msra.mxu0 0.0
    %3194 = vmatprep.subr.mxu0 0.0
    %3195 = vmatpush1.xpose.msra.mxu0 0.0
    %3196 = vmatprep.subr.mxu0 0.0
    %3197 = vmatpush1.xpose.msra.mxu0 0.0
    %3198 = vmatprep.subr.mxu0 0.0
    %3199 = vmatpush1.xpose.msra.mxu0 0.0
    %3200 = vmatprep.subr.mxu0 0.0
    %3201 = vmatpush1.xpose.msra.mxu0 0.0
    %3202 = vmatprep.subr.mxu0 0.0
    %3203 = vmatpush1.xpose.msra.mxu0 0.0
    %3204 = vmatprep.subr.mxu0 0.0
    %3205 = vmatpush1.xpose.msra.mxu0 0.0
    %3206 = vmatprep.subr.mxu0 0.0
    %3207 = vmatpush1.xpose.msra.mxu0 0.0
    %3208 = vmatprep.subr.mxu0 0.0
    %3209 = vmatpush1.xpose.msra.mxu0 0.0
    %3210 = vmatprep.subr.mxu0 0.0
    %3211 = vmatpush1.xpose.msra.mxu0 0.0
    %3212 = vmatprep.subr.mxu0 0.0
    %3213 = vmatpush1.xpose.msra.mxu0 0.0
    %3214 = vmatprep.mubr.f32.mxu0 0.0
    %3215 = vmatmul.mubr.f32.gmra.mrb[0].mxu0 %v3149
    %v3216 = vpop.f32.mrb[0].mxu0
    %v3217 = vadd.f32 0.0, %v3216
    %v3218 = vpop.f32.mrb[0].mxu0
    %3219 = vdwg.mxu0
    %3221 = vset.pattern.permute.xlu0 0
    %3222 = vperm.xlu0 %3221, %v3111
    %v3223 = vpop.permute.xlu0 %3222
    %3226 = vset.pattern.permute.xlu0 0
    %3227 = vperm.xlu0 %3226, %v3116
    %v3228 = vpop.permute.xlu0 %3227
    %3231 = vset.pattern.permute.xlu0 0
    %3232 = vperm.xlu0 %3231, %v3121
    %v3233 = vpop.permute.xlu0 %3232
    %3236 = vset.pattern.permute.xlu0 0
    %3237 = vperm.xlu0 %3236, %v3126
    %v3238 = vpop.permute.xlu0 %3237
    %3241 = vset.pattern.permute.xlu0 0
    %3242 = vperm.xlu0 %3241, %v3131
    %v3243 = vpop.permute.xlu0 %3242
    %3246 = vset.pattern.permute.xlu0 0
    %3247 = vperm.xlu0 %3246, %v3136
    %v3248 = vpop.permute.xlu0 %3247
    %3251 = vset.pattern.permute.xlu0 0
    %3252 = vperm.xlu0 %3251, %v3141
    %v3253 = vpop.permute.xlu0 %3252
    %3256 = vset.pattern.permute.xlu0 0
    %3257 = vperm.xlu0 %3256, %v3146
    %v3258 = vpop.permute.xlu0 %3257
    %v3260 = vlaneseq
    %v3261 = vshrl.u32 %v3260, 7
    %v3262 = vsub.s32 0, %v3261
    %v3263 = vrot.slane %v3217, %v3262
    %v3264 = vadd.f32 %v3223, %v3263
    %v3265 = vadd.f32 %v3228, %v3263
    %v3266 = vadd.f32 %v3233, %v3263
    %v3267 = vadd.f32 %v3238, %v3263
    %v3268 = vadd.f32 %v3243, %v3263
    %v3269 = vadd.f32 %v3248, %v3263
    %v3270 = vadd.f32 %v3253, %v3263
    %v3271 = vadd.f32 %v3258, %v3263
    %v3272 = vmul.f32 %v3264, 0.2
    %v3273 = vmul.f32 %v3265, 0.2
    %v3274 = vmul.f32 %v3266, 0.2
    %v3275 = vmul.f32 %v3267, 0.2
    %v3276 = vmul.f32 %v3268, 0.2
    %v3277 = vmul.f32 %v3269, 0.2
    %v3278 = vmul.f32 %v3270, 0.2
    %v3279 = vmul.f32 %v3271, 0.2
    %v3280 = vmax.f32 %v3264, %v3272
    %v3281 = vmax.f32 %v3265, %v3273
    %v3282 = vmax.f32 %v3266, %v3274
    %v3283 = vmax.f32 %v3267, %v3275
    %v3284 = vmax.f32 %v3268, %v3276
    %v3285 = vmax.f32 %v3269, %v3277
    %v3286 = vmax.f32 %v3270, %v3278
    %v3287 = vmax.f32 %v3271, %v3279
    %v3288 = vadd.f32 %v3280, %v375
    %v3289 = vadd.f32 %v3281, %v376
    %v3290 = vadd.f32 %v3282, %v377
    %v3291 = vadd.f32 %v3283, %v378
    %v3292 = vadd.f32 %v3284, %v379
    %v3293 = vadd.f32 %v3285, %v380
    %v3294 = vadd.f32 %v3286, %v381
    %v3295 = vadd.f32 %v3287, %v382
    %v3296 = vsel %vm780, %v3288, -inf
    %3297 = vmax.xlane.f32.xlu0 %v3296
    %v3298 = vpop.xlane.xlu0 %3297
    %v3299 = vsel %vm780, %v3289, -inf
    %3300 = vmax.xlane.f32.xlu0 %v3299
    %v3301 = vpop.xlane.xlu0 %3300
    %v3302 = vsel %vm780, %v3290, -inf
    %3303 = vmax.xlane.f32.xlu0 %v3302
    %v3304 = vpop.xlane.xlu0 %3303
    %v3305 = vsel %vm780, %v3291, -inf
    %3306 = vmax.xlane.f32.xlu0 %v3305
    %v3307 = vpop.xlane.xlu0 %3306
    %v3308 = vsel %vm780, %v3292, -inf
    %3309 = vmax.xlane.f32.xlu0 %v3308
    %v3310 = vpop.xlane.xlu0 %3309
    %v3311 = vsel %vm780, %v3293, -inf
    %3312 = vmax.xlane.f32.xlu0 %v3311
    %v3313 = vpop.xlane.xlu0 %3312
    %v3314 = vsel %vm780, %v3294, -inf
    %3315 = vmax.xlane.f32.xlu0 %v3314
    %v3316 = vpop.xlane.xlu0 %3315
    %v3317 = vsel %vm780, %v3295, -inf
    %3318 = vmax.xlane.f32.xlu0 %v3317
    %v3319 = vpop.xlane.xlu0 %3318
    %v3320 = vsub.f32 %v3288, %v3298
    %v3321 = vsub.f32 %v3289, %v3301
    %v3322 = vsub.f32 %v3290, %v3304
    %v3323 = vsub.f32 %v3291, %v3307
    %v3324 = vsub.f32 %v3292, %v3310
    %v3325 = vsub.f32 %v3293, %v3313
    %v3326 = vsub.f32 %v3294, %v3316
    %v3327 = vsub.f32 %v3295, %v3319
    %v3328 = vmul.f32 %v3320, 1.442695
    %v3329 = vpow.pop %v3328
    %v3330 = vmul.f32 %v3321, 1.442695
    %v3331 = vpow.pop %v3330
    %v3332 = vmul.f32 %v3322, 1.442695
    %v3333 = vpow.pop %v3332
    %v3334 = vmul.f32 %v3323, 1.442695
    %v3335 = vpow.pop %v3334
    %v3336 = vmul.f32 %v3324, 1.442695
    %v3337 = vpow.pop %v3336
    %v3338 = vmul.f32 %v3325, 1.442695
    %v3339 = vpow.pop %v3338
    %v3340 = vmul.f32 %v3326, 1.442695
    %v3341 = vpow.pop %v3340
    %v3342 = vmul.f32 %v3327, 1.442695
    %v3343 = vpow.pop %v3342
    %v3344 = vsel %vm780, %v3329, 0.0
    %3345 = vadd.xlane.f32.xlu0 %v3344
    %v3346 = vpop.xlane.xlu0 %3345
    %v3347 = vsel %vm780, %v3331, 0.0
    %3348 = vadd.xlane.f32.xlu0 %v3347
    %v3349 = vpop.xlane.xlu0 %3348
    %v3350 = vsel %vm780, %v3333, 0.0
    %3351 = vadd.xlane.f32.xlu0 %v3350
    %v3352 = vpop.xlane.xlu0 %3351
    %v3353 = vsel %vm780, %v3335, 0.0
    %3354 = vadd.xlane.f32.xlu0 %v3353
    %v3355 = vpop.xlane.xlu0 %3354
    %v3356 = vsel %vm780, %v3337, 0.0
    %3357 = vadd.xlane.f32.xlu0 %v3356
    %v3358 = vpop.xlane.xlu0 %3357
    %v3359 = vsel %vm780, %v3339, 0.0
    %3360 = vadd.xlane.f32.xlu0 %v3359
    %v3361 = vpop.xlane.xlu0 %3360
    %v3362 = vsel %vm780, %v3341, 0.0
    %3363 = vadd.xlane.f32.xlu0 %v3362
    %v3364 = vpop.xlane.xlu0 %3363
    %v3365 = vsel %vm780, %v3343, 0.0
    %3366 = vadd.xlane.f32.xlu0 %v3365
    %v3367 = vpop.xlane.xlu0 %3366
    %v3368 = vrcp.pop %v3346
    %v3369 = vmul.f32 %v3329, %v3368
    %v3370 = vrcp.pop %v3349
    %v3371 = vmul.f32 %v3331, %v3370
    %v3372 = vrcp.pop %v3352
    %v3373 = vmul.f32 %v3333, %v3372
    %v3374 = vrcp.pop %v3355
    %v3375 = vmul.f32 %v3335, %v3374
    %v3376 = vrcp.pop %v3358
    %v3377 = vmul.f32 %v3337, %v3376
    %v3378 = vrcp.pop %v3361
    %v3379 = vmul.f32 %v3339, %v3378
    %v3380 = vrcp.pop %v3364
    %v3381 = vmul.f32 %v3341, %v3380
    %v3382 = vrcp.pop %v3367
    %v3383 = vmul.f32 %v3343, %v3382
    %v3384 = vld [vmem:[#allocation32] sm:$0x1]
    %v3386 = vlaneseq
    %v3387 = vshrl.u32 %v3386, 7
    %v3388 = vsub.s32 0, %v3387
    %v3389 = vrot.slane %v3384, %v3388
    %v3392 = vsel %vm780, %v3369, 0
    %v3395 = vsel %vm780, %v3371, 0
    %v3398 = vsel %vm780, %v3373, 0
    %v3401 = vsel %vm780, %v3375, 0
    %v3404 = vsel %vm780, %v3377, 0
    %v3407 = vsel %vm780, %v3379, 0
    %v3410 = vsel %vm780, %v3381, 0
    %v3413 = vsel %vm780, %v3383, 0
    %3415 = vmatprep.subr.mxu0 0.0
    %3416 = vmatpush1.msra.mxu0 %v2990
    %3417 = vmatprep.subr.mxu0 0.0
    %3418 = vmatpush1.msra.mxu0 %v2995
    %3419 = vmatprep.subr.mxu0 0.0
    %3420 = vmatpush1.msra.mxu0 %v3000
    %3421 = vmatprep.subr.mxu0 0.0
    %3422 = vmatpush1.msra.mxu0 %v3005
    %3423 = vmatprep.subr.mxu0 0.0
    %3424 = vmatpush1.msra.mxu0 %v3010
    %3425 = vmatprep.subr.mxu0 0.0
    %3426 = vmatpush1.msra.mxu0 %v3015
    %3427 = vmatprep.subr.mxu0 0.0
    %3428 = vmatpush1.msra.mxu0 %v3020
    %3429 = vmatprep.subr.mxu0 0.0
    %3430 = vmatpush1.msra.mxu0 %v3025
    %3431 = vmatprep.subr.mxu0 0.0
    %3432 = vmatpush1.msra.mxu0 0.0
    %3433 = vmatprep.subr.mxu0 0.0
    %3434 = vmatpush1.msra.mxu0 0.0
    %3435 = vmatprep.subr.mxu0 0.0
    %3436 = vmatpush1.msra.mxu0 0.0
    %3437 = vmatprep.subr.mxu0 0.0
    %3438 = vmatpush1.msra.mxu0 0.0
    %3439 = vmatprep.subr.mxu0 0.0
    %3440 = vmatpush1.msra.mxu0 0.0
    %3441 = vmatprep.subr.mxu0 0.0
    %3442 = vmatpush1.msra.mxu0 0.0
    %3443 = vmatprep.subr.mxu0 0.0
    %3444 = vmatpush1.msra.mxu0 0.0
    %3445 = vmatprep.subr.mxu0 0.0
    %3446 = vmatpush1.msra.mxu0 0.0
    %3447 = vmatprep.subr.mxu0 0.0
    %3448 = vmatpush1.msra.mxu0 0.0
    %3449 = vmatprep.subr.mxu0 0.0
    %3450 = vmatpush1.msra.mxu0 0.0
    %3451 = vmatprep.subr.mxu0 0.0
    %3452 = vmatpush1.msra.mxu0 0.0
    %3453 = vmatprep.subr.mxu0 0.0
    %3454 = vmatpush1.msra.mxu0 0.0
    %3455 = vmatprep.subr.mxu0 0.0
    %3456 = vmatpush1.msra.mxu0 0.0
    %3457 = vmatprep.subr.mxu0 0.0
    %3458 = vmatpush1.msra.mxu0 0.0
    %3459 = vmatprep.subr.mxu0 0.0
    %3460 = vmatpush1.msra.mxu0 0.0
    %3461 = vmatprep.subr.mxu0 0.0
    %3462 = vmatpush1.msra.mxu0 0.0
    %3463 = vmatprep.subr.mxu0 0.0
    %3464 = vmatpush1.msra.mxu0 0.0
    %3465 = vmatprep.subr.mxu0 0.0
    %3466 = vmatpush1.msra.mxu0 0.0
    %3467 = vmatprep.subr.mxu0 0.0
    %3468 = vmatpush1.msra.mxu0 0.0
    %3469 = vmatprep.subr.mxu0 0.0
    %3470 = vmatpush1.msra.mxu0 0.0
    %3471 = vmatprep.subr.mxu0 0.0
    %3472 = vmatpush1.msra.mxu0 0.0
    %3473 = vmatprep.subr.mxu0 0.0
    %3474 = vmatpush1.msra.mxu0 0.0
    %3475 = vmatprep.subr.mxu0 0.0
    %3476 = vmatpush1.msra.mxu0 0.0
    %3477 = vmatprep.subr.mxu0 0.0
    %3478 = vmatpush1.msra.mxu0 0.0
    %3479 = vmatprep.mubr.f32.mxu0 0.0
    %3480 = vmatmul.mubr.f32.gmra.mrb[0].mxu0 %v3392
    %v3481 = vpop.f32.mrb[0].mxu0
    %v3482 = vadd.f32 %v3389, %v3481
    %v3483 = vpop.f32.mrb[0].mxu0
    %3484 = vmatprep.mubr.f32.mxu0 0.0
    %3485 = vmatmul.mubr.f32.gmra.mrb[0].mxu0 %v3395
    %v3486 = vpop.f32.mrb[0].mxu0
    %v3487 = vadd.f32 %v3389, %v3486
    %v3488 = vpop.f32.mrb[0].mxu0
    %3489 = vmatprep.mubr.f32.mxu0 0.0
    %3490 = vmatmul.mubr.f32.gmra.mrb[0].mxu0 %v3398
    %v3491 = vpop.f32.mrb[0].mxu0
    %v3492 = vadd.f32 %v3389, %v3491
    %v3493 = vpop.f32.mrb[0].mxu0
    %3494 = vmatprep.mubr.f32.mxu0 0.0
    %3495 = vmatmul.mubr.f32.gmra.mrb[0].mxu0 %v3401
    %v3496 = vpop.f32.mrb[0].mxu0
    %v3497 = vadd.f32 %v3389, %v3496
    %v3498 = vpop.f32.mrb[0].mxu0
    %3499 = vmatprep.mubr.f32.mxu0 0.0
    %3500 = vmatmul.mubr.f32.gmra.mrb[0].mxu0 %v3404
    %v3501 = vpop.f32.mrb[0].mxu0
    %v3502 = vadd.f32 %v3389, %v3501
    %v3503 = vpop.f32.mrb[0].mxu0
    %3504 = vmatprep.mubr.f32.mxu0 0.0
    %3505 = vmatmul.mubr.f32.gmra.mrb[0].mxu0 %v3407
    %v3506 = vpop.f32.mrb[0].mxu0
    %v3507 = vadd.f32 %v3389, %v3506
    %v3508 = vpop.f32.mrb[0].mxu0
    %3509 = vmatprep.mubr.f32.mxu0 0.0
    %3510 = vmatmul.mubr.f32.gmra.mrb[0].mxu0 %v3410
    %v3511 = vpop.f32.mrb[0].mxu0
    %v3512 = vadd.f32 %v3389, %v3511
    %v3513 = vpop.f32.mrb[0].mxu0
    %3514 = vmatprep.mubr.f32.mxu0 0.0
    %3515 = vmatmul.mubr.f32.gmra.mrb[0].mxu0 %v3413
    %v3516 = vpop.f32.mrb[0].mxu0
    %v3517 = vadd.f32 %v3389, %v3516
    %v3518 = vpop.f32.mrb[0].mxu0
    %3519 = vdwg.mxu0
    %3520 = vst [vmem:[#allocation40] sm:$0xff] %v3482
    %3521 = vst [vmem:[#allocation40 + $0x8] sm:$0xff] %v3487
    %3522 = vst [vmem:[#allocation40 + $0x10] sm:$0xff] %v3492
    %3523 = vst [vmem:[#allocation40 + $0x18] sm:$0xff] %v3497
    %3524 = vst [vmem:[#allocation40 + $0x20] sm:$0xff] %v3502
    %3525 = vst [vmem:[#allocation40 + $0x28] sm:$0xff] %v3507
    %3526 = vst [vmem:[#allocation40 + $0x30] sm:$0xff] %v3512
    %3527 = vst [vmem:[#allocation40 + $0x38] sm:$0xff] %v3517
    // Predicated region
    $region194: #{tpu_custom_call.1} parent=1 // pred_check
      _
    $region195: #{tpu_custom_call.1} parent=1 // pred_check_branch
      %3529 = sbr.rel (0) target = $region197
    $region196: #{tpu_custom_call.1} parent=1 // pred_region
      %s3531 = ssub.s32 1024, 1024
      %3532 = vsyncadd [#allocation4], %s3531
      %s3533 = sshll.u32 [#allocation40], 4
      %s3534 = int_to_ptr.vmem [resolvable:$true] %s3533
      %3539 = dma.vmem_to_hbm [thread:$0]  %s3534, 1024, %s24, [#allocation4], 128, 128, 8
    $region197: #{tpu_custom_call.1} parent=1 // pred_fallthru
      _
    // Predicated region
    $region198: #{tpu_custom_call.1} parent=1 // pred_check
      _
    $region199: #{tpu_custom_call.1} parent=1 // pred_check_branch
      %3541 = sbr.rel (0) target = $region201
    $region200: #{tpu_custom_call.1} parent=1 // pred_region
      %3542 = dma.done [#allocation4], 1024
    $region201: #{tpu_custom_call.1} parent=1 // pred_fallthru
      _
    %3543 = vsyncpa [#allocation3], 1
    %3544 = vsyncpa [#allocation6], 1
    %3545 = vsyncpa [#allocation9], 1
    %3546 = vsyncpa [#allocation12], 1
    %3547 = vsyncpa [#allocation15], 1
    %3548 = vsyncpa [#allocation18], 1
    %3549 = vsyncpa [#allocation21], 1
    %3550 = vsyncpa [#allocation24], 1
    %3551 = vsyncpa [#allocation27], 1
    %3552 = vsyncpa [#allocation30], 1
    %3553 = vsyncpa [#allocation33], 1
    %3554 = vsyncpa [#allocation36], 1
    %3555 = vsyncpa [#allocation39], 1
    %3556 = vsyncpa [#allocation4], 1

</llo_original>
